<compile_context>
chip_gen: v6e
topology: v6e:2x2x1
jax: 0.10.0
libtpu: 0.0.40
codegen_flags: <defaults>
</compile_context>

<pallas_src>
import math

import jax
import jax.numpy as jnp
from jax import lax
from jax.experimental import pallas as pl
from jax.experimental.pallas import tpu as pltpu  # noqa: F401  (TPU backend; no scratch needed anymore)
import numpy as np


# ----------------------------------------------------------------------------
# Fused kernel factory
# Flattened activation row convention: row r = t * BP + b (time-major, padded batch).
# ----------------------------------------------------------------------------
def make_fused_kernel(T, BP, B_real, E, H, V, num_layers):
    H3, H4, H8 = 3 * H, 4 * H, 8 * H
    n_layer_refs = 4 * num_layers            # per layer: wih_comb, whh_f, whh_b, b_comb

    def kernel(*refs):
        ids_ref = refs[0]                    # (T*BP, 1) int32 time-major flattened word ids
        len_ref = refs[1]                    # (BP, 1)   int32 lengths (0 for padded batch rows)
        emb_ref = refs[2]                    # (V, E)    embedding table
        lyr_refs = refs[3:3 + n_layer_refs]
        rw_ref, w1_ref, b1_ref, w2_ref, b2_ref = refs[3 + n_layer_refs:8 + n_layer_refs]
        out_ref = refs[8 + n_layer_refs]     # (BP, 6)

        f32 = jnp.float32

        # ---- Embedding lookup as a one-hot MXU matmul (V tiny & VMEM resident). ----
        # TODO(synk): for realistic vocab sizes keep the table in HBM (memory_space=pl.ANY)
        # and gather rows via scalar-prefetch / manual DMA instead of the O(T*B*V) one-hot.
        ids = ids_ref[...]                                                  # (T*BP, 1)
        vocab_iota = lax.broadcasted_iota(jnp.int32, (T * BP, V), 1)
        onehot = (ids == vocab_iota).astype(f32)                            # (T*BP, V)
        x = jnp.dot(onehot, emb_ref[...], preferred_element_type=f32)       # (T*BP, E)

        # ---- Validity masks hoisted once (shared by every layer & direction). ----
        len_col = len_ref[...]                                              # (BP, 1) int32
        valid_t = [t < len_col for t in range(T)]                           # T x (BP, 1) bool

        # ---- Bidirectional LSTM layers: merged fwd/bwd unrolled recurrence. ----
        # T is small & static here; for large T / num_layers switch to
        # lax.fori_loop(..., unroll=k) over pl.ds(t*BP, BP) slices to bound live ranges.
        for l in range(num_layers):
            wih_c, whh_f_ref, whh_b_ref, b_c = lyr_refs[4 * l:4 * l + 4]
            # Hoisted, fused input projection: ONE lane-dense (T*BP, 8H) MXU matmul per layer.
            gx = jnp.dot(x, wih_c[...], preferred_element_type=f32) + b_c[...]
            whh_f = whh_f_ref[...]                                          # (H, 4H) gates [i,f,o,g]
            whh_b = whh_b_ref[...]

            h_f = jnp.zeros((BP, H), f32); c_f = jnp.zeros((BP, H), f32)
            h_b = jnp.zeros((BP, H), f32); c_b = jnp.zeros((BP, H), f32)
            outs_f = [None] * T
            outs_b = [None] * T
            for s in range(T):                          # static unroll; fwd time tf, bwd time tb
                tf, tb = s, T - 1 - s
                gxf = gx[tf * BP:(tf + 1) * BP, 0:H4]   # full 128-lane tile slices
                gxb = gx[tb * BP:(tb + 1) * BP, H4:H8]
                # Both directions' recurrent matmuls + gate math issued back-to-back: the two
                # dependency chains are independent, so their latencies overlap.
                gf = gxf + jnp.dot(h_f, whh_f, preferred_element_type=f32)
                gb = gxb + jnp.dot(h_b, whh_b, preferred_element_type=f32)
                # gate order [i, f, o, g]: one sigmoid over 3H + one tanh over H per direction
                sf = jax.nn.sigmoid(gf[:, 0:H3]); gtf = jnp.tanh(gf[:, H3:H4])
                sb = jax.nn.sigmoid(gb[:, 0:H3]); gtb = jnp.tanh(gb[:, H3:H4])
                cf_new = sf[:, H:2 * H] * c_f + sf[:, 0:H] * gtf
                cb_new = sb[:, H:2 * H] * c_b + sb[:, 0:H] * gtb
                hf_new = sf[:, 2 * H:H3] * jnp.tanh(cf_new)
                hb_new = sb[:, 2 * H:H3] * jnp.tanh(cb_new)
                vf, vb = valid_t[tf], valid_t[tb]
                h_f = jnp.where(vf, hf_new, h_f); c_f = jnp.where(vf, cf_new, c_f)
                h_b = jnp.where(vb, hb_new, h_b); c_b = jnp.where(vb, cb_new, c_b)
                # padded timesteps emit zeros (pad_packed_sequence semantics)
                outs_f[tf] = jnp.where(vf, hf_new, 0.0)
                outs_b[tb] = jnp.where(vb, hb_new, 0.0)

            # Register-held per-step outputs -> ONE dense concatenate per layer
            # (no per-step masked sub-tile stores, no VMEM scratch round-trip).
            x = jnp.concatenate(
                [jnp.concatenate([outs_f[t], outs_b[t]], axis=1) for t in range(T)],
                axis=0)                                                     # (T*BP, 2H)

        # ---- Attention, vectorized (torch.softmax(..., dim=0) == softmax over batch). ----
        rH3 = x.reshape(T, BP, 2 * H)                    # leading-dim split: no data movement
        rw3 = rw_ref[...].reshape(1, 1, 2 * H)
        s3 = jnp.sum(jnp.tanh(rH3) * rw3, axis=-1, keepdims=True)           # (T, BP, 1)
        batch_valid = lax.broadcasted_iota(jnp.int32, (BP, 1), 0) < B_real  # (BP, 1) bool
        s3 = jnp.where(batch_valid, s3, -1e30)           # padded batch rows -> -inf in softmax
        m = jnp.max(s3, axis=1, keepdims=True)                              # (T, 1, 1)
        e = jnp.where(batch_valid, jnp.exp(s3 - m), 0.0)
        alpha = e / jnp.sum(e, axis=1, keepdims=True)                       # (T, BP, 1)
        rout = jnp.tanh(jnp.sum(rH3 * alpha, axis=0))                       # (BP, 2H)

        # ---- fc head (nn.Dropout(0.5) is identity at inference). ----
        fc1 = jnp.dot(rout, w1_ref[...], preferred_element_type=f32) + b1_ref[...]
        fc2 = jnp.dot(fc1, w2_ref[...], preferred_element_type=f32) + b2_ref[...]
        out_ref[...] = fc2.astype(out_ref.dtype)

    return kernel


# ----------------------------------------------------------------------------
# Wrapper: one grid-less pallas_call, whole-array (VMEM-resident) operands.
# All weight re-packing (gate permutation, per-layer direction fusion, batch padding)
# happens here, outside the kernel.
# ----------------------------------------------------------------------------
def lstm_attention_forward(word_id, sen_len, params):
    B, T = word_id.shape
    V, E = params["embedding"].shape
    H = params["fc2_w"].shape[0]
    num_layers = len(params["lstm"])
    BP = ((B + 7) // 8) * 8                      # pad batch to a full sublane tile

    pad_b = BP - B
    wid = jnp.pad(word_id.astype(jnp.int32), ((0, pad_b), (0, 0)))
    slen = jnp.pad(sen_len.astype(jnp.int32), ((0, pad_b),))    # padded rows: length 0
    ids_flat = jnp.transpose(wid).reshape(T * BP, 1)            # row = t*BP + b
    lengths = slen.reshape(BP, 1)

    def perm(w):   # torch gate order [i, f, g, o] -> [i, f, o, g] (sigmoid gates contiguous)
        return jnp.concatenate(
            [w[..., 0:H], w[..., H:2 * H], w[..., 3 * H:4 * H], w[..., 2 * H:3 * H]], axis=-1)

    layer_w = []
    for lyr in params["lstm"]:
        wih_c = jnp.concatenate([perm(lyr["wih_f"]), perm(lyr["wih_b"])], axis=1)   # (in, 8H)
        b_c = jnp.concatenate([perm(lyr["b_f"]), perm(lyr["b_b"])], axis=1)         # (1, 8H)
        layer_w += [wih_c, perm(lyr["whh_f"]), perm(lyr["whh_b"]), b_c]

    kernel = make_fused_kernel(T, BP, B, E, H, V, num_layers)
    out = pl.pallas_call(
        kernel,
        out_shape=jax.ShapeDtypeStruct((BP, 6), jnp.float32),
    )(ids_flat, lengths, params["embedding"], *layer_w,
      params["rw"], params["fc1_w"], params["fc1_b"],
      params["fc2_w"], params["fc2_b"])
    return out[:B]


# ----------------------------------------------------------------------------
# Pure-JAX reference (for correctness check) — uses the ORIGINAL [i,f,g,o] params.
# ----------------------------------------------------------------------------
def lstm_dir_ref(x_tm, lengths, wih_t, whh_t, bias, reverse):
    T, B, _ = x_tm.shape
    H = whh_t.shape[0]

    def step(carry, s):
        h, c = carry
        t = (T - 1 - s) if reverse else s
        x_t = x_tm[t]
        gates = x_t @ wih_t + h @ whh_t + bias
        i = jax.nn.sigmoid(gates[:, :H])
        f = jax.nn.sigmoid(gates[:, H:2 * H])
        g = jnp.tanh(gates[:, 2 * H:3 * H])
        o = jax.nn.sigmoid(gates[:, 3 * H:])
        c_new = f * c + i * g
        h_new = o * jnp.tanh(c_new)
        valid = t < lengths
        h = jnp.where(valid, h_new, h)
        c = jnp.where(valid, c_new, c)
        return (h, c), jnp.where(valid, h_new, 0.0)

    _, outs = lax.scan(step, (jnp.zeros((B, H)), jnp.zeros((B, H))), jnp.arange(T))
    return outs[::-1] if reverse else outs


def forward_ref(word_id, sen_len, params):
    emb = params["embedding"][word_id]
    x = jnp.transpose(emb, (1, 0, 2))
    lengths = sen_len.reshape(-1, 1).astype(jnp.int32)
    inp = x
    for lyr in params["lstm"]:
        hf = lstm_dir_ref(inp, lengths, lyr["wih_f"], lyr["whh_f"], lyr["b_f"], False)
        hb = lstm_dir_ref(inp, lengths, lyr["wih_b"], lyr["whh_b"], lyr["b_b"], True)
        inp = jnp.concatenate([hf, hb], axis=-1)
    rH = inp                                           # (T, B, 2H)
    s = jnp.sum(jnp.tanh(rH) * params["rw"][0][None, None, :], axis=-1)
    alpha = jax.nn.softmax(s, axis=1)                  # softmax over batch (dim=0 in torch layout)
    rout = jnp.tanh(jnp.sum(rH * alpha[:, :, None], axis=0))
    fc1 = rout @ params["fc1_w"] + params["fc1_b"][0]
    return fc1 @ params["fc2_w"] + params["fc2_b"][0]


# ----------------------------------------------------------------------------
# Deterministic parameter init (shapes from the module's __init__), gate order [i,f,g,o]
# ----------------------------------------------------------------------------
def init_params(key, V, E, H, num_layers):
    keys = iter(jax.random.split(key, 64))
    scale = 1.0 / math.sqrt(H)

    def u(shape):
        return jax.random.uniform(next(keys), shape, jnp.float32, -scale, scale)

    params = {"embedding": jax.random.normal(next(keys), (V, E), jnp.float32)}
    lstm = []
    in_dim = E
    for _ in range(num_layers):
        lyr = {}
        for d in ("f", "b"):                           # forward / backward direction
            wih = u((4 * H, in_dim))                   # torch weight_ih: (4H, in)
            whh = u((4 * H, H))                        # torch weight_hh: (4H, H)
            bih = u((4 * H,))
            bhh = u((4 * H,))
            lyr["wih_" + d] = wih.T                    # (in, 4H) for x @ W
            lyr["whh_" + d] = whh.T                    # (H, 4H)
            lyr["b_" + d] = (bih + bhh).reshape(1, 4 * H)
        lstm.append(lyr)
        in_dim = 2 * H
    params["lstm"] = lstm
    # Module inits rw to zeros; use a small random value so the attention path is exercised.
    params["rw"] = 0.1 * jax.random.normal(next(keys), (1, 2 * H), jnp.float32)
    params["fc1_w"] = u((2 * H, H))                    # torch fc1.weight.T
    params["fc1_b"] = u((1, H))
    params["fc2_w"] = u((H, 6))                        # torch fc2.weight.T
    params["fc2_b"] = u((1, 6))
    return params


if __name__ == "__main__":
    V, E, H, num_layers = 64, 32, 32, 2
    B, T = 4, 8

    key = jax.random.PRNGKey(0)
    k_params, k_ids = jax.random.split(key)
    params = init_params(k_params, V, E, H, num_layers)

    word_id = jax.random.randint(k_ids, (B, T), 0, V, dtype=jnp.int32)
    sen_len = jnp.array([8, 5, 8, 3], dtype=jnp.int32)   # max length == T

    fwd = jax.jit(lstm_attention_forward)
    out = jax.block_until_ready(fwd(word_id, sen_len, params))

    ref = jax.block_until_ready(forward_ref(word_id, sen_len, params))
    np.testing.assert_allclose(np.asarray(out), np.asarray(ref), rtol=2e-3, atol=2e-3)

    assert out.shape == (B, 6)
    print("KERNEL_OK")
</pallas_src>

<mosaic_0001>
module attributes {stable_mosaic.version = 11 : i64} {
  func.func @kernel(%arg0: memref<64x1xi32, #tpu.memory_space<vmem>>, %arg1: memref<8x1xi32, #tpu.memory_space<vmem>>, %arg2: memref<64x32xf32, #tpu.memory_space<vmem>>, %arg3: memref<32x256xf32, #tpu.memory_space<vmem>>, %arg4: memref<32x128xf32, #tpu.memory_space<vmem>>, %arg5: memref<32x128xf32, #tpu.memory_space<vmem>>, %arg6: memref<1x256xf32, #tpu.memory_space<vmem>>, %arg7: memref<64x256xf32, #tpu.memory_space<vmem>>, %arg8: memref<32x128xf32, #tpu.memory_space<vmem>>, %arg9: memref<32x128xf32, #tpu.memory_space<vmem>>, %arg10: memref<1x256xf32, #tpu.memory_space<vmem>>, %arg11: memref<1x64xf32, #tpu.memory_space<vmem>>, %arg12: memref<64x32xf32, #tpu.memory_space<vmem>>, %arg13: memref<1x32xf32, #tpu.memory_space<vmem>>, %arg14: memref<32x6xf32, #tpu.memory_space<vmem>>, %arg15: memref<1x6xf32, #tpu.memory_space<vmem>>, %arg16: memref<8x6xf32, #tpu.memory_space<vmem>>) attributes {dimension_semantics = [], scalar_prefetch = 0 : i64, scratch_operands = 0 : i64, tpu.core_type = #tpu.core_type<tc>} {
    %c0 = arith.constant 0 : index
    %c0_0 = arith.constant 0 : index
    %0 = vector.load %arg0[%c0, %c0_0] : memref<64x1xi32, #tpu.memory_space<vmem>>, vector<64x1xi32>
    %1 = tpu.iota {dimensions = array<i32: 1>} : vector<64x64xi32>
    %2 = vector.broadcast %0 : vector<64x1xi32> to vector<64x64xi32>
    %3 = arith.cmpi eq, %2, %1 : vector<64x64xi32>
    %4 = arith.extui %3 : vector<64x64xi1> to vector<64x64xi32>
    %5 = arith.sitofp %4 : vector<64x64xi32> to vector<64x64xf32>
    %c0_1 = arith.constant 0 : index
    %c0_2 = arith.constant 0 : index
    %6 = vector.load %arg2[%c0_1, %c0_2] : memref<64x32xf32, #tpu.memory_space<vmem>>, vector<64x32xf32>
    %cst = arith.constant dense<0.000000e+00> : vector<64x32xf32>
    %7 = tpu.matmul %5, %6, %cst {dimension_numbers = #tpu.dot_dimension_numbers<[1], [0], [0], [1], [0, 0, 1, 1], [], []>} : vector<64x64xf32>, vector<64x32xf32>, vector<64x32xf32> -> vector<64x32xf32>
    %c0_3 = arith.constant 0 : index
    %c0_4 = arith.constant 0 : index
    %8 = vector.load %arg1[%c0_3, %c0_4] : memref<8x1xi32, #tpu.memory_space<vmem>>, vector<8x1xi32>
    %c0_i32 = arith.constant 0 : i32
    %9 = vector.broadcast %c0_i32 : i32 to vector<8x1xi32>
    %10 = arith.cmpi sgt, %8, %9 : vector<8x1xi32>
    %c1_i32 = arith.constant 1 : i32
    %11 = vector.broadcast %c1_i32 : i32 to vector<8x1xi32>
    %12 = arith.cmpi sgt, %8, %11 : vector<8x1xi32>
    %c2_i32 = arith.constant 2 : i32
    %13 = vector.broadcast %c2_i32 : i32 to vector<8x1xi32>
    %14 = arith.cmpi sgt, %8, %13 : vector<8x1xi32>
    %c3_i32 = arith.constant 3 : i32
    %15 = vector.broadcast %c3_i32 : i32 to vector<8x1xi32>
    %16 = arith.cmpi sgt, %8, %15 : vector<8x1xi32>
    %c4_i32 = arith.constant 4 : i32
    %17 = vector.broadcast %c4_i32 : i32 to vector<8x1xi32>
    %18 = arith.cmpi sgt, %8, %17 : vector<8x1xi32>
    %c5_i32 = arith.constant 5 : i32
    %19 = vector.broadcast %c5_i32 : i32 to vector<8x1xi32>
    %20 = arith.cmpi sgt, %8, %19 : vector<8x1xi32>
    %c6_i32 = arith.constant 6 : i32
    %21 = vector.broadcast %c6_i32 : i32 to vector<8x1xi32>
    %22 = arith.cmpi sgt, %8, %21 : vector<8x1xi32>
    %c7_i32 = arith.constant 7 : i32
    %23 = vector.broadcast %c7_i32 : i32 to vector<8x1xi32>
    %24 = arith.cmpi sgt, %8, %23 : vector<8x1xi32>
    %c0_5 = arith.constant 0 : index
    %c0_6 = arith.constant 0 : index
    %25 = vector.load %arg3[%c0_5, %c0_6] : memref<32x256xf32, #tpu.memory_space<vmem>>, vector<32x256xf32>
    %cst_7 = arith.constant dense<0.000000e+00> : vector<64x256xf32>
    %26 = tpu.matmul %7, %25, %cst_7 {dimension_numbers = #tpu.dot_dimension_numbers<[1], [0], [0], [1], [0, 0, 1, 1], [], []>} : vector<64x32xf32>, vector<32x256xf32>, vector<64x256xf32> -> vector<64x256xf32>
    %c0_8 = arith.constant 0 : index
    %c0_9 = arith.constant 0 : index
    %27 = vector.load %arg6[%c0_8, %c0_9] : memref<1x256xf32, #tpu.memory_space<vmem>>, vector<1x256xf32>
    %28 = vector.broadcast %27 : vector<1x256xf32> to vector<64x256xf32>
    %29 = arith.addf %26, %28 : vector<64x256xf32>
    %c0_10 = arith.constant 0 : index
    %c0_11 = arith.constant 0 : index
    %30 = vector.load %arg4[%c0_10, %c0_11] : memref<32x128xf32, #tpu.memory_space<vmem>>, vector<32x128xf32>
    %c0_12 = arith.constant 0 : index
    %c0_13 = arith.constant 0 : index
    %31 = vector.load %arg5[%c0_12, %c0_13] : memref<32x128xf32, #tpu.memory_space<vmem>>, vector<32x128xf32>
    %cst_14 = arith.constant 0.000000e+00 : f32
    %32 = vector.broadcast %cst_14 : f32 to vector<8x32xf32>
    %cst_15 = arith.constant 0.000000e+00 : f32
    %33 = vector.broadcast %cst_15 : f32 to vector<8x32xf32>
    %cst_16 = arith.constant 0.000000e+00 : f32
    %34 = vector.broadcast %cst_16 : f32 to vector<8x32xf32>
    %cst_17 = arith.constant 0.000000e+00 : f32
    %35 = vector.broadcast %cst_17 : f32 to vector<8x32xf32>
    %36 = vector.extract_strided_slice %29 {offsets = [0, 0], sizes = [8, 128], strides = [1, 1]} : vector<64x256xf32> to vector<8x128xf32>
    %37 = vector.extract_strided_slice %29 {offsets = [56, 128], sizes = [8, 128], strides = [1, 1]} : vector<64x256xf32> to vector<8x128xf32>
    %cst_18 = arith.constant dense<0.000000e+00> : vector<8x128xf32>
    %38 = tpu.matmul %32, %30, %cst_18 {dimension_numbers = #tpu.dot_dimension_numbers<[1], [0], [0], [1], [0, 0, 1, 1], [], []>} : vector<8x32xf32>, vector<32x128xf32>, vector<8x128xf32> -> vector<8x128xf32>
    %39 = arith.addf %36, %38 : vector<8x128xf32>
    %cst_19 = arith.constant dense<0.000000e+00> : vector<8x128xf32>
    %40 = tpu.matmul %34, %31, %cst_19 {dimension_numbers = #tpu.dot_dimension_numbers<[1], [0], [0], [1], [0, 0, 1, 1], [], []>} : vector<8x32xf32>, vector<32x128xf32>, vector<8x128xf32> -> vector<8x128xf32>
    %41 = arith.addf %37, %40 : vector<8x128xf32>
    %42 = vector.extract_strided_slice %39 {offsets = [0, 0], sizes = [8, 96], strides = [1, 1]} : vector<8x128xf32> to vector<8x96xf32>
    %43 = arith.negf %42 : vector<8x96xf32>
    %44 = math.exp %43 : vector<8x96xf32>
    %cst_20 = arith.constant 1.000000e+00 : f32
    %45 = vector.broadcast %cst_20 : f32 to vector<8x96xf32>
    %46 = arith.addf %45, %44 : vector<8x96xf32>
    %47 = arith.divf %45, %46 : vector<8x96xf32>
    %48 = vector.extract_strided_slice %39 {offsets = [0, 96], sizes = [8, 32], strides = [1, 1]} : vector<8x128xf32> to vector<8x32xf32>
    %49 = math.tanh %48 : vector<8x32xf32>
    %50 = vector.extract_strided_slice %41 {offsets = [0, 0], sizes = [8, 96], strides = [1, 1]} : vector<8x128xf32> to vector<8x96xf32>
    %51 = arith.negf %50 : vector<8x96xf32>
    %52 = math.exp %51 : vector<8x96xf32>
    %cst_21 = arith.constant 1.000000e+00 : f32
    %53 = vector.broadcast %cst_21 : f32 to vector<8x96xf32>
    %54 = arith.addf %53, %52 : vector<8x96xf32>
    %55 = arith.divf %53, %54 : vector<8x96xf32>
    %56 = vector.extract_strided_slice %41 {offsets = [0, 96], sizes = [8, 32], strides = [1, 1]} : vector<8x128xf32> to vector<8x32xf32>
    %57 = math.tanh %56 : vector<8x32xf32>
    %58 = vector.extract_strided_slice %47 {offsets = [0, 32], sizes = [8, 32], strides = [1, 1]} : vector<8x96xf32> to vector<8x32xf32>
    %59 = arith.mulf %58, %33 : vector<8x32xf32>
    %60 = vector.extract_strided_slice %47 {offsets = [0, 0], sizes = [8, 32], strides = [1, 1]} : vector<8x96xf32> to vector<8x32xf32>
    %61 = arith.mulf %60, %49 : vector<8x32xf32>
    %62 = arith.addf %59, %61 : vector<8x32xf32>
    %63 = vector.extract_strided_slice %55 {offsets = [0, 32], sizes = [8, 32], strides = [1, 1]} : vector<8x96xf32> to vector<8x32xf32>
    %64 = arith.mulf %63, %35 : vector<8x32xf32>
    %65 = vector.extract_strided_slice %55 {offsets = [0, 0], sizes = [8, 32], strides = [1, 1]} : vector<8x96xf32> to vector<8x32xf32>
    %66 = arith.mulf %65, %57 : vector<8x32xf32>
    %67 = arith.addf %64, %66 : vector<8x32xf32>
    %68 = vector.extract_strided_slice %47 {offsets = [0, 64], sizes = [8, 32], strides = [1, 1]} : vector<8x96xf32> to vector<8x32xf32>
    %69 = math.tanh %62 : vector<8x32xf32>
    %70 = arith.mulf %68, %69 : vector<8x32xf32>
    %71 = vector.extract_strided_slice %55 {offsets = [0, 64], sizes = [8, 32], strides = [1, 1]} : vector<8x96xf32> to vector<8x32xf32>
    %72 = math.tanh %67 : vector<8x32xf32>
    %73 = arith.mulf %71, %72 : vector<8x32xf32>
    %74 = vector.shape_cast %10 : vector<8x1xi1> to vector<8x1xi1>
    %75 = vector.broadcast %74 : vector<8x1xi1> to vector<8x32xi1>
    %76 = arith.select %75, %70, %32 : vector<8x32xi1>, vector<8x32xf32>
    %77 = vector.shape_cast %10 : vector<8x1xi1> to vector<8x1xi1>
    %78 = vector.broadcast %77 : vector<8x1xi1> to vector<8x32xi1>
    %79 = arith.select %78, %62, %33 : vector<8x32xi1>, vector<8x32xf32>
    %80 = vector.shape_cast %24 : vector<8x1xi1> to vector<8x1xi1>
    %81 = vector.broadcast %80 : vector<8x1xi1> to vector<8x32xi1>
    %82 = arith.select %81, %73, %34 : vector<8x32xi1>, vector<8x32xf32>
    %83 = vector.shape_cast %24 : vector<8x1xi1> to vector<8x1xi1>
    %84 = vector.broadcast %83 : vector<8x1xi1> to vector<8x32xi1>
    %85 = arith.select %84, %67, %35 : vector<8x32xi1>, vector<8x32xf32>
    %cst_22 = arith.constant 0.000000e+00 : f32
    %86 = vector.shape_cast %10 : vector<8x1xi1> to vector<8x1xi1>
    %87 = vector.broadcast %86 : vector<8x1xi1> to vector<8x32xi1>
    %88 = vector.broadcast %cst_22 : f32 to vector<8x32xf32>
    %89 = arith.select %87, %70, %88 : vector<8x32xi1>, vector<8x32xf32>
    %cst_23 = arith.constant 0.000000e+00 : f32
    %90 = vector.shape_cast %24 : vector<8x1xi1> to vector<8x1xi1>
    %91 = vector.broadcast %90 : vector<8x1xi1> to vector<8x32xi1>
    %92 = vector.broadcast %cst_23 : f32 to vector<8x32xf32>
    %93 = arith.select %91, %73, %92 : vector<8x32xi1>, vector<8x32xf32>
    %94 = vector.extract_strided_slice %29 {offsets = [8, 0], sizes = [8, 128], strides = [1, 1]} : vector<64x256xf32> to vector<8x128xf32>
    %95 = vector.extract_strided_slice %29 {offsets = [48, 128], sizes = [8, 128], strides = [1, 1]} : vector<64x256xf32> to vector<8x128xf32>
    %cst_24 = arith.constant dense<0.000000e+00> : vector<8x128xf32>
    %96 = tpu.matmul %76, %30, %cst_24 {dimension_numbers = #tpu.dot_dimension_numbers<[1], [0], [0], [1], [0, 0, 1, 1], [], []>} : vector<8x32xf32>, vector<32x128xf32>, vector<8x128xf32> -> vector<8x128xf32>
    %97 = arith.addf %94, %96 : vector<8x128xf32>
    %cst_25 = arith.constant dense<0.000000e+00> : vector<8x128xf32>
    %98 = tpu.matmul %82, %31, %cst_25 {dimension_numbers = #tpu.dot_dimension_numbers<[1], [0], [0], [1], [0, 0, 1, 1], [], []>} : vector<8x32xf32>, vector<32x128xf32>, vector<8x128xf32> -> vector<8x128xf32>
    %99 = arith.addf %95, %98 : vector<8x128xf32>
    %100 = vector.extract_strided_slice %97 {offsets = [0, 0], sizes = [8, 96], strides = [1, 1]} : vector<8x128xf32> to vector<8x96xf32>
    %101 = arith.negf %100 : vector<8x96xf32>
    %102 = math.exp %101 : vector<8x96xf32>
    %cst_26 = arith.constant 1.000000e+00 : f32
    %103 = vector.broadcast %cst_26 : f32 to vector<8x96xf32>
    %104 = arith.addf %103, %102 : vector<8x96xf32>
    %105 = arith.divf %103, %104 : vector<8x96xf32>
    %106 = vector.extract_strided_slice %97 {offsets = [0, 96], sizes = [8, 32], strides = [1, 1]} : vector<8x128xf32> to vector<8x32xf32>
    %107 = math.tanh %106 : vector<8x32xf32>
    %108 = vector.extract_strided_slice %99 {offsets = [0, 0], sizes = [8, 96], strides = [1, 1]} : vector<8x128xf32> to vector<8x96xf32>
    %109 = arith.negf %108 : vector<8x96xf32>
    %110 = math.exp %109 : vector<8x96xf32>
    %cst_27 = arith.constant 1.000000e+00 : f32
    %111 = vector.broadcast %cst_27 : f32 to vector<8x96xf32>
    %112 = arith.addf %111, %110 : vector<8x96xf32>
    %113 = arith.divf %111, %112 : vector<8x96xf32>
    %114 = vector.extract_strided_slice %99 {offsets = [0, 96], sizes = [8, 32], strides = [1, 1]} : vector<8x128xf32> to vector<8x32xf32>
    %115 = math.tanh %114 : vector<8x32xf32>
    %116 = vector.extract_strided_slice %105 {offsets = [0, 32], sizes = [8, 32], strides = [1, 1]} : vector<8x96xf32> to vector<8x32xf32>
    %117 = arith.mulf %116, %79 : vector<8x32xf32>
    %118 = vector.extract_strided_slice %105 {offsets = [0, 0], sizes = [8, 32], strides = [1, 1]} : vector<8x96xf32> to vector<8x32xf32>
    %119 = arith.mulf %118, %107 : vector<8x32xf32>
    %120 = arith.addf %117, %119 : vector<8x32xf32>
    %121 = vector.extract_strided_slice %113 {offsets = [0, 32], sizes = [8, 32], strides = [1, 1]} : vector<8x96xf32> to vector<8x32xf32>
    %122 = arith.mulf %121, %85 : vector<8x32xf32>
    %123 = vector.extract_strided_slice %113 {offsets = [0, 0], sizes = [8, 32], strides = [1, 1]} : vector<8x96xf32> to vector<8x32xf32>
    %124 = arith.mulf %123, %115 : vector<8x32xf32>
    %125 = arith.addf %122, %124 : vector<8x32xf32>
    %126 = vector.extract_strided_slice %105 {offsets = [0, 64], sizes = [8, 32], strides = [1, 1]} : vector<8x96xf32> to vector<8x32xf32>
    %127 = math.tanh %120 : vector<8x32xf32>
    %128 = arith.mulf %126, %127 : vector<8x32xf32>
    %129 = vector.extract_strided_slice %113 {offsets = [0, 64], sizes = [8, 32], strides = [1, 1]} : vector<8x96xf32> to vector<8x32xf32>
    %130 = math.tanh %125 : vector<8x32xf32>
    %131 = arith.mulf %129, %130 : vector<8x32xf32>
    %132 = vector.shape_cast %12 : vector<8x1xi1> to vector<8x1xi1>
    %133 = vector.broadcast %132 : vector<8x1xi1> to vector<8x32xi1>
    %134 = arith.select %133, %128, %76 : vector<8x32xi1>, vector<8x32xf32>
    %135 = vector.shape_cast %12 : vector<8x1xi1> to vector<8x1xi1>
    %136 = vector.broadcast %135 : vector<8x1xi1> to vector<8x32xi1>
    %137 = arith.select %136, %120, %79 : vector<8x32xi1>, vector<8x32xf32>
    %138 = vector.shape_cast %22 : vector<8x1xi1> to vector<8x1xi1>
    %139 = vector.broadcast %138 : vector<8x1xi1> to vector<8x32xi1>
    %140 = arith.select %139, %131, %82 : vector<8x32xi1>, vector<8x32xf32>
    %141 = vector.shape_cast %22 : vector<8x1xi1> to vector<8x1xi1>
    %142 = vector.broadcast %141 : vector<8x1xi1> to vector<8x32xi1>
    %143 = arith.select %142, %125, %85 : vector<8x32xi1>, vector<8x32xf32>
    %cst_28 = arith.constant 0.000000e+00 : f32
    %144 = vector.shape_cast %12 : vector<8x1xi1> to vector<8x1xi1>
    %145 = vector.broadcast %144 : vector<8x1xi1> to vector<8x32xi1>
    %146 = vector.broadcast %cst_28 : f32 to vector<8x32xf32>
    %147 = arith.select %145, %128, %146 : vector<8x32xi1>, vector<8x32xf32>
    %cst_29 = arith.constant 0.000000e+00 : f32
    %148 = vector.shape_cast %22 : vector<8x1xi1> to vector<8x1xi1>
    %149 = vector.broadcast %148 : vector<8x1xi1> to vector<8x32xi1>
    %150 = vector.broadcast %cst_29 : f32 to vector<8x32xf32>
    %151 = arith.select %149, %131, %150 : vector<8x32xi1>, vector<8x32xf32>
    %152 = vector.extract_strided_slice %29 {offsets = [16, 0], sizes = [8, 128], strides = [1, 1]} : vector<64x256xf32> to vector<8x128xf32>
    %153 = vector.extract_strided_slice %29 {offsets = [40, 128], sizes = [8, 128], strides = [1, 1]} : vector<64x256xf32> to vector<8x128xf32>
    %cst_30 = arith.constant dense<0.000000e+00> : vector<8x128xf32>
    %154 = tpu.matmul %134, %30, %cst_30 {dimension_numbers = #tpu.dot_dimension_numbers<[1], [0], [0], [1], [0, 0, 1, 1], [], []>} : vector<8x32xf32>, vector<32x128xf32>, vector<8x128xf32> -> vector<8x128xf32>
    %155 = arith.addf %152, %154 : vector<8x128xf32>
    %cst_31 = arith.constant dense<0.000000e+00> : vector<8x128xf32>
    %156 = tpu.matmul %140, %31, %cst_31 {dimension_numbers = #tpu.dot_dimension_numbers<[1], [0], [0], [1], [0, 0, 1, 1], [], []>} : vector<8x32xf32>, vector<32x128xf32>, vector<8x128xf32> -> vector<8x128xf32>
    %157 = arith.addf %153, %156 : vector<8x128xf32>
    %158 = vector.extract_strided_slice %155 {offsets = [0, 0], sizes = [8, 96], strides = [1, 1]} : vector<8x128xf32> to vector<8x96xf32>
    %159 = arith.negf %158 : vector<8x96xf32>
    %160 = math.exp %159 : vector<8x96xf32>
    %cst_32 = arith.constant 1.000000e+00 : f32
    %161 = vector.broadcast %cst_32 : f32 to vector<8x96xf32>
    %162 = arith.addf %161, %160 : vector<8x96xf32>
    %163 = arith.divf %161, %162 : vector<8x96xf32>
    %164 = vector.extract_strided_slice %155 {offsets = [0, 96], sizes = [8, 32], strides = [1, 1]} : vector<8x128xf32> to vector<8x32xf32>
    %165 = math.tanh %164 : vector<8x32xf32>
    %166 = vector.extract_strided_slice %157 {offsets = [0, 0], sizes = [8, 96], strides = [1, 1]} : vector<8x128xf32> to vector<8x96xf32>
    %167 = arith.negf %166 : vector<8x96xf32>
    %168 = math.exp %167 : vector<8x96xf32>
    %cst_33 = arith.constant 1.000000e+00 : f32
    %169 = vector.broadcast %cst_33 : f32 to vector<8x96xf32>
    %170 = arith.addf %169, %168 : vector<8x96xf32>
    %171 = arith.divf %169, %170 : vector<8x96xf32>
    %172 = vector.extract_strided_slice %157 {offsets = [0, 96], sizes = [8, 32], strides = [1, 1]} : vector<8x128xf32> to vector<8x32xf32>
    %173 = math.tanh %172 : vector<8x32xf32>
    %174 = vector.extract_strided_slice %163 {offsets = [0, 32], sizes = [8, 32], strides = [1, 1]} : vector<8x96xf32> to vector<8x32xf32>
    %175 = arith.mulf %174, %137 : vector<8x32xf32>
    %176 = vector.extract_strided_slice %163 {offsets = [0, 0], sizes = [8, 32], strides = [1, 1]} : vector<8x96xf32> to vector<8x32xf32>
    %177 = arith.mulf %176, %165 : vector<8x32xf32>
    %178 = arith.addf %175, %177 : vector<8x32xf32>
    %179 = vector.extract_strided_slice %171 {offsets = [0, 32], sizes = [8, 32], strides = [1, 1]} : vector<8x96xf32> to vector<8x32xf32>
    %180 = arith.mulf %179, %143 : vector<8x32xf32>
    %181 = vector.extract_strided_slice %171 {offsets = [0, 0], sizes = [8, 32], strides = [1, 1]} : vector<8x96xf32> to vector<8x32xf32>
    %182 = arith.mulf %181, %173 : vector<8x32xf32>
    %183 = arith.addf %180, %182 : vector<8x32xf32>
    %184 = vector.extract_strided_slice %163 {offsets = [0, 64], sizes = [8, 32], strides = [1, 1]} : vector<8x96xf32> to vector<8x32xf32>
    %185 = math.tanh %178 : vector<8x32xf32>
    %186 = arith.mulf %184, %185 : vector<8x32xf32>
    %187 = vector.extract_strided_slice %171 {offsets = [0, 64], sizes = [8, 32], strides = [1, 1]} : vector<8x96xf32> to vector<8x32xf32>
    %188 = math.tanh %183 : vector<8x32xf32>
    %189 = arith.mulf %187, %188 : vector<8x32xf32>
    %190 = vector.shape_cast %14 : vector<8x1xi1> to vector<8x1xi1>
    %191 = vector.broadcast %190 : vector<8x1xi1> to vector<8x32xi1>
    %192 = arith.select %191, %186, %134 : vector<8x32xi1>, vector<8x32xf32>
    %193 = vector.shape_cast %14 : vector<8x1xi1> to vector<8x1xi1>
    %194 = vector.broadcast %193 : vector<8x1xi1> to vector<8x32xi1>
    %195 = arith.select %194, %178, %137 : vector<8x32xi1>, vector<8x32xf32>
    %196 = vector.shape_cast %20 : vector<8x1xi1> to vector<8x1xi1>
    %197 = vector.broadcast %196 : vector<8x1xi1> to vector<8x32xi1>
    %198 = arith.select %197, %189, %140 : vector<8x32xi1>, vector<8x32xf32>
    %199 = vector.shape_cast %20 : vector<8x1xi1> to vector<8x1xi1>
    %200 = vector.broadcast %199 : vector<8x1xi1> to vector<8x32xi1>
    %201 = arith.select %200, %183, %143 : vector<8x32xi1>, vector<8x32xf32>
    %cst_34 = arith.constant 0.000000e+00 : f32
    %202 = vector.shape_cast %14 : vector<8x1xi1> to vector<8x1xi1>
    %203 = vector.broadcast %202 : vector<8x1xi1> to vector<8x32xi1>
    %204 = vector.broadcast %cst_34 : f32 to vector<8x32xf32>
    %205 = arith.select %203, %186, %204 : vector<8x32xi1>, vector<8x32xf32>
    %cst_35 = arith.constant 0.000000e+00 : f32
    %206 = vector.shape_cast %20 : vector<8x1xi1> to vector<8x1xi1>
    %207 = vector.broadcast %206 : vector<8x1xi1> to vector<8x32xi1>
    %208 = vector.broadcast %cst_35 : f32 to vector<8x32xf32>
    %209 = arith.select %207, %189, %208 : vector<8x32xi1>, vector<8x32xf32>
    %210 = vector.extract_strided_slice %29 {offsets = [24, 0], sizes = [8, 128], strides = [1, 1]} : vector<64x256xf32> to vector<8x128xf32>
    %211 = vector.extract_strided_slice %29 {offsets = [32, 128], sizes = [8, 128], strides = [1, 1]} : vector<64x256xf32> to vector<8x128xf32>
    %cst_36 = arith.constant dense<0.000000e+00> : vector<8x128xf32>
    %212 = tpu.matmul %192, %30, %cst_36 {dimension_numbers = #tpu.dot_dimension_numbers<[1], [0], [0], [1], [0, 0, 1, 1], [], []>} : vector<8x32xf32>, vector<32x128xf32>, vector<8x128xf32> -> vector<8x128xf32>
    %213 = arith.addf %210, %212 : vector<8x128xf32>
    %cst_37 = arith.constant dense<0.000000e+00> : vector<8x128xf32>
    %214 = tpu.matmul %198, %31, %cst_37 {dimension_numbers = #tpu.dot_dimension_numbers<[1], [0], [0], [1], [0, 0, 1, 1], [], []>} : vector<8x32xf32>, vector<32x128xf32>, vector<8x128xf32> -> vector<8x128xf32>
    %215 = arith.addf %211, %214 : vector<8x128xf32>
    %216 = vector.extract_strided_slice %213 {offsets = [0, 0], sizes = [8, 96], strides = [1, 1]} : vector<8x128xf32> to vector<8x96xf32>
    %217 = arith.negf %216 : vector<8x96xf32>
    %218 = math.exp %217 : vector<8x96xf32>
    %cst_38 = arith.constant 1.000000e+00 : f32
    %219 = vector.broadcast %cst_38 : f32 to vector<8x96xf32>
    %220 = arith.addf %219, %218 : vector<8x96xf32>
    %221 = arith.divf %219, %220 : vector<8x96xf32>
    %222 = vector.extract_strided_slice %213 {offsets = [0, 96], sizes = [8, 32], strides = [1, 1]} : vector<8x128xf32> to vector<8x32xf32>
    %223 = math.tanh %222 : vector<8x32xf32>
    %224 = vector.extract_strided_slice %215 {offsets = [0, 0], sizes = [8, 96], strides = [1, 1]} : vector<8x128xf32> to vector<8x96xf32>
    %225 = arith.negf %224 : vector<8x96xf32>
    %226 = math.exp %225 : vector<8x96xf32>
    %cst_39 = arith.constant 1.000000e+00 : f32
    %227 = vector.broadcast %cst_39 : f32 to vector<8x96xf32>
    %228 = arith.addf %227, %226 : vector<8x96xf32>
    %229 = arith.divf %227, %228 : vector<8x96xf32>
    %230 = vector.extract_strided_slice %215 {offsets = [0, 96], sizes = [8, 32], strides = [1, 1]} : vector<8x128xf32> to vector<8x32xf32>
    %231 = math.tanh %230 : vector<8x32xf32>
    %232 = vector.extract_strided_slice %221 {offsets = [0, 32], sizes = [8, 32], strides = [1, 1]} : vector<8x96xf32> to vector<8x32xf32>
    %233 = arith.mulf %232, %195 : vector<8x32xf32>
    %234 = vector.extract_strided_slice %221 {offsets = [0, 0], sizes = [8, 32], strides = [1, 1]} : vector<8x96xf32> to vector<8x32xf32>
    %235 = arith.mulf %234, %223 : vector<8x32xf32>
    %236 = arith.addf %233, %235 : vector<8x32xf32>
    %237 = vector.extract_strided_slice %229 {offsets = [0, 32], sizes = [8, 32], strides = [1, 1]} : vector<8x96xf32> to vector<8x32xf32>
    %238 = arith.mulf %237, %201 : vector<8x32xf32>
    %239 = vector.extract_strided_slice %229 {offsets = [0, 0], sizes = [8, 32], strides = [1, 1]} : vector<8x96xf32> to vector<8x32xf32>
    %240 = arith.mulf %239, %231 : vector<8x32xf32>
    %241 = arith.addf %238, %240 : vector<8x32xf32>
    %242 = vector.extract_strided_slice %221 {offsets = [0, 64], sizes = [8, 32], strides = [1, 1]} : vector<8x96xf32> to vector<8x32xf32>
    %243 = math.tanh %236 : vector<8x32xf32>
    %244 = arith.mulf %242, %243 : vector<8x32xf32>
    %245 = vector.extract_strided_slice %229 {offsets = [0, 64], sizes = [8, 32], strides = [1, 1]} : vector<8x96xf32> to vector<8x32xf32>
    %246 = math.tanh %241 : vector<8x32xf32>
    %247 = arith.mulf %245, %246 : vector<8x32xf32>
    %248 = vector.shape_cast %16 : vector<8x1xi1> to vector<8x1xi1>
    %249 = vector.broadcast %248 : vector<8x1xi1> to vector<8x32xi1>
    %250 = arith.select %249, %244, %192 : vector<8x32xi1>, vector<8x32xf32>
    %251 = vector.shape_cast %16 : vector<8x1xi1> to vector<8x1xi1>
    %252 = vector.broadcast %251 : vector<8x1xi1> to vector<8x32xi1>
    %253 = arith.select %252, %236, %195 : vector<8x32xi1>, vector<8x32xf32>
    %254 = vector.shape_cast %18 : vector<8x1xi1> to vector<8x1xi1>
    %255 = vector.broadcast %254 : vector<8x1xi1> to vector<8x32xi1>
    %256 = arith.select %255, %247, %198 : vector<8x32xi1>, vector<8x32xf32>
    %257 = vector.shape_cast %18 : vector<8x1xi1> to vector<8x1xi1>
    %258 = vector.broadcast %257 : vector<8x1xi1> to vector<8x32xi1>
    %259 = arith.select %258, %241, %201 : vector<8x32xi1>, vector<8x32xf32>
    %cst_40 = arith.constant 0.000000e+00 : f32
    %260 = vector.shape_cast %16 : vector<8x1xi1> to vector<8x1xi1>
    %261 = vector.broadcast %260 : vector<8x1xi1> to vector<8x32xi1>
    %262 = vector.broadcast %cst_40 : f32 to vector<8x32xf32>
    %263 = arith.select %261, %244, %262 : vector<8x32xi1>, vector<8x32xf32>
    %cst_41 = arith.constant 0.000000e+00 : f32
    %264 = vector.shape_cast %18 : vector<8x1xi1> to vector<8x1xi1>
    %265 = vector.broadcast %264 : vector<8x1xi1> to vector<8x32xi1>
    %266 = vector.broadcast %cst_41 : f32 to vector<8x32xf32>
    %267 = arith.select %265, %247, %266 : vector<8x32xi1>, vector<8x32xf32>
    %268 = vector.extract_strided_slice %29 {offsets = [32, 0], sizes = [8, 128], strides = [1, 1]} : vector<64x256xf32> to vector<8x128xf32>
    %269 = vector.extract_strided_slice %29 {offsets = [24, 128], sizes = [8, 128], strides = [1, 1]} : vector<64x256xf32> to vector<8x128xf32>
    %cst_42 = arith.constant dense<0.000000e+00> : vector<8x128xf32>
    %270 = tpu.matmul %250, %30, %cst_42 {dimension_numbers = #tpu.dot_dimension_numbers<[1], [0], [0], [1], [0, 0, 1, 1], [], []>} : vector<8x32xf32>, vector<32x128xf32>, vector<8x128xf32> -> vector<8x128xf32>
    %271 = arith.addf %268, %270 : vector<8x128xf32>
    %cst_43 = arith.constant dense<0.000000e+00> : vector<8x128xf32>
    %272 = tpu.matmul %256, %31, %cst_43 {dimension_numbers = #tpu.dot_dimension_numbers<[1], [0], [0], [1], [0, 0, 1, 1], [], []>} : vector<8x32xf32>, vector<32x128xf32>, vector<8x128xf32> -> vector<8x128xf32>
    %273 = arith.addf %269, %272 : vector<8x128xf32>
    %274 = vector.extract_strided_slice %271 {offsets = [0, 0], sizes = [8, 96], strides = [1, 1]} : vector<8x128xf32> to vector<8x96xf32>
    %275 = arith.negf %274 : vector<8x96xf32>
    %276 = math.exp %275 : vector<8x96xf32>
    %cst_44 = arith.constant 1.000000e+00 : f32
    %277 = vector.broadcast %cst_44 : f32 to vector<8x96xf32>
    %278 = arith.addf %277, %276 : vector<8x96xf32>
    %279 = arith.divf %277, %278 : vector<8x96xf32>
    %280 = vector.extract_strided_slice %271 {offsets = [0, 96], sizes = [8, 32], strides = [1, 1]} : vector<8x128xf32> to vector<8x32xf32>
    %281 = math.tanh %280 : vector<8x32xf32>
    %282 = vector.extract_strided_slice %273 {offsets = [0, 0], sizes = [8, 96], strides = [1, 1]} : vector<8x128xf32> to vector<8x96xf32>
    %283 = arith.negf %282 : vector<8x96xf32>
    %284 = math.exp %283 : vector<8x96xf32>
    %cst_45 = arith.constant 1.000000e+00 : f32
    %285 = vector.broadcast %cst_45 : f32 to vector<8x96xf32>
    %286 = arith.addf %285, %284 : vector<8x96xf32>
    %287 = arith.divf %285, %286 : vector<8x96xf32>
    %288 = vector.extract_strided_slice %273 {offsets = [0, 96], sizes = [8, 32], strides = [1, 1]} : vector<8x128xf32> to vector<8x32xf32>
    %289 = math.tanh %288 : vector<8x32xf32>
    %290 = vector.extract_strided_slice %279 {offsets = [0, 32], sizes = [8, 32], strides = [1, 1]} : vector<8x96xf32> to vector<8x32xf32>
    %291 = arith.mulf %290, %253 : vector<8x32xf32>
    %292 = vector.extract_strided_slice %279 {offsets = [0, 0], sizes = [8, 32], strides = [1, 1]} : vector<8x96xf32> to vector<8x32xf32>
    %293 = arith.mulf %292, %281 : vector<8x32xf32>
    %294 = arith.addf %291, %293 : vector<8x32xf32>
    %295 = vector.extract_strided_slice %287 {offsets = [0, 32], sizes = [8, 32], strides = [1, 1]} : vector<8x96xf32> to vector<8x32xf32>
    %296 = arith.mulf %295, %259 : vector<8x32xf32>
    %297 = vector.extract_strided_slice %287 {offsets = [0, 0], sizes = [8, 32], strides = [1, 1]} : vector<8x96xf32> to vector<8x32xf32>
    %298 = arith.mulf %297, %289 : vector<8x32xf32>
    %299 = arith.addf %296, %298 : vector<8x32xf32>
    %300 = vector.extract_strided_slice %279 {offsets = [0, 64], sizes = [8, 32], strides = [1, 1]} : vector<8x96xf32> to vector<8x32xf32>
    %301 = math.tanh %294 : vector<8x32xf32>
    %302 = arith.mulf %300, %301 : vector<8x32xf32>
    %303 = vector.extract_strided_slice %287 {offsets = [0, 64], sizes = [8, 32], strides = [1, 1]} : vector<8x96xf32> to vector<8x32xf32>
    %304 = math.tanh %299 : vector<8x32xf32>
    %305 = arith.mulf %303, %304 : vector<8x32xf32>
    %306 = vector.shape_cast %18 : vector<8x1xi1> to vector<8x1xi1>
    %307 = vector.broadcast %306 : vector<8x1xi1> to vector<8x32xi1>
    %308 = arith.select %307, %302, %250 : vector<8x32xi1>, vector<8x32xf32>
    %309 = vector.shape_cast %18 : vector<8x1xi1> to vector<8x1xi1>
    %310 = vector.broadcast %309 : vector<8x1xi1> to vector<8x32xi1>
    %311 = arith.select %310, %294, %253 : vector<8x32xi1>, vector<8x32xf32>
    %312 = vector.shape_cast %16 : vector<8x1xi1> to vector<8x1xi1>
    %313 = vector.broadcast %312 : vector<8x1xi1> to vector<8x32xi1>
    %314 = arith.select %313, %305, %256 : vector<8x32xi1>, vector<8x32xf32>
    %315 = vector.shape_cast %16 : vector<8x1xi1> to vector<8x1xi1>
    %316 = vector.broadcast %315 : vector<8x1xi1> to vector<8x32xi1>
    %317 = arith.select %316, %299, %259 : vector<8x32xi1>, vector<8x32xf32>
    %cst_46 = arith.constant 0.000000e+00 : f32
    %318 = vector.shape_cast %18 : vector<8x1xi1> to vector<8x1xi1>
    %319 = vector.broadcast %318 : vector<8x1xi1> to vector<8x32xi1>
    %320 = vector.broadcast %cst_46 : f32 to vector<8x32xf32>
    %321 = arith.select %319, %302, %320 : vector<8x32xi1>, vector<8x32xf32>
    %cst_47 = arith.constant 0.000000e+00 : f32
    %322 = vector.shape_cast %16 : vector<8x1xi1> to vector<8x1xi1>
    %323 = vector.broadcast %322 : vector<8x1xi1> to vector<8x32xi1>
    %324 = vector.broadcast %cst_47 : f32 to vector<8x32xf32>
    %325 = arith.select %323, %305, %324 : vector<8x32xi1>, vector<8x32xf32>
    %326 = vector.extract_strided_slice %29 {offsets = [40, 0], sizes = [8, 128], strides = [1, 1]} : vector<64x256xf32> to vector<8x128xf32>
    %327 = vector.extract_strided_slice %29 {offsets = [16, 128], sizes = [8, 128], strides = [1, 1]} : vector<64x256xf32> to vector<8x128xf32>
    %cst_48 = arith.constant dense<0.000000e+00> : vector<8x128xf32>
    %328 = tpu.matmul %308, %30, %cst_48 {dimension_numbers = #tpu.dot_dimension_numbers<[1], [0], [0], [1], [0, 0, 1, 1], [], []>} : vector<8x32xf32>, vector<32x128xf32>, vector<8x128xf32> -> vector<8x128xf32>
    %329 = arith.addf %326, %328 : vector<8x128xf32>
    %cst_49 = arith.constant dense<0.000000e+00> : vector<8x128xf32>
    %330 = tpu.matmul %314, %31, %cst_49 {dimension_numbers = #tpu.dot_dimension_numbers<[1], [0], [0], [1], [0, 0, 1, 1], [], []>} : vector<8x32xf32>, vector<32x128xf32>, vector<8x128xf32> -> vector<8x128xf32>
    %331 = arith.addf %327, %330 : vector<8x128xf32>
    %332 = vector.extract_strided_slice %329 {offsets = [0, 0], sizes = [8, 96], strides = [1, 1]} : vector<8x128xf32> to vector<8x96xf32>
    %333 = arith.negf %332 : vector<8x96xf32>
    %334 = math.exp %333 : vector<8x96xf32>
    %cst_50 = arith.constant 1.000000e+00 : f32
    %335 = vector.broadcast %cst_50 : f32 to vector<8x96xf32>
    %336 = arith.addf %335, %334 : vector<8x96xf32>
    %337 = arith.divf %335, %336 : vector<8x96xf32>
    %338 = vector.extract_strided_slice %329 {offsets = [0, 96], sizes = [8, 32], strides = [1, 1]} : vector<8x128xf32> to vector<8x32xf32>
    %339 = math.tanh %338 : vector<8x32xf32>
    %340 = vector.extract_strided_slice %331 {offsets = [0, 0], sizes = [8, 96], strides = [1, 1]} : vector<8x128xf32> to vector<8x96xf32>
    %341 = arith.negf %340 : vector<8x96xf32>
    %342 = math.exp %341 : vector<8x96xf32>
    %cst_51 = arith.constant 1.000000e+00 : f32
    %343 = vector.broadcast %cst_51 : f32 to vector<8x96xf32>
    %344 = arith.addf %343, %342 : vector<8x96xf32>
    %345 = arith.divf %343, %344 : vector<8x96xf32>
    %346 = vector.extract_strided_slice %331 {offsets = [0, 96], sizes = [8, 32], strides = [1, 1]} : vector<8x128xf32> to vector<8x32xf32>
    %347 = math.tanh %346 : vector<8x32xf32>
    %348 = vector.extract_strided_slice %337 {offsets = [0, 32], sizes = [8, 32], strides = [1, 1]} : vector<8x96xf32> to vector<8x32xf32>
    %349 = arith.mulf %348, %311 : vector<8x32xf32>
    %350 = vector.extract_strided_slice %337 {offsets = [0, 0], sizes = [8, 32], strides = [1, 1]} : vector<8x96xf32> to vector<8x32xf32>
    %351 = arith.mulf %350, %339 : vector<8x32xf32>
    %352 = arith.addf %349, %351 : vector<8x32xf32>
    %353 = vector.extract_strided_slice %345 {offsets = [0, 32], sizes = [8, 32], strides = [1, 1]} : vector<8x96xf32> to vector<8x32xf32>
    %354 = arith.mulf %353, %317 : vector<8x32xf32>
    %355 = vector.extract_strided_slice %345 {offsets = [0, 0], sizes = [8, 32], strides = [1, 1]} : vector<8x96xf32> to vector<8x32xf32>
    %356 = arith.mulf %355, %347 : vector<8x32xf32>
    %357 = arith.addf %354, %356 : vector<8x32xf32>
    %358 = vector.extract_strided_slice %337 {offsets = [0, 64], sizes = [8, 32], strides = [1, 1]} : vector<8x96xf32> to vector<8x32xf32>
    %359 = math.tanh %352 : vector<8x32xf32>
    %360 = arith.mulf %358, %359 : vector<8x32xf32>
    %361 = vector.extract_strided_slice %345 {offsets = [0, 64], sizes = [8, 32], strides = [1, 1]} : vector<8x96xf32> to vector<8x32xf32>
    %362 = math.tanh %357 : vector<8x32xf32>
    %363 = arith.mulf %361, %362 : vector<8x32xf32>
    %364 = vector.shape_cast %20 : vector<8x1xi1> to vector<8x1xi1>
    %365 = vector.broadcast %364 : vector<8x1xi1> to vector<8x32xi1>
    %366 = arith.select %365, %360, %308 : vector<8x32xi1>, vector<8x32xf32>
    %367 = vector.shape_cast %20 : vector<8x1xi1> to vector<8x1xi1>
    %368 = vector.broadcast %367 : vector<8x1xi1> to vector<8x32xi1>
    %369 = arith.select %368, %352, %311 : vector<8x32xi1>, vector<8x32xf32>
    %370 = vector.shape_cast %14 : vector<8x1xi1> to vector<8x1xi1>
    %371 = vector.broadcast %370 : vector<8x1xi1> to vector<8x32xi1>
    %372 = arith.select %371, %363, %314 : vector<8x32xi1>, vector<8x32xf32>
    %373 = vector.shape_cast %14 : vector<8x1xi1> to vector<8x1xi1>
    %374 = vector.broadcast %373 : vector<8x1xi1> to vector<8x32xi1>
    %375 = arith.select %374, %357, %317 : vector<8x32xi1>, vector<8x32xf32>
    %cst_52 = arith.constant 0.000000e+00 : f32
    %376 = vector.shape_cast %20 : vector<8x1xi1> to vector<8x1xi1>
    %377 = vector.broadcast %376 : vector<8x1xi1> to vector<8x32xi1>
    %378 = vector.broadcast %cst_52 : f32 to vector<8x32xf32>
    %379 = arith.select %377, %360, %378 : vector<8x32xi1>, vector<8x32xf32>
    %cst_53 = arith.constant 0.000000e+00 : f32
    %380 = vector.shape_cast %14 : vector<8x1xi1> to vector<8x1xi1>
    %381 = vector.broadcast %380 : vector<8x1xi1> to vector<8x32xi1>
    %382 = vector.broadcast %cst_53 : f32 to vector<8x32xf32>
    %383 = arith.select %381, %363, %382 : vector<8x32xi1>, vector<8x32xf32>
    %384 = vector.extract_strided_slice %29 {offsets = [48, 0], sizes = [8, 128], strides = [1, 1]} : vector<64x256xf32> to vector<8x128xf32>
    %385 = vector.extract_strided_slice %29 {offsets = [8, 128], sizes = [8, 128], strides = [1, 1]} : vector<64x256xf32> to vector<8x128xf32>
    %cst_54 = arith.constant dense<0.000000e+00> : vector<8x128xf32>
    %386 = tpu.matmul %366, %30, %cst_54 {dimension_numbers = #tpu.dot_dimension_numbers<[1], [0], [0], [1], [0, 0, 1, 1], [], []>} : vector<8x32xf32>, vector<32x128xf32>, vector<8x128xf32> -> vector<8x128xf32>
    %387 = arith.addf %384, %386 : vector<8x128xf32>
    %cst_55 = arith.constant dense<0.000000e+00> : vector<8x128xf32>
    %388 = tpu.matmul %372, %31, %cst_55 {dimension_numbers = #tpu.dot_dimension_numbers<[1], [0], [0], [1], [0, 0, 1, 1], [], []>} : vector<8x32xf32>, vector<32x128xf32>, vector<8x128xf32> -> vector<8x128xf32>
    %389 = arith.addf %385, %388 : vector<8x128xf32>
    %390 = vector.extract_strided_slice %387 {offsets = [0, 0], sizes = [8, 96], strides = [1, 1]} : vector<8x128xf32> to vector<8x96xf32>
    %391 = arith.negf %390 : vector<8x96xf32>
    %392 = math.exp %391 : vector<8x96xf32>
    %cst_56 = arith.constant 1.000000e+00 : f32
    %393 = vector.broadcast %cst_56 : f32 to vector<8x96xf32>
    %394 = arith.addf %393, %392 : vector<8x96xf32>
    %395 = arith.divf %393, %394 : vector<8x96xf32>
    %396 = vector.extract_strided_slice %387 {offsets = [0, 96], sizes = [8, 32], strides = [1, 1]} : vector<8x128xf32> to vector<8x32xf32>
    %397 = math.tanh %396 : vector<8x32xf32>
    %398 = vector.extract_strided_slice %389 {offsets = [0, 0], sizes = [8, 96], strides = [1, 1]} : vector<8x128xf32> to vector<8x96xf32>
    %399 = arith.negf %398 : vector<8x96xf32>
    %400 = math.exp %399 : vector<8x96xf32>
    %cst_57 = arith.constant 1.000000e+00 : f32
    %401 = vector.broadcast %cst_57 : f32 to vector<8x96xf32>
    %402 = arith.addf %401, %400 : vector<8x96xf32>
    %403 = arith.divf %401, %402 : vector<8x96xf32>
    %404 = vector.extract_strided_slice %389 {offsets = [0, 96], sizes = [8, 32], strides = [1, 1]} : vector<8x128xf32> to vector<8x32xf32>
    %405 = math.tanh %404 : vector<8x32xf32>
    %406 = vector.extract_strided_slice %395 {offsets = [0, 32], sizes = [8, 32], strides = [1, 1]} : vector<8x96xf32> to vector<8x32xf32>
    %407 = arith.mulf %406, %369 : vector<8x32xf32>
    %408 = vector.extract_strided_slice %395 {offsets = [0, 0], sizes = [8, 32], strides = [1, 1]} : vector<8x96xf32> to vector<8x32xf32>
    %409 = arith.mulf %408, %397 : vector<8x32xf32>
    %410 = arith.addf %407, %409 : vector<8x32xf32>
    %411 = vector.extract_strided_slice %403 {offsets = [0, 32], sizes = [8, 32], strides = [1, 1]} : vector<8x96xf32> to vector<8x32xf32>
    %412 = arith.mulf %411, %375 : vector<8x32xf32>
    %413 = vector.extract_strided_slice %403 {offsets = [0, 0], sizes = [8, 32], strides = [1, 1]} : vector<8x96xf32> to vector<8x32xf32>
    %414 = arith.mulf %413, %405 : vector<8x32xf32>
    %415 = arith.addf %412, %414 : vector<8x32xf32>
    %416 = vector.extract_strided_slice %395 {offsets = [0, 64], sizes = [8, 32], strides = [1, 1]} : vector<8x96xf32> to vector<8x32xf32>
    %417 = math.tanh %410 : vector<8x32xf32>
    %418 = arith.mulf %416, %417 : vector<8x32xf32>
    %419 = vector.extract_strided_slice %403 {offsets = [0, 64], sizes = [8, 32], strides = [1, 1]} : vector<8x96xf32> to vector<8x32xf32>
    %420 = math.tanh %415 : vector<8x32xf32>
    %421 = arith.mulf %419, %420 : vector<8x32xf32>
    %422 = vector.shape_cast %22 : vector<8x1xi1> to vector<8x1xi1>
    %423 = vector.broadcast %422 : vector<8x1xi1> to vector<8x32xi1>
    %424 = arith.select %423, %418, %366 : vector<8x32xi1>, vector<8x32xf32>
    %425 = vector.shape_cast %22 : vector<8x1xi1> to vector<8x1xi1>
    %426 = vector.broadcast %425 : vector<8x1xi1> to vector<8x32xi1>
    %427 = arith.select %426, %410, %369 : vector<8x32xi1>, vector<8x32xf32>
    %428 = vector.shape_cast %12 : vector<8x1xi1> to vector<8x1xi1>
    %429 = vector.broadcast %428 : vector<8x1xi1> to vector<8x32xi1>
    %430 = arith.select %429, %421, %372 : vector<8x32xi1>, vector<8x32xf32>
    %431 = vector.shape_cast %12 : vector<8x1xi1> to vector<8x1xi1>
    %432 = vector.broadcast %431 : vector<8x1xi1> to vector<8x32xi1>
    %433 = arith.select %432, %415, %375 : vector<8x32xi1>, vector<8x32xf32>
    %cst_58 = arith.constant 0.000000e+00 : f32
    %434 = vector.shape_cast %22 : vector<8x1xi1> to vector<8x1xi1>
    %435 = vector.broadcast %434 : vector<8x1xi1> to vector<8x32xi1>
    %436 = vector.broadcast %cst_58 : f32 to vector<8x32xf32>
    %437 = arith.select %435, %418, %436 : vector<8x32xi1>, vector<8x32xf32>
    %cst_59 = arith.constant 0.000000e+00 : f32
    %438 = vector.shape_cast %12 : vector<8x1xi1> to vector<8x1xi1>
    %439 = vector.broadcast %438 : vector<8x1xi1> to vector<8x32xi1>
    %440 = vector.broadcast %cst_59 : f32 to vector<8x32xf32>
    %441 = arith.select %439, %421, %440 : vector<8x32xi1>, vector<8x32xf32>
    %442 = vector.extract_strided_slice %29 {offsets = [56, 0], sizes = [8, 128], strides = [1, 1]} : vector<64x256xf32> to vector<8x128xf32>
    %443 = vector.extract_strided_slice %29 {offsets = [0, 128], sizes = [8, 128], strides = [1, 1]} : vector<64x256xf32> to vector<8x128xf32>
    %cst_60 = arith.constant dense<0.000000e+00> : vector<8x128xf32>
    %444 = tpu.matmul %424, %30, %cst_60 {dimension_numbers = #tpu.dot_dimension_numbers<[1], [0], [0], [1], [0, 0, 1, 1], [], []>} : vector<8x32xf32>, vector<32x128xf32>, vector<8x128xf32> -> vector<8x128xf32>
    %445 = arith.addf %442, %444 : vector<8x128xf32>
    %cst_61 = arith.constant dense<0.000000e+00> : vector<8x128xf32>
    %446 = tpu.matmul %430, %31, %cst_61 {dimension_numbers = #tpu.dot_dimension_numbers<[1], [0], [0], [1], [0, 0, 1, 1], [], []>} : vector<8x32xf32>, vector<32x128xf32>, vector<8x128xf32> -> vector<8x128xf32>
    %447 = arith.addf %443, %446 : vector<8x128xf32>
    %448 = vector.extract_strided_slice %445 {offsets = [0, 0], sizes = [8, 96], strides = [1, 1]} : vector<8x128xf32> to vector<8x96xf32>
    %449 = arith.negf %448 : vector<8x96xf32>
    %450 = math.exp %449 : vector<8x96xf32>
    %cst_62 = arith.constant 1.000000e+00 : f32
    %451 = vector.broadcast %cst_62 : f32 to vector<8x96xf32>
    %452 = arith.addf %451, %450 : vector<8x96xf32>
    %453 = arith.divf %451, %452 : vector<8x96xf32>
    %454 = vector.extract_strided_slice %445 {offsets = [0, 96], sizes = [8, 32], strides = [1, 1]} : vector<8x128xf32> to vector<8x32xf32>
    %455 = math.tanh %454 : vector<8x32xf32>
    %456 = vector.extract_strided_slice %447 {offsets = [0, 0], sizes = [8, 96], strides = [1, 1]} : vector<8x128xf32> to vector<8x96xf32>
    %457 = arith.negf %456 : vector<8x96xf32>
    %458 = math.exp %457 : vector<8x96xf32>
    %cst_63 = arith.constant 1.000000e+00 : f32
    %459 = vector.broadcast %cst_63 : f32 to vector<8x96xf32>
    %460 = arith.addf %459, %458 : vector<8x96xf32>
    %461 = arith.divf %459, %460 : vector<8x96xf32>
    %462 = vector.extract_strided_slice %447 {offsets = [0, 96], sizes = [8, 32], strides = [1, 1]} : vector<8x128xf32> to vector<8x32xf32>
    %463 = math.tanh %462 : vector<8x32xf32>
    %464 = vector.extract_strided_slice %453 {offsets = [0, 32], sizes = [8, 32], strides = [1, 1]} : vector<8x96xf32> to vector<8x32xf32>
    %465 = arith.mulf %464, %427 : vector<8x32xf32>
    %466 = vector.extract_strided_slice %453 {offsets = [0, 0], sizes = [8, 32], strides = [1, 1]} : vector<8x96xf32> to vector<8x32xf32>
    %467 = arith.mulf %466, %455 : vector<8x32xf32>
    %468 = arith.addf %465, %467 : vector<8x32xf32>
    %469 = vector.extract_strided_slice %461 {offsets = [0, 32], sizes = [8, 32], strides = [1, 1]} : vector<8x96xf32> to vector<8x32xf32>
    %470 = arith.mulf %469, %433 : vector<8x32xf32>
    %471 = vector.extract_strided_slice %461 {offsets = [0, 0], sizes = [8, 32], strides = [1, 1]} : vector<8x96xf32> to vector<8x32xf32>
    %472 = arith.mulf %471, %463 : vector<8x32xf32>
    %473 = arith.addf %470, %472 : vector<8x32xf32>
    %474 = vector.extract_strided_slice %453 {offsets = [0, 64], sizes = [8, 32], strides = [1, 1]} : vector<8x96xf32> to vector<8x32xf32>
    %475 = math.tanh %468 : vector<8x32xf32>
    %476 = arith.mulf %474, %475 : vector<8x32xf32>
    %477 = vector.extract_strided_slice %461 {offsets = [0, 64], sizes = [8, 32], strides = [1, 1]} : vector<8x96xf32> to vector<8x32xf32>
    %478 = math.tanh %473 : vector<8x32xf32>
    %479 = arith.mulf %477, %478 : vector<8x32xf32>
    %cst_64 = arith.constant 0.000000e+00 : f32
    %480 = vector.shape_cast %24 : vector<8x1xi1> to vector<8x1xi1>
    %481 = vector.broadcast %480 : vector<8x1xi1> to vector<8x32xi1>
    %482 = vector.broadcast %cst_64 : f32 to vector<8x32xf32>
    %483 = arith.select %481, %476, %482 : vector<8x32xi1>, vector<8x32xf32>
    %cst_65 = arith.constant 0.000000e+00 : f32
    %484 = vector.shape_cast %10 : vector<8x1xi1> to vector<8x1xi1>
    %485 = vector.broadcast %484 : vector<8x1xi1> to vector<8x32xi1>
    %486 = vector.broadcast %cst_65 : f32 to vector<8x32xf32>
    %487 = arith.select %485, %479, %486 : vector<8x32xi1>, vector<8x32xf32>
    %488 = tpu.concatenate %89, %487 in 1 : vector<8x32xf32>, vector<8x32xf32> -> vector<8x64xf32>
    %489 = tpu.concatenate %147, %441 in 1 : vector<8x32xf32>, vector<8x32xf32> -> vector<8x64xf32>
    %490 = tpu.concatenate %205, %383 in 1 : vector<8x32xf32>, vector<8x32xf32> -> vector<8x64xf32>
    %491 = tpu.concatenate %263, %325 in 1 : vector<8x32xf32>, vector<8x32xf32> -> vector<8x64xf32>
    %492 = tpu.concatenate %321, %267 in 1 : vector<8x32xf32>, vector<8x32xf32> -> vector<8x64xf32>
    %493 = tpu.concatenate %379, %209 in 1 : vector<8x32xf32>, vector<8x32xf32> -> vector<8x64xf32>
    %494 = tpu.concatenate %437, %151 in 1 : vector<8x32xf32>, vector<8x32xf32> -> vector<8x64xf32>
    %495 = tpu.concatenate %483, %93 in 1 : vector<8x32xf32>, vector<8x32xf32> -> vector<8x64xf32>
    %496 = tpu.concatenate %488, %489, %490, %491, %492, %493, %494, %495 in 0 : vector<8x64xf32>, vector<8x64xf32>, vector<8x64xf32>, vector<8x64xf32>, vector<8x64xf32>, vector<8x64xf32>, vector<8x64xf32>, vector<8x64xf32> -> vector<64x64xf32>
    %c0_66 = arith.constant 0 : index
    %c0_67 = arith.constant 0 : index
    %497 = vector.load %arg7[%c0_66, %c0_67] : memref<64x256xf32, #tpu.memory_space<vmem>>, vector<64x256xf32>
    %cst_68 = arith.constant dense<0.000000e+00> : vector<64x256xf32>
    %498 = tpu.matmul %496, %497, %cst_68 {dimension_numbers = #tpu.dot_dimension_numbers<[1], [0], [0], [1], [0, 0, 1, 1], [], []>} : vector<64x64xf32>, vector<64x256xf32>, vector<64x256xf32> -> vector<64x256xf32>
    %c0_69 = arith.constant 0 : index
    %c0_70 = arith.constant 0 : index
    %499 = vector.load %arg10[%c0_69, %c0_70] : memref<1x256xf32, #tpu.memory_space<vmem>>, vector<1x256xf32>
    %500 = vector.broadcast %499 : vector<1x256xf32> to vector<64x256xf32>
    %501 = arith.addf %498, %500 : vector<64x256xf32>
    %c0_71 = arith.constant 0 : index
    %c0_72 = arith.constant 0 : index
    %502 = vector.load %arg8[%c0_71, %c0_72] : memref<32x128xf32, #tpu.memory_space<vmem>>, vector<32x128xf32>
    %c0_73 = arith.constant 0 : index
    %c0_74 = arith.constant 0 : index
    %503 = vector.load %arg9[%c0_73, %c0_74] : memref<32x128xf32, #tpu.memory_space<vmem>>, vector<32x128xf32>
    %cst_75 = arith.constant 0.000000e+00 : f32
    %504 = vector.broadcast %cst_75 : f32 to vector<8x32xf32>
    %cst_76 = arith.constant 0.000000e+00 : f32
    %505 = vector.broadcast %cst_76 : f32 to vector<8x32xf32>
    %cst_77 = arith.constant 0.000000e+00 : f32
    %506 = vector.broadcast %cst_77 : f32 to vector<8x32xf32>
    %cst_78 = arith.constant 0.000000e+00 : f32
    %507 = vector.broadcast %cst_78 : f32 to vector<8x32xf32>
    %508 = vector.extract_strided_slice %501 {offsets = [0, 0], sizes = [8, 128], strides = [1, 1]} : vector<64x256xf32> to vector<8x128xf32>
    %509 = vector.extract_strided_slice %501 {offsets = [56, 128], sizes = [8, 128], strides = [1, 1]} : vector<64x256xf32> to vector<8x128xf32>
    %cst_79 = arith.constant dense<0.000000e+00> : vector<8x128xf32>
    %510 = tpu.matmul %504, %502, %cst_79 {dimension_numbers = #tpu.dot_dimension_numbers<[1], [0], [0], [1], [0, 0, 1, 1], [], []>} : vector<8x32xf32>, vector<32x128xf32>, vector<8x128xf32> -> vector<8x128xf32>
    %511 = arith.addf %508, %510 : vector<8x128xf32>
    %cst_80 = arith.constant dense<0.000000e+00> : vector<8x128xf32>
    %512 = tpu.matmul %506, %503, %cst_80 {dimension_numbers = #tpu.dot_dimension_numbers<[1], [0], [0], [1], [0, 0, 1, 1], [], []>} : vector<8x32xf32>, vector<32x128xf32>, vector<8x128xf32> -> vector<8x128xf32>
    %513 = arith.addf %509, %512 : vector<8x128xf32>
    %514 = vector.extract_strided_slice %511 {offsets = [0, 0], sizes = [8, 96], strides = [1, 1]} : vector<8x128xf32> to vector<8x96xf32>
    %515 = arith.negf %514 : vector<8x96xf32>
    %516 = math.exp %515 : vector<8x96xf32>
    %cst_81 = arith.constant 1.000000e+00 : f32
    %517 = vector.broadcast %cst_81 : f32 to vector<8x96xf32>
    %518 = arith.addf %517, %516 : vector<8x96xf32>
    %519 = arith.divf %517, %518 : vector<8x96xf32>
    %520 = vector.extract_strided_slice %511 {offsets = [0, 96], sizes = [8, 32], strides = [1, 1]} : vector<8x128xf32> to vector<8x32xf32>
    %521 = math.tanh %520 : vector<8x32xf32>
    %522 = vector.extract_strided_slice %513 {offsets = [0, 0], sizes = [8, 96], strides = [1, 1]} : vector<8x128xf32> to vector<8x96xf32>
    %523 = arith.negf %522 : vector<8x96xf32>
    %524 = math.exp %523 : vector<8x96xf32>
    %cst_82 = arith.constant 1.000000e+00 : f32
    %525 = vector.broadcast %cst_82 : f32 to vector<8x96xf32>
    %526 = arith.addf %525, %524 : vector<8x96xf32>
    %527 = arith.divf %525, %526 : vector<8x96xf32>
    %528 = vector.extract_strided_slice %513 {offsets = [0, 96], sizes = [8, 32], strides = [1, 1]} : vector<8x128xf32> to vector<8x32xf32>
    %529 = math.tanh %528 : vector<8x32xf32>
    %530 = vector.extract_strided_slice %519 {offsets = [0, 32], sizes = [8, 32], strides = [1, 1]} : vector<8x96xf32> to vector<8x32xf32>
    %531 = arith.mulf %530, %505 : vector<8x32xf32>
    %532 = vector.extract_strided_slice %519 {offsets = [0, 0], sizes = [8, 32], strides = [1, 1]} : vector<8x96xf32> to vector<8x32xf32>
    %533 = arith.mulf %532, %521 : vector<8x32xf32>
    %534 = arith.addf %531, %533 : vector<8x32xf32>
    %535 = vector.extract_strided_slice %527 {offsets = [0, 32], sizes = [8, 32], strides = [1, 1]} : vector<8x96xf32> to vector<8x32xf32>
    %536 = arith.mulf %535, %507 : vector<8x32xf32>
    %537 = vector.extract_strided_slice %527 {offsets = [0, 0], sizes = [8, 32], strides = [1, 1]} : vector<8x96xf32> to vector<8x32xf32>
    %538 = arith.mulf %537, %529 : vector<8x32xf32>
    %539 = arith.addf %536, %538 : vector<8x32xf32>
    %540 = vector.extract_strided_slice %519 {offsets = [0, 64], sizes = [8, 32], strides = [1, 1]} : vector<8x96xf32> to vector<8x32xf32>
    %541 = math.tanh %534 : vector<8x32xf32>
    %542 = arith.mulf %540, %541 : vector<8x32xf32>
    %543 = vector.extract_strided_slice %527 {offsets = [0, 64], sizes = [8, 32], strides = [1, 1]} : vector<8x96xf32> to vector<8x32xf32>
    %544 = math.tanh %539 : vector<8x32xf32>
    %545 = arith.mulf %543, %544 : vector<8x32xf32>
    %546 = vector.shape_cast %10 : vector<8x1xi1> to vector<8x1xi1>
    %547 = vector.broadcast %546 : vector<8x1xi1> to vector<8x32xi1>
    %548 = arith.select %547, %542, %504 : vector<8x32xi1>, vector<8x32xf32>
    %549 = vector.shape_cast %10 : vector<8x1xi1> to vector<8x1xi1>
    %550 = vector.broadcast %549 : vector<8x1xi1> to vector<8x32xi1>
    %551 = arith.select %550, %534, %505 : vector<8x32xi1>, vector<8x32xf32>
    %552 = vector.shape_cast %24 : vector<8x1xi1> to vector<8x1xi1>
    %553 = vector.broadcast %552 : vector<8x1xi1> to vector<8x32xi1>
    %554 = arith.select %553, %545, %506 : vector<8x32xi1>, vector<8x32xf32>
    %555 = vector.shape_cast %24 : vector<8x1xi1> to vector<8x1xi1>
    %556 = vector.broadcast %555 : vector<8x1xi1> to vector<8x32xi1>
    %557 = arith.select %556, %539, %507 : vector<8x32xi1>, vector<8x32xf32>
    %cst_83 = arith.constant 0.000000e+00 : f32
    %558 = vector.shape_cast %10 : vector<8x1xi1> to vector<8x1xi1>
    %559 = vector.broadcast %558 : vector<8x1xi1> to vector<8x32xi1>
    %560 = vector.broadcast %cst_83 : f32 to vector<8x32xf32>
    %561 = arith.select %559, %542, %560 : vector<8x32xi1>, vector<8x32xf32>
    %cst_84 = arith.constant 0.000000e+00 : f32
    %562 = vector.shape_cast %24 : vector<8x1xi1> to vector<8x1xi1>
    %563 = vector.broadcast %562 : vector<8x1xi1> to vector<8x32xi1>
    %564 = vector.broadcast %cst_84 : f32 to vector<8x32xf32>
    %565 = arith.select %563, %545, %564 : vector<8x32xi1>, vector<8x32xf32>
    %566 = vector.extract_strided_slice %501 {offsets = [8, 0], sizes = [8, 128], strides = [1, 1]} : vector<64x256xf32> to vector<8x128xf32>
    %567 = vector.extract_strided_slice %501 {offsets = [48, 128], sizes = [8, 128], strides = [1, 1]} : vector<64x256xf32> to vector<8x128xf32>
    %cst_85 = arith.constant dense<0.000000e+00> : vector<8x128xf32>
    %568 = tpu.matmul %548, %502, %cst_85 {dimension_numbers = #tpu.dot_dimension_numbers<[1], [0], [0], [1], [0, 0, 1, 1], [], []>} : vector<8x32xf32>, vector<32x128xf32>, vector<8x128xf32> -> vector<8x128xf32>
    %569 = arith.addf %566, %568 : vector<8x128xf32>
    %cst_86 = arith.constant dense<0.000000e+00> : vector<8x128xf32>
    %570 = tpu.matmul %554, %503, %cst_86 {dimension_numbers = #tpu.dot_dimension_numbers<[1], [0], [0], [1], [0, 0, 1, 1], [], []>} : vector<8x32xf32>, vector<32x128xf32>, vector<8x128xf32> -> vector<8x128xf32>
    %571 = arith.addf %567, %570 : vector<8x128xf32>
    %572 = vector.extract_strided_slice %569 {offsets = [0, 0], sizes = [8, 96], strides = [1, 1]} : vector<8x128xf32> to vector<8x96xf32>
    %573 = arith.negf %572 : vector<8x96xf32>
    %574 = math.exp %573 : vector<8x96xf32>
    %cst_87 = arith.constant 1.000000e+00 : f32
    %575 = vector.broadcast %cst_87 : f32 to vector<8x96xf32>
    %576 = arith.addf %575, %574 : vector<8x96xf32>
    %577 = arith.divf %575, %576 : vector<8x96xf32>
    %578 = vector.extract_strided_slice %569 {offsets = [0, 96], sizes = [8, 32], strides = [1, 1]} : vector<8x128xf32> to vector<8x32xf32>
    %579 = math.tanh %578 : vector<8x32xf32>
    %580 = vector.extract_strided_slice %571 {offsets = [0, 0], sizes = [8, 96], strides = [1, 1]} : vector<8x128xf32> to vector<8x96xf32>
    %581 = arith.negf %580 : vector<8x96xf32>
    %582 = math.exp %581 : vector<8x96xf32>
    %cst_88 = arith.constant 1.000000e+00 : f32
    %583 = vector.broadcast %cst_88 : f32 to vector<8x96xf32>
    %584 = arith.addf %583, %582 : vector<8x96xf32>
    %585 = arith.divf %583, %584 : vector<8x96xf32>
    %586 = vector.extract_strided_slice %571 {offsets = [0, 96], sizes = [8, 32], strides = [1, 1]} : vector<8x128xf32> to vector<8x32xf32>
    %587 = math.tanh %586 : vector<8x32xf32>
    %588 = vector.extract_strided_slice %577 {offsets = [0, 32], sizes = [8, 32], strides = [1, 1]} : vector<8x96xf32> to vector<8x32xf32>
    %589 = arith.mulf %588, %551 : vector<8x32xf32>
    %590 = vector.extract_strided_slice %577 {offsets = [0, 0], sizes = [8, 32], strides = [1, 1]} : vector<8x96xf32> to vector<8x32xf32>
    %591 = arith.mulf %590, %579 : vector<8x32xf32>
    %592 = arith.addf %589, %591 : vector<8x32xf32>
    %593 = vector.extract_strided_slice %585 {offsets = [0, 32], sizes = [8, 32], strides = [1, 1]} : vector<8x96xf32> to vector<8x32xf32>
    %594 = arith.mulf %593, %557 : vector<8x32xf32>
    %595 = vector.extract_strided_slice %585 {offsets = [0, 0], sizes = [8, 32], strides = [1, 1]} : vector<8x96xf32> to vector<8x32xf32>
    %596 = arith.mulf %595, %587 : vector<8x32xf32>
    %597 = arith.addf %594, %596 : vector<8x32xf32>
    %598 = vector.extract_strided_slice %577 {offsets = [0, 64], sizes = [8, 32], strides = [1, 1]} : vector<8x96xf32> to vector<8x32xf32>
    %599 = math.tanh %592 : vector<8x32xf32>
    %600 = arith.mulf %598, %599 : vector<8x32xf32>
    %601 = vector.extract_strided_slice %585 {offsets = [0, 64], sizes = [8, 32], strides = [1, 1]} : vector<8x96xf32> to vector<8x32xf32>
    %602 = math.tanh %597 : vector<8x32xf32>
    %603 = arith.mulf %601, %602 : vector<8x32xf32>
    %604 = vector.shape_cast %12 : vector<8x1xi1> to vector<8x1xi1>
    %605 = vector.broadcast %604 : vector<8x1xi1> to vector<8x32xi1>
    %606 = arith.select %605, %600, %548 : vector<8x32xi1>, vector<8x32xf32>
    %607 = vector.shape_cast %12 : vector<8x1xi1> to vector<8x1xi1>
    %608 = vector.broadcast %607 : vector<8x1xi1> to vector<8x32xi1>
    %609 = arith.select %608, %592, %551 : vector<8x32xi1>, vector<8x32xf32>
    %610 = vector.shape_cast %22 : vector<8x1xi1> to vector<8x1xi1>
    %611 = vector.broadcast %610 : vector<8x1xi1> to vector<8x32xi1>
    %612 = arith.select %611, %603, %554 : vector<8x32xi1>, vector<8x32xf32>
    %613 = vector.shape_cast %22 : vector<8x1xi1> to vector<8x1xi1>
    %614 = vector.broadcast %613 : vector<8x1xi1> to vector<8x32xi1>
    %615 = arith.select %614, %597, %557 : vector<8x32xi1>, vector<8x32xf32>
    %cst_89 = arith.constant 0.000000e+00 : f32
    %616 = vector.shape_cast %12 : vector<8x1xi1> to vector<8x1xi1>
    %617 = vector.broadcast %616 : vector<8x1xi1> to vector<8x32xi1>
    %618 = vector.broadcast %cst_89 : f32 to vector<8x32xf32>
    %619 = arith.select %617, %600, %618 : vector<8x32xi1>, vector<8x32xf32>
    %cst_90 = arith.constant 0.000000e+00 : f32
    %620 = vector.shape_cast %22 : vector<8x1xi1> to vector<8x1xi1>
    %621 = vector.broadcast %620 : vector<8x1xi1> to vector<8x32xi1>
    %622 = vector.broadcast %cst_90 : f32 to vector<8x32xf32>
    %623 = arith.select %621, %603, %622 : vector<8x32xi1>, vector<8x32xf32>
    %624 = vector.extract_strided_slice %501 {offsets = [16, 0], sizes = [8, 128], strides = [1, 1]} : vector<64x256xf32> to vector<8x128xf32>
    %625 = vector.extract_strided_slice %501 {offsets = [40, 128], sizes = [8, 128], strides = [1, 1]} : vector<64x256xf32> to vector<8x128xf32>
    %cst_91 = arith.constant dense<0.000000e+00> : vector<8x128xf32>
    %626 = tpu.matmul %606, %502, %cst_91 {dimension_numbers = #tpu.dot_dimension_numbers<[1], [0], [0], [1], [0, 0, 1, 1], [], []>} : vector<8x32xf32>, vector<32x128xf32>, vector<8x128xf32> -> vector<8x128xf32>
    %627 = arith.addf %624, %626 : vector<8x128xf32>
    %cst_92 = arith.constant dense<0.000000e+00> : vector<8x128xf32>
    %628 = tpu.matmul %612, %503, %cst_92 {dimension_numbers = #tpu.dot_dimension_numbers<[1], [0], [0], [1], [0, 0, 1, 1], [], []>} : vector<8x32xf32>, vector<32x128xf32>, vector<8x128xf32> -> vector<8x128xf32>
    %629 = arith.addf %625, %628 : vector<8x128xf32>
    %630 = vector.extract_strided_slice %627 {offsets = [0, 0], sizes = [8, 96], strides = [1, 1]} : vector<8x128xf32> to vector<8x96xf32>
    %631 = arith.negf %630 : vector<8x96xf32>
    %632 = math.exp %631 : vector<8x96xf32>
    %cst_93 = arith.constant 1.000000e+00 : f32
    %633 = vector.broadcast %cst_93 : f32 to vector<8x96xf32>
    %634 = arith.addf %633, %632 : vector<8x96xf32>
    %635 = arith.divf %633, %634 : vector<8x96xf32>
    %636 = vector.extract_strided_slice %627 {offsets = [0, 96], sizes = [8, 32], strides = [1, 1]} : vector<8x128xf32> to vector<8x32xf32>
    %637 = math.tanh %636 : vector<8x32xf32>
    %638 = vector.extract_strided_slice %629 {offsets = [0, 0], sizes = [8, 96], strides = [1, 1]} : vector<8x128xf32> to vector<8x96xf32>
    %639 = arith.negf %638 : vector<8x96xf32>
    %640 = math.exp %639 : vector<8x96xf32>
    %cst_94 = arith.constant 1.000000e+00 : f32
    %641 = vector.broadcast %cst_94 : f32 to vector<8x96xf32>
    %642 = arith.addf %641, %640 : vector<8x96xf32>
    %643 = arith.divf %641, %642 : vector<8x96xf32>
    %644 = vector.extract_strided_slice %629 {offsets = [0, 96], sizes = [8, 32], strides = [1, 1]} : vector<8x128xf32> to vector<8x32xf32>
    %645 = math.tanh %644 : vector<8x32xf32>
    %646 = vector.extract_strided_slice %635 {offsets = [0, 32], sizes = [8, 32], strides = [1, 1]} : vector<8x96xf32> to vector<8x32xf32>
    %647 = arith.mulf %646, %609 : vector<8x32xf32>
    %648 = vector.extract_strided_slice %635 {offsets = [0, 0], sizes = [8, 32], strides = [1, 1]} : vector<8x96xf32> to vector<8x32xf32>
    %649 = arith.mulf %648, %637 : vector<8x32xf32>
    %650 = arith.addf %647, %649 : vector<8x32xf32>
    %651 = vector.extract_strided_slice %643 {offsets = [0, 32], sizes = [8, 32], strides = [1, 1]} : vector<8x96xf32> to vector<8x32xf32>
    %652 = arith.mulf %651, %615 : vector<8x32xf32>
    %653 = vector.extract_strided_slice %643 {offsets = [0, 0], sizes = [8, 32], strides = [1, 1]} : vector<8x96xf32> to vector<8x32xf32>
    %654 = arith.mulf %653, %645 : vector<8x32xf32>
    %655 = arith.addf %652, %654 : vector<8x32xf32>
    %656 = vector.extract_strided_slice %635 {offsets = [0, 64], sizes = [8, 32], strides = [1, 1]} : vector<8x96xf32> to vector<8x32xf32>
    %657 = math.tanh %650 : vector<8x32xf32>
    %658 = arith.mulf %656, %657 : vector<8x32xf32>
    %659 = vector.extract_strided_slice %643 {offsets = [0, 64], sizes = [8, 32], strides = [1, 1]} : vector<8x96xf32> to vector<8x32xf32>
    %660 = math.tanh %655 : vector<8x32xf32>
    %661 = arith.mulf %659, %660 : vector<8x32xf32>
    %662 = vector.shape_cast %14 : vector<8x1xi1> to vector<8x1xi1>
    %663 = vector.broadcast %662 : vector<8x1xi1> to vector<8x32xi1>
    %664 = arith.select %663, %658, %606 : vector<8x32xi1>, vector<8x32xf32>
    %665 = vector.shape_cast %14 : vector<8x1xi1> to vector<8x1xi1>
    %666 = vector.broadcast %665 : vector<8x1xi1> to vector<8x32xi1>
    %667 = arith.select %666, %650, %609 : vector<8x32xi1>, vector<8x32xf32>
    %668 = vector.shape_cast %20 : vector<8x1xi1> to vector<8x1xi1>
    %669 = vector.broadcast %668 : vector<8x1xi1> to vector<8x32xi1>
    %670 = arith.select %669, %661, %612 : vector<8x32xi1>, vector<8x32xf32>
    %671 = vector.shape_cast %20 : vector<8x1xi1> to vector<8x1xi1>
    %672 = vector.broadcast %671 : vector<8x1xi1> to vector<8x32xi1>
    %673 = arith.select %672, %655, %615 : vector<8x32xi1>, vector<8x32xf32>
    %cst_95 = arith.constant 0.000000e+00 : f32
    %674 = vector.shape_cast %14 : vector<8x1xi1> to vector<8x1xi1>
    %675 = vector.broadcast %674 : vector<8x1xi1> to vector<8x32xi1>
    %676 = vector.broadcast %cst_95 : f32 to vector<8x32xf32>
    %677 = arith.select %675, %658, %676 : vector<8x32xi1>, vector<8x32xf32>
    %cst_96 = arith.constant 0.000000e+00 : f32
    %678 = vector.shape_cast %20 : vector<8x1xi1> to vector<8x1xi1>
    %679 = vector.broadcast %678 : vector<8x1xi1> to vector<8x32xi1>
    %680 = vector.broadcast %cst_96 : f32 to vector<8x32xf32>
    %681 = arith.select %679, %661, %680 : vector<8x32xi1>, vector<8x32xf32>
    %682 = vector.extract_strided_slice %501 {offsets = [24, 0], sizes = [8, 128], strides = [1, 1]} : vector<64x256xf32> to vector<8x128xf32>
    %683 = vector.extract_strided_slice %501 {offsets = [32, 128], sizes = [8, 128], strides = [1, 1]} : vector<64x256xf32> to vector<8x128xf32>
    %cst_97 = arith.constant dense<0.000000e+00> : vector<8x128xf32>
    %684 = tpu.matmul %664, %502, %cst_97 {dimension_numbers = #tpu.dot_dimension_numbers<[1], [0], [0], [1], [0, 0, 1, 1], [], []>} : vector<8x32xf32>, vector<32x128xf32>, vector<8x128xf32> -> vector<8x128xf32>
    %685 = arith.addf %682, %684 : vector<8x128xf32>
    %cst_98 = arith.constant dense<0.000000e+00> : vector<8x128xf32>
    %686 = tpu.matmul %670, %503, %cst_98 {dimension_numbers = #tpu.dot_dimension_numbers<[1], [0], [0], [1], [0, 0, 1, 1], [], []>} : vector<8x32xf32>, vector<32x128xf32>, vector<8x128xf32> -> vector<8x128xf32>
    %687 = arith.addf %683, %686 : vector<8x128xf32>
    %688 = vector.extract_strided_slice %685 {offsets = [0, 0], sizes = [8, 96], strides = [1, 1]} : vector<8x128xf32> to vector<8x96xf32>
    %689 = arith.negf %688 : vector<8x96xf32>
    %690 = math.exp %689 : vector<8x96xf32>
    %cst_99 = arith.constant 1.000000e+00 : f32
    %691 = vector.broadcast %cst_99 : f32 to vector<8x96xf32>
    %692 = arith.addf %691, %690 : vector<8x96xf32>
    %693 = arith.divf %691, %692 : vector<8x96xf32>
    %694 = vector.extract_strided_slice %685 {offsets = [0, 96], sizes = [8, 32], strides = [1, 1]} : vector<8x128xf32> to vector<8x32xf32>
    %695 = math.tanh %694 : vector<8x32xf32>
    %696 = vector.extract_strided_slice %687 {offsets = [0, 0], sizes = [8, 96], strides = [1, 1]} : vector<8x128xf32> to vector<8x96xf32>
    %697 = arith.negf %696 : vector<8x96xf32>
    %698 = math.exp %697 : vector<8x96xf32>
    %cst_100 = arith.constant 1.000000e+00 : f32
    %699 = vector.broadcast %cst_100 : f32 to vector<8x96xf32>
    %700 = arith.addf %699, %698 : vector<8x96xf32>
    %701 = arith.divf %699, %700 : vector<8x96xf32>
    %702 = vector.extract_strided_slice %687 {offsets = [0, 96], sizes = [8, 32], strides = [1, 1]} : vector<8x128xf32> to vector<8x32xf32>
    %703 = math.tanh %702 : vector<8x32xf32>
    %704 = vector.extract_strided_slice %693 {offsets = [0, 32], sizes = [8, 32], strides = [1, 1]} : vector<8x96xf32> to vector<8x32xf32>
    %705 = arith.mulf %704, %667 : vector<8x32xf32>
    %706 = vector.extract_strided_slice %693 {offsets = [0, 0], sizes = [8, 32], strides = [1, 1]} : vector<8x96xf32> to vector<8x32xf32>
    %707 = arith.mulf %706, %695 : vector<8x32xf32>
    %708 = arith.addf %705, %707 : vector<8x32xf32>
    %709 = vector.extract_strided_slice %701 {offsets = [0, 32], sizes = [8, 32], strides = [1, 1]} : vector<8x96xf32> to vector<8x32xf32>
    %710 = arith.mulf %709, %673 : vector<8x32xf32>
    %711 = vector.extract_strided_slice %701 {offsets = [0, 0], sizes = [8, 32], strides = [1, 1]} : vector<8x96xf32> to vector<8x32xf32>
    %712 = arith.mulf %711, %703 : vector<8x32xf32>
    %713 = arith.addf %710, %712 : vector<8x32xf32>
    %714 = vector.extract_strided_slice %693 {offsets = [0, 64], sizes = [8, 32], strides = [1, 1]} : vector<8x96xf32> to vector<8x32xf32>
    %715 = math.tanh %708 : vector<8x32xf32>
    %716 = arith.mulf %714, %715 : vector<8x32xf32>
    %717 = vector.extract_strided_slice %701 {offsets = [0, 64], sizes = [8, 32], strides = [1, 1]} : vector<8x96xf32> to vector<8x32xf32>
    %718 = math.tanh %713 : vector<8x32xf32>
    %719 = arith.mulf %717, %718 : vector<8x32xf32>
    %720 = vector.shape_cast %16 : vector<8x1xi1> to vector<8x1xi1>
    %721 = vector.broadcast %720 : vector<8x1xi1> to vector<8x32xi1>
    %722 = arith.select %721, %716, %664 : vector<8x32xi1>, vector<8x32xf32>
    %723 = vector.shape_cast %16 : vector<8x1xi1> to vector<8x1xi1>
    %724 = vector.broadcast %723 : vector<8x1xi1> to vector<8x32xi1>
    %725 = arith.select %724, %708, %667 : vector<8x32xi1>, vector<8x32xf32>
    %726 = vector.shape_cast %18 : vector<8x1xi1> to vector<8x1xi1>
    %727 = vector.broadcast %726 : vector<8x1xi1> to vector<8x32xi1>
    %728 = arith.select %727, %719, %670 : vector<8x32xi1>, vector<8x32xf32>
    %729 = vector.shape_cast %18 : vector<8x1xi1> to vector<8x1xi1>
    %730 = vector.broadcast %729 : vector<8x1xi1> to vector<8x32xi1>
    %731 = arith.select %730, %713, %673 : vector<8x32xi1>, vector<8x32xf32>
    %cst_101 = arith.constant 0.000000e+00 : f32
    %732 = vector.shape_cast %16 : vector<8x1xi1> to vector<8x1xi1>
    %733 = vector.broadcast %732 : vector<8x1xi1> to vector<8x32xi1>
    %734 = vector.broadcast %cst_101 : f32 to vector<8x32xf32>
    %735 = arith.select %733, %716, %734 : vector<8x32xi1>, vector<8x32xf32>
    %cst_102 = arith.constant 0.000000e+00 : f32
    %736 = vector.shape_cast %18 : vector<8x1xi1> to vector<8x1xi1>
    %737 = vector.broadcast %736 : vector<8x1xi1> to vector<8x32xi1>
    %738 = vector.broadcast %cst_102 : f32 to vector<8x32xf32>
    %739 = arith.select %737, %719, %738 : vector<8x32xi1>, vector<8x32xf32>
    %740 = vector.extract_strided_slice %501 {offsets = [32, 0], sizes = [8, 128], strides = [1, 1]} : vector<64x256xf32> to vector<8x128xf32>
    %741 = vector.extract_strided_slice %501 {offsets = [24, 128], sizes = [8, 128], strides = [1, 1]} : vector<64x256xf32> to vector<8x128xf32>
    %cst_103 = arith.constant dense<0.000000e+00> : vector<8x128xf32>
    %742 = tpu.matmul %722, %502, %cst_103 {dimension_numbers = #tpu.dot_dimension_numbers<[1], [0], [0], [1], [0, 0, 1, 1], [], []>} : vector<8x32xf32>, vector<32x128xf32>, vector<8x128xf32> -> vector<8x128xf32>
    %743 = arith.addf %740, %742 : vector<8x128xf32>
    %cst_104 = arith.constant dense<0.000000e+00> : vector<8x128xf32>
    %744 = tpu.matmul %728, %503, %cst_104 {dimension_numbers = #tpu.dot_dimension_numbers<[1], [0], [0], [1], [0, 0, 1, 1], [], []>} : vector<8x32xf32>, vector<32x128xf32>, vector<8x128xf32> -> vector<8x128xf32>
    %745 = arith.addf %741, %744 : vector<8x128xf32>
    %746 = vector.extract_strided_slice %743 {offsets = [0, 0], sizes = [8, 96], strides = [1, 1]} : vector<8x128xf32> to vector<8x96xf32>
    %747 = arith.negf %746 : vector<8x96xf32>
    %748 = math.exp %747 : vector<8x96xf32>
    %cst_105 = arith.constant 1.000000e+00 : f32
    %749 = vector.broadcast %cst_105 : f32 to vector<8x96xf32>
    %750 = arith.addf %749, %748 : vector<8x96xf32>
    %751 = arith.divf %749, %750 : vector<8x96xf32>
    %752 = vector.extract_strided_slice %743 {offsets = [0, 96], sizes = [8, 32], strides = [1, 1]} : vector<8x128xf32> to vector<8x32xf32>
    %753 = math.tanh %752 : vector<8x32xf32>
    %754 = vector.extract_strided_slice %745 {offsets = [0, 0], sizes = [8, 96], strides = [1, 1]} : vector<8x128xf32> to vector<8x96xf32>
    %755 = arith.negf %754 : vector<8x96xf32>
    %756 = math.exp %755 : vector<8x96xf32>
    %cst_106 = arith.constant 1.000000e+00 : f32
    %757 = vector.broadcast %cst_106 : f32 to vector<8x96xf32>
    %758 = arith.addf %757, %756 : vector<8x96xf32>
    %759 = arith.divf %757, %758 : vector<8x96xf32>
    %760 = vector.extract_strided_slice %745 {offsets = [0, 96], sizes = [8, 32], strides = [1, 1]} : vector<8x128xf32> to vector<8x32xf32>
    %761 = math.tanh %760 : vector<8x32xf32>
    %762 = vector.extract_strided_slice %751 {offsets = [0, 32], sizes = [8, 32], strides = [1, 1]} : vector<8x96xf32> to vector<8x32xf32>
    %763 = arith.mulf %762, %725 : vector<8x32xf32>
    %764 = vector.extract_strided_slice %751 {offsets = [0, 0], sizes = [8, 32], strides = [1, 1]} : vector<8x96xf32> to vector<8x32xf32>
    %765 = arith.mulf %764, %753 : vector<8x32xf32>
    %766 = arith.addf %763, %765 : vector<8x32xf32>
    %767 = vector.extract_strided_slice %759 {offsets = [0, 32], sizes = [8, 32], strides = [1, 1]} : vector<8x96xf32> to vector<8x32xf32>
    %768 = arith.mulf %767, %731 : vector<8x32xf32>
    %769 = vector.extract_strided_slice %759 {offsets = [0, 0], sizes = [8, 32], strides = [1, 1]} : vector<8x96xf32> to vector<8x32xf32>
    %770 = arith.mulf %769, %761 : vector<8x32xf32>
    %771 = arith.addf %768, %770 : vector<8x32xf32>
    %772 = vector.extract_strided_slice %751 {offsets = [0, 64], sizes = [8, 32], strides = [1, 1]} : vector<8x96xf32> to vector<8x32xf32>
    %773 = math.tanh %766 : vector<8x32xf32>
    %774 = arith.mulf %772, %773 : vector<8x32xf32>
    %775 = vector.extract_strided_slice %759 {offsets = [0, 64], sizes = [8, 32], strides = [1, 1]} : vector<8x96xf32> to vector<8x32xf32>
    %776 = math.tanh %771 : vector<8x32xf32>
    %777 = arith.mulf %775, %776 : vector<8x32xf32>
    %778 = vector.shape_cast %18 : vector<8x1xi1> to vector<8x1xi1>
    %779 = vector.broadcast %778 : vector<8x1xi1> to vector<8x32xi1>
    %780 = arith.select %779, %774, %722 : vector<8x32xi1>, vector<8x32xf32>
    %781 = vector.shape_cast %18 : vector<8x1xi1> to vector<8x1xi1>
    %782 = vector.broadcast %781 : vector<8x1xi1> to vector<8x32xi1>
    %783 = arith.select %782, %766, %725 : vector<8x32xi1>, vector<8x32xf32>
    %784 = vector.shape_cast %16 : vector<8x1xi1> to vector<8x1xi1>
    %785 = vector.broadcast %784 : vector<8x1xi1> to vector<8x32xi1>
    %786 = arith.select %785, %777, %728 : vector<8x32xi1>, vector<8x32xf32>
    %787 = vector.shape_cast %16 : vector<8x1xi1> to vector<8x1xi1>
    %788 = vector.broadcast %787 : vector<8x1xi1> to vector<8x32xi1>
    %789 = arith.select %788, %771, %731 : vector<8x32xi1>, vector<8x32xf32>
    %cst_107 = arith.constant 0.000000e+00 : f32
    %790 = vector.shape_cast %18 : vector<8x1xi1> to vector<8x1xi1>
    %791 = vector.broadcast %790 : vector<8x1xi1> to vector<8x32xi1>
    %792 = vector.broadcast %cst_107 : f32 to vector<8x32xf32>
    %793 = arith.select %791, %774, %792 : vector<8x32xi1>, vector<8x32xf32>
    %cst_108 = arith.constant 0.000000e+00 : f32
    %794 = vector.shape_cast %16 : vector<8x1xi1> to vector<8x1xi1>
    %795 = vector.broadcast %794 : vector<8x1xi1> to vector<8x32xi1>
    %796 = vector.broadcast %cst_108 : f32 to vector<8x32xf32>
    %797 = arith.select %795, %777, %796 : vector<8x32xi1>, vector<8x32xf32>
    %798 = vector.extract_strided_slice %501 {offsets = [40, 0], sizes = [8, 128], strides = [1, 1]} : vector<64x256xf32> to vector<8x128xf32>
    %799 = vector.extract_strided_slice %501 {offsets = [16, 128], sizes = [8, 128], strides = [1, 1]} : vector<64x256xf32> to vector<8x128xf32>
    %cst_109 = arith.constant dense<0.000000e+00> : vector<8x128xf32>
    %800 = tpu.matmul %780, %502, %cst_109 {dimension_numbers = #tpu.dot_dimension_numbers<[1], [0], [0], [1], [0, 0, 1, 1], [], []>} : vector<8x32xf32>, vector<32x128xf32>, vector<8x128xf32> -> vector<8x128xf32>
    %801 = arith.addf %798, %800 : vector<8x128xf32>
    %cst_110 = arith.constant dense<0.000000e+00> : vector<8x128xf32>
    %802 = tpu.matmul %786, %503, %cst_110 {dimension_numbers = #tpu.dot_dimension_numbers<[1], [0], [0], [1], [0, 0, 1, 1], [], []>} : vector<8x32xf32>, vector<32x128xf32>, vector<8x128xf32> -> vector<8x128xf32>
    %803 = arith.addf %799, %802 : vector<8x128xf32>
    %804 = vector.extract_strided_slice %801 {offsets = [0, 0], sizes = [8, 96], strides = [1, 1]} : vector<8x128xf32> to vector<8x96xf32>
    %805 = arith.negf %804 : vector<8x96xf32>
    %806 = math.exp %805 : vector<8x96xf32>
    %cst_111 = arith.constant 1.000000e+00 : f32
    %807 = vector.broadcast %cst_111 : f32 to vector<8x96xf32>
    %808 = arith.addf %807, %806 : vector<8x96xf32>
    %809 = arith.divf %807, %808 : vector<8x96xf32>
    %810 = vector.extract_strided_slice %801 {offsets = [0, 96], sizes = [8, 32], strides = [1, 1]} : vector<8x128xf32> to vector<8x32xf32>
    %811 = math.tanh %810 : vector<8x32xf32>
    %812 = vector.extract_strided_slice %803 {offsets = [0, 0], sizes = [8, 96], strides = [1, 1]} : vector<8x128xf32> to vector<8x96xf32>
    %813 = arith.negf %812 : vector<8x96xf32>
    %814 = math.exp %813 : vector<8x96xf32>
    %cst_112 = arith.constant 1.000000e+00 : f32
    %815 = vector.broadcast %cst_112 : f32 to vector<8x96xf32>
    %816 = arith.addf %815, %814 : vector<8x96xf32>
    %817 = arith.divf %815, %816 : vector<8x96xf32>
    %818 = vector.extract_strided_slice %803 {offsets = [0, 96], sizes = [8, 32], strides = [1, 1]} : vector<8x128xf32> to vector<8x32xf32>
    %819 = math.tanh %818 : vector<8x32xf32>
    %820 = vector.extract_strided_slice %809 {offsets = [0, 32], sizes = [8, 32], strides = [1, 1]} : vector<8x96xf32> to vector<8x32xf32>
    %821 = arith.mulf %820, %783 : vector<8x32xf32>
    %822 = vector.extract_strided_slice %809 {offsets = [0, 0], sizes = [8, 32], strides = [1, 1]} : vector<8x96xf32> to vector<8x32xf32>
    %823 = arith.mulf %822, %811 : vector<8x32xf32>
    %824 = arith.addf %821, %823 : vector<8x32xf32>
    %825 = vector.extract_strided_slice %817 {offsets = [0, 32], sizes = [8, 32], strides = [1, 1]} : vector<8x96xf32> to vector<8x32xf32>
    %826 = arith.mulf %825, %789 : vector<8x32xf32>
    %827 = vector.extract_strided_slice %817 {offsets = [0, 0], sizes = [8, 32], strides = [1, 1]} : vector<8x96xf32> to vector<8x32xf32>
    %828 = arith.mulf %827, %819 : vector<8x32xf32>
    %829 = arith.addf %826, %828 : vector<8x32xf32>
    %830 = vector.extract_strided_slice %809 {offsets = [0, 64], sizes = [8, 32], strides = [1, 1]} : vector<8x96xf32> to vector<8x32xf32>
    %831 = math.tanh %824 : vector<8x32xf32>
    %832 = arith.mulf %830, %831 : vector<8x32xf32>
    %833 = vector.extract_strided_slice %817 {offsets = [0, 64], sizes = [8, 32], strides = [1, 1]} : vector<8x96xf32> to vector<8x32xf32>
    %834 = math.tanh %829 : vector<8x32xf32>
    %835 = arith.mulf %833, %834 : vector<8x32xf32>
    %836 = vector.shape_cast %20 : vector<8x1xi1> to vector<8x1xi1>
    %837 = vector.broadcast %836 : vector<8x1xi1> to vector<8x32xi1>
    %838 = arith.select %837, %832, %780 : vector<8x32xi1>, vector<8x32xf32>
    %839 = vector.shape_cast %20 : vector<8x1xi1> to vector<8x1xi1>
    %840 = vector.broadcast %839 : vector<8x1xi1> to vector<8x32xi1>
    %841 = arith.select %840, %824, %783 : vector<8x32xi1>, vector<8x32xf32>
    %842 = vector.shape_cast %14 : vector<8x1xi1> to vector<8x1xi1>
    %843 = vector.broadcast %842 : vector<8x1xi1> to vector<8x32xi1>
    %844 = arith.select %843, %835, %786 : vector<8x32xi1>, vector<8x32xf32>
    %845 = vector.shape_cast %14 : vector<8x1xi1> to vector<8x1xi1>
    %846 = vector.broadcast %845 : vector<8x1xi1> to vector<8x32xi1>
    %847 = arith.select %846, %829, %789 : vector<8x32xi1>, vector<8x32xf32>
    %cst_113 = arith.constant 0.000000e+00 : f32
    %848 = vector.shape_cast %20 : vector<8x1xi1> to vector<8x1xi1>
    %849 = vector.broadcast %848 : vector<8x1xi1> to vector<8x32xi1>
    %850 = vector.broadcast %cst_113 : f32 to vector<8x32xf32>
    %851 = arith.select %849, %832, %850 : vector<8x32xi1>, vector<8x32xf32>
    %cst_114 = arith.constant 0.000000e+00 : f32
    %852 = vector.shape_cast %14 : vector<8x1xi1> to vector<8x1xi1>
    %853 = vector.broadcast %852 : vector<8x1xi1> to vector<8x32xi1>
    %854 = vector.broadcast %cst_114 : f32 to vector<8x32xf32>
    %855 = arith.select %853, %835, %854 : vector<8x32xi1>, vector<8x32xf32>
    %856 = vector.extract_strided_slice %501 {offsets = [48, 0], sizes = [8, 128], strides = [1, 1]} : vector<64x256xf32> to vector<8x128xf32>
    %857 = vector.extract_strided_slice %501 {offsets = [8, 128], sizes = [8, 128], strides = [1, 1]} : vector<64x256xf32> to vector<8x128xf32>
    %cst_115 = arith.constant dense<0.000000e+00> : vector<8x128xf32>
    %858 = tpu.matmul %838, %502, %cst_115 {dimension_numbers = #tpu.dot_dimension_numbers<[1], [0], [0], [1], [0, 0, 1, 1], [], []>} : vector<8x32xf32>, vector<32x128xf32>, vector<8x128xf32> -> vector<8x128xf32>
    %859 = arith.addf %856, %858 : vector<8x128xf32>
    %cst_116 = arith.constant dense<0.000000e+00> : vector<8x128xf32>
    %860 = tpu.matmul %844, %503, %cst_116 {dimension_numbers = #tpu.dot_dimension_numbers<[1], [0], [0], [1], [0, 0, 1, 1], [], []>} : vector<8x32xf32>, vector<32x128xf32>, vector<8x128xf32> -> vector<8x128xf32>
    %861 = arith.addf %857, %860 : vector<8x128xf32>
    %862 = vector.extract_strided_slice %859 {offsets = [0, 0], sizes = [8, 96], strides = [1, 1]} : vector<8x128xf32> to vector<8x96xf32>
    %863 = arith.negf %862 : vector<8x96xf32>
    %864 = math.exp %863 : vector<8x96xf32>
    %cst_117 = arith.constant 1.000000e+00 : f32
    %865 = vector.broadcast %cst_117 : f32 to vector<8x96xf32>
    %866 = arith.addf %865, %864 : vector<8x96xf32>
    %867 = arith.divf %865, %866 : vector<8x96xf32>
    %868 = vector.extract_strided_slice %859 {offsets = [0, 96], sizes = [8, 32], strides = [1, 1]} : vector<8x128xf32> to vector<8x32xf32>
    %869 = math.tanh %868 : vector<8x32xf32>
    %870 = vector.extract_strided_slice %861 {offsets = [0, 0], sizes = [8, 96], strides = [1, 1]} : vector<8x128xf32> to vector<8x96xf32>
    %871 = arith.negf %870 : vector<8x96xf32>
    %872 = math.exp %871 : vector<8x96xf32>
    %cst_118 = arith.constant 1.000000e+00 : f32
    %873 = vector.broadcast %cst_118 : f32 to vector<8x96xf32>
    %874 = arith.addf %873, %872 : vector<8x96xf32>
    %875 = arith.divf %873, %874 : vector<8x96xf32>
    %876 = vector.extract_strided_slice %861 {offsets = [0, 96], sizes = [8, 32], strides = [1, 1]} : vector<8x128xf32> to vector<8x32xf32>
    %877 = math.tanh %876 : vector<8x32xf32>
    %878 = vector.extract_strided_slice %867 {offsets = [0, 32], sizes = [8, 32], strides = [1, 1]} : vector<8x96xf32> to vector<8x32xf32>
    %879 = arith.mulf %878, %841 : vector<8x32xf32>
    %880 = vector.extract_strided_slice %867 {offsets = [0, 0], sizes = [8, 32], strides = [1, 1]} : vector<8x96xf32> to vector<8x32xf32>
    %881 = arith.mulf %880, %869 : vector<8x32xf32>
    %882 = arith.addf %879, %881 : vector<8x32xf32>
    %883 = vector.extract_strided_slice %875 {offsets = [0, 32], sizes = [8, 32], strides = [1, 1]} : vector<8x96xf32> to vector<8x32xf32>
    %884 = arith.mulf %883, %847 : vector<8x32xf32>
    %885 = vector.extract_strided_slice %875 {offsets = [0, 0], sizes = [8, 32], strides = [1, 1]} : vector<8x96xf32> to vector<8x32xf32>
    %886 = arith.mulf %885, %877 : vector<8x32xf32>
    %887 = arith.addf %884, %886 : vector<8x32xf32>
    %888 = vector.extract_strided_slice %867 {offsets = [0, 64], sizes = [8, 32], strides = [1, 1]} : vector<8x96xf32> to vector<8x32xf32>
    %889 = math.tanh %882 : vector<8x32xf32>
    %890 = arith.mulf %888, %889 : vector<8x32xf32>
    %891 = vector.extract_strided_slice %875 {offsets = [0, 64], sizes = [8, 32], strides = [1, 1]} : vector<8x96xf32> to vector<8x32xf32>
    %892 = math.tanh %887 : vector<8x32xf32>
    %893 = arith.mulf %891, %892 : vector<8x32xf32>
    %894 = vector.shape_cast %22 : vector<8x1xi1> to vector<8x1xi1>
    %895 = vector.broadcast %894 : vector<8x1xi1> to vector<8x32xi1>
    %896 = arith.select %895, %890, %838 : vector<8x32xi1>, vector<8x32xf32>
    %897 = vector.shape_cast %22 : vector<8x1xi1> to vector<8x1xi1>
    %898 = vector.broadcast %897 : vector<8x1xi1> to vector<8x32xi1>
    %899 = arith.select %898, %882, %841 : vector<8x32xi1>, vector<8x32xf32>
    %900 = vector.shape_cast %12 : vector<8x1xi1> to vector<8x1xi1>
    %901 = vector.broadcast %900 : vector<8x1xi1> to vector<8x32xi1>
    %902 = arith.select %901, %893, %844 : vector<8x32xi1>, vector<8x32xf32>
    %903 = vector.shape_cast %12 : vector<8x1xi1> to vector<8x1xi1>
    %904 = vector.broadcast %903 : vector<8x1xi1> to vector<8x32xi1>
    %905 = arith.select %904, %887, %847 : vector<8x32xi1>, vector<8x32xf32>
    %cst_119 = arith.constant 0.000000e+00 : f32
    %906 = vector.shape_cast %22 : vector<8x1xi1> to vector<8x1xi1>
    %907 = vector.broadcast %906 : vector<8x1xi1> to vector<8x32xi1>
    %908 = vector.broadcast %cst_119 : f32 to vector<8x32xf32>
    %909 = arith.select %907, %890, %908 : vector<8x32xi1>, vector<8x32xf32>
    %cst_120 = arith.constant 0.000000e+00 : f32
    %910 = vector.shape_cast %12 : vector<8x1xi1> to vector<8x1xi1>
    %911 = vector.broadcast %910 : vector<8x1xi1> to vector<8x32xi1>
    %912 = vector.broadcast %cst_120 : f32 to vector<8x32xf32>
    %913 = arith.select %911, %893, %912 : vector<8x32xi1>, vector<8x32xf32>
    %914 = vector.extract_strided_slice %501 {offsets = [56, 0], sizes = [8, 128], strides = [1, 1]} : vector<64x256xf32> to vector<8x128xf32>
    %915 = vector.extract_strided_slice %501 {offsets = [0, 128], sizes = [8, 128], strides = [1, 1]} : vector<64x256xf32> to vector<8x128xf32>
    %cst_121 = arith.constant dense<0.000000e+00> : vector<8x128xf32>
    %916 = tpu.matmul %896, %502, %cst_121 {dimension_numbers = #tpu.dot_dimension_numbers<[1], [0], [0], [1], [0, 0, 1, 1], [], []>} : vector<8x32xf32>, vector<32x128xf32>, vector<8x128xf32> -> vector<8x128xf32>
    %917 = arith.addf %914, %916 : vector<8x128xf32>
    %cst_122 = arith.constant dense<0.000000e+00> : vector<8x128xf32>
    %918 = tpu.matmul %902, %503, %cst_122 {dimension_numbers = #tpu.dot_dimension_numbers<[1], [0], [0], [1], [0, 0, 1, 1], [], []>} : vector<8x32xf32>, vector<32x128xf32>, vector<8x128xf32> -> vector<8x128xf32>
    %919 = arith.addf %915, %918 : vector<8x128xf32>
    %920 = vector.extract_strided_slice %917 {offsets = [0, 0], sizes = [8, 96], strides = [1, 1]} : vector<8x128xf32> to vector<8x96xf32>
    %921 = arith.negf %920 : vector<8x96xf32>
    %922 = math.exp %921 : vector<8x96xf32>
    %cst_123 = arith.constant 1.000000e+00 : f32
    %923 = vector.broadcast %cst_123 : f32 to vector<8x96xf32>
    %924 = arith.addf %923, %922 : vector<8x96xf32>
    %925 = arith.divf %923, %924 : vector<8x96xf32>
    %926 = vector.extract_strided_slice %917 {offsets = [0, 96], sizes = [8, 32], strides = [1, 1]} : vector<8x128xf32> to vector<8x32xf32>
    %927 = math.tanh %926 : vector<8x32xf32>
    %928 = vector.extract_strided_slice %919 {offsets = [0, 0], sizes = [8, 96], strides = [1, 1]} : vector<8x128xf32> to vector<8x96xf32>
    %929 = arith.negf %928 : vector<8x96xf32>
    %930 = math.exp %929 : vector<8x96xf32>
    %cst_124 = arith.constant 1.000000e+00 : f32
    %931 = vector.broadcast %cst_124 : f32 to vector<8x96xf32>
    %932 = arith.addf %931, %930 : vector<8x96xf32>
    %933 = arith.divf %931, %932 : vector<8x96xf32>
    %934 = vector.extract_strided_slice %919 {offsets = [0, 96], sizes = [8, 32], strides = [1, 1]} : vector<8x128xf32> to vector<8x32xf32>
    %935 = math.tanh %934 : vector<8x32xf32>
    %936 = vector.extract_strided_slice %925 {offsets = [0, 32], sizes = [8, 32], strides = [1, 1]} : vector<8x96xf32> to vector<8x32xf32>
    %937 = arith.mulf %936, %899 : vector<8x32xf32>
    %938 = vector.extract_strided_slice %925 {offsets = [0, 0], sizes = [8, 32], strides = [1, 1]} : vector<8x96xf32> to vector<8x32xf32>
    %939 = arith.mulf %938, %927 : vector<8x32xf32>
    %940 = arith.addf %937, %939 : vector<8x32xf32>
    %941 = vector.extract_strided_slice %933 {offsets = [0, 32], sizes = [8, 32], strides = [1, 1]} : vector<8x96xf32> to vector<8x32xf32>
    %942 = arith.mulf %941, %905 : vector<8x32xf32>
    %943 = vector.extract_strided_slice %933 {offsets = [0, 0], sizes = [8, 32], strides = [1, 1]} : vector<8x96xf32> to vector<8x32xf32>
    %944 = arith.mulf %943, %935 : vector<8x32xf32>
    %945 = arith.addf %942, %944 : vector<8x32xf32>
    %946 = vector.extract_strided_slice %925 {offsets = [0, 64], sizes = [8, 32], strides = [1, 1]} : vector<8x96xf32> to vector<8x32xf32>
    %947 = math.tanh %940 : vector<8x32xf32>
    %948 = arith.mulf %946, %947 : vector<8x32xf32>
    %949 = vector.extract_strided_slice %933 {offsets = [0, 64], sizes = [8, 32], strides = [1, 1]} : vector<8x96xf32> to vector<8x32xf32>
    %950 = math.tanh %945 : vector<8x32xf32>
    %951 = arith.mulf %949, %950 : vector<8x32xf32>
    %cst_125 = arith.constant 0.000000e+00 : f32
    %952 = vector.shape_cast %24 : vector<8x1xi1> to vector<8x1xi1>
    %953 = vector.broadcast %952 : vector<8x1xi1> to vector<8x32xi1>
    %954 = vector.broadcast %cst_125 : f32 to vector<8x32xf32>
    %955 = arith.select %953, %948, %954 : vector<8x32xi1>, vector<8x32xf32>
    %cst_126 = arith.constant 0.000000e+00 : f32
    %956 = vector.shape_cast %10 : vector<8x1xi1> to vector<8x1xi1>
    %957 = vector.broadcast %956 : vector<8x1xi1> to vector<8x32xi1>
    %958 = vector.broadcast %cst_126 : f32 to vector<8x32xf32>
    %959 = arith.select %957, %951, %958 : vector<8x32xi1>, vector<8x32xf32>
    %960 = tpu.concatenate %561, %959 in 1 : vector<8x32xf32>, vector<8x32xf32> -> vector<8x64xf32>
    %961 = tpu.concatenate %619, %913 in 1 : vector<8x32xf32>, vector<8x32xf32> -> vector<8x64xf32>
    %962 = tpu.concatenate %677, %855 in 1 : vector<8x32xf32>, vector<8x32xf32> -> vector<8x64xf32>
    %963 = tpu.concatenate %735, %797 in 1 : vector<8x32xf32>, vector<8x32xf32> -> vector<8x64xf32>
    %964 = tpu.concatenate %793, %739 in 1 : vector<8x32xf32>, vector<8x32xf32> -> vector<8x64xf32>
    %965 = tpu.concatenate %851, %681 in 1 : vector<8x32xf32>, vector<8x32xf32> -> vector<8x64xf32>
    %966 = tpu.concatenate %909, %623 in 1 : vector<8x32xf32>, vector<8x32xf32> -> vector<8x64xf32>
    %967 = tpu.concatenate %955, %565 in 1 : vector<8x32xf32>, vector<8x32xf32> -> vector<8x64xf32>
    %968 = tpu.concatenate %960, %961, %962, %963, %964, %965, %966, %967 in 0 : vector<8x64xf32>, vector<8x64xf32>, vector<8x64xf32>, vector<8x64xf32>, vector<8x64xf32>, vector<8x64xf32>, vector<8x64xf32>, vector<8x64xf32> -> vector<64x64xf32>
    %969 = vector.shape_cast %968 : vector<64x64xf32> to vector<8x8x64xf32>
    %c0_127 = arith.constant 0 : index
    %c0_128 = arith.constant 0 : index
    %970 = vector.load %arg11[%c0_127, %c0_128] : memref<1x64xf32, #tpu.memory_space<vmem>>, vector<1x64xf32>
    %971 = vector.shape_cast %970 : vector<1x64xf32> to vector<1x1x64xf32>
    %972 = math.tanh %969 : vector<8x8x64xf32>
    %973 = vector.broadcast %971 : vector<1x1x64xf32> to vector<8x8x64xf32>
    %974 = arith.mulf %972, %973 : vector<8x8x64xf32>
    %cst_129 = arith.constant dense<0.000000e+00> : vector<8x8xf32>
    %975 = vector.multi_reduction <add>, %974, %cst_129 [2] : vector<8x8x64xf32> to vector<8x8xf32>
    %976 = vector.shape_cast %975 : vector<8x8xf32> to vector<8x8x1xf32>
    %977 = tpu.iota {dimensions = array<i32: 0>} : vector<8x1xi32>
    %c4_i32_130 = arith.constant 4 : i32
    %978 = vector.broadcast %c4_i32_130 : i32 to vector<8x1xi32>
    %979 = arith.cmpi slt, %977, %978 : vector<8x1xi32>
    %cst_131 = arith.constant -1.000000e+30 : f32
    %980 = vector.shape_cast %979 : vector<8x1xi1> to vector<1x8x1xi1>
    %981 = vector.broadcast %980 : vector<1x8x1xi1> to vector<8x8x1xi1>
    %982 = vector.broadcast %cst_131 : f32 to vector<8x8x1xf32>
    %983 = arith.select %981, %976, %982 : vector<8x8x1xi1>, vector<8x8x1xf32>
    %cst_132 = arith.constant dense<0xFF800000> : vector<8x1xf32>
    %984 = vector.multi_reduction <maximumf>, %983, %cst_132 [1] : vector<8x8x1xf32> to vector<8x1xf32>
    %985 = vector.shape_cast %984 : vector<8x1xf32> to vector<8x1x1xf32>
    %986 = vector.broadcast %985 : vector<8x1x1xf32> to vector<8x8x1xf32>
    %987 = arith.subf %983, %986 : vector<8x8x1xf32>
    %988 = math.exp %987 : vector<8x8x1xf32>
    %cst_133 = arith.constant 0.000000e+00 : f32
    %989 = vector.shape_cast %979 : vector<8x1xi1> to vector<1x8x1xi1>
    %990 = vector.broadcast %989 : vector<1x8x1xi1> to vector<8x8x1xi1>
    %991 = vector.broadcast %cst_133 : f32 to vector<8x8x1xf32>
    %992 = arith.select %990, %988, %991 : vector<8x8x1xi1>, vector<8x8x1xf32>
    %cst_134 = arith.constant dense<0.000000e+00> : vector<8x1xf32>
    %993 = vector.multi_reduction <add>, %992, %cst_134 [1] : vector<8x8x1xf32> to vector<8x1xf32>
    %994 = vector.shape_cast %993 : vector<8x1xf32> to vector<8x1x1xf32>
    %995 = vector.broadcast %994 : vector<8x1x1xf32> to vector<8x8x1xf32>
    %996 = arith.divf %992, %995 : vector<8x8x1xf32>
    %997 = vector.broadcast %996 : vector<8x8x1xf32> to vector<8x8x64xf32>
    %998 = arith.mulf %969, %997 : vector<8x8x64xf32>
    %cst_135 = arith.constant dense<0.000000e+00> : vector<8x64xf32>
    %999 = vector.multi_reduction <add>, %998, %cst_135 [0] : vector<8x8x64xf32> to vector<8x64xf32>
    %1000 = math.tanh %999 : vector<8x64xf32>
    %c0_136 = arith.constant 0 : index
    %c0_137 = arith.constant 0 : index
    %1001 = vector.load %arg12[%c0_136, %c0_137] : memref<64x32xf32, #tpu.memory_space<vmem>>, vector<64x32xf32>
    %cst_138 = arith.constant dense<0.000000e+00> : vector<8x32xf32>
    %1002 = tpu.matmul %1000, %1001, %cst_138 {dimension_numbers = #tpu.dot_dimension_numbers<[1], [0], [0], [1], [0, 0, 1, 1], [], []>} : vector<8x64xf32>, vector<64x32xf32>, vector<8x32xf32> -> vector<8x32xf32>
    %c0_139 = arith.constant 0 : index
    %c0_140 = arith.constant 0 : index
    %1003 = vector.load %arg13[%c0_139, %c0_140] : memref<1x32xf32, #tpu.memory_space<vmem>>, vector<1x32xf32>
    %1004 = vector.broadcast %1003 : vector<1x32xf32> to vector<8x32xf32>
    %1005 = arith.addf %1002, %1004 : vector<8x32xf32>
    %c0_141 = arith.constant 0 : index
    %c0_142 = arith.constant 0 : index
    %1006 = vector.load %arg14[%c0_141, %c0_142] : memref<32x6xf32, #tpu.memory_space<vmem>>, vector<32x6xf32>
    %cst_143 = arith.constant dense<0.000000e+00> : vector<8x6xf32>
    %1007 = tpu.matmul %1005, %1006, %cst_143 {dimension_numbers = #tpu.dot_dimension_numbers<[1], [0], [0], [1], [0, 0, 1, 1], [], []>} : vector<8x32xf32>, vector<32x6xf32>, vector<8x6xf32> -> vector<8x6xf32>
    %c0_144 = arith.constant 0 : index
    %c0_145 = arith.constant 0 : index
    %1008 = vector.load %arg15[%c0_144, %c0_145] : memref<1x6xf32, #tpu.memory_space<vmem>>, vector<1x6xf32>
    %1009 = vector.broadcast %1008 : vector<1x6xf32> to vector<8x6xf32>
    %1010 = arith.addf %1007, %1009 : vector<8x6xf32>
    %c0_146 = arith.constant 0 : index
    %c0_147 = arith.constant 0 : index
    %1011 = vector.load %arg16[%c0_146, %c0_147] : memref<8x6xf32, #tpu.memory_space<vmem>>, vector<8x6xf32>
    tpu.vector_store %arg16[%c0_146, %c0_147], %1010 {strides = array<i32>} : memref<8x6xf32, #tpu.memory_space<vmem>>, vector<8x6xf32>,
    return
  }
}

</mosaic_0001>

<llo_original>
// kernel: lstm_attention_forward.1
$region0: #{lstm_attention_forward.1}
  #allocation0 [shape = 'u32[]', space=smem, size = 0x4, offset = 0x4, fixed_abs, tag = 'smem constant byte address 0x4 - core index']
  #allocation1 [shape = 'u32[144,128]{1,0:T(1,128)}', space=vmem, size = 0x12000, scoped, tag = 'internal scratch']
  %s0 = inlined_call_operand.vmem [shape: s32[64,1], index: 0, kind: input, shape index: {}]
  %s1 = inlined_call_operand.vmem [shape: s32[8,1], index: 1, kind: input, shape index: {}]
  %s2 = inlined_call_operand.vmem [shape: f32[64,32], index: 2, kind: input, shape index: {}]
  %s3 = inlined_call_operand.vmem [shape: f32[32,256], index: 3, kind: input, shape index: {}]
  %s4 = inlined_call_operand.vmem [shape: f32[32,128], index: 4, kind: input, shape index: {}]
  %s5 = inlined_call_operand.vmem [shape: f32[32,128], index: 5, kind: input, shape index: {}]
  %s6 = inlined_call_operand.vmem [shape: f32[1,256], index: 6, kind: input, shape index: {}]
  %s7 = inlined_call_operand.vmem [shape: f32[64,256], index: 7, kind: input, shape index: {}]
  %s8 = inlined_call_operand.vmem [shape: f32[32,128], index: 8, kind: input, shape index: {}]
  %s9 = inlined_call_operand.vmem [shape: f32[32,128], index: 9, kind: input, shape index: {}]
  %s10 = inlined_call_operand.vmem [shape: f32[1,256], index: 10, kind: input, shape index: {}]
  %s11 = inlined_call_operand.vmem [shape: f32[1,64], index: 11, kind: input, shape index: {}]
  %s12 = inlined_call_operand.vmem [shape: f32[64,32], index: 12, kind: input, shape index: {}]
  %s13 = inlined_call_operand.vmem [shape: f32[1,32], index: 13, kind: input, shape index: {}]
  %s14 = inlined_call_operand.vmem [shape: f32[32,6], index: 14, kind: input, shape index: {}]
  %s15 = inlined_call_operand.vmem [shape: f32[1,6], index: 15, kind: input, shape index: {}]
  %s16 = inlined_call_operand.vmem [shape: f32[8,6], index: 16, kind: output, shape index: {}]
  %s17 = sld [smem:[#allocation0]]
  $region74: #{lstm_attention_forward.1} parent=0
    _
  %s19 = ssub.s32 1, %s17
  %s20 = scalar_select 0, %s19, %s17
  // Predicated region
  $region2: #{lstm_attention_forward.1} parent=0 // pred_check
    _
  $region3: #{lstm_attention_forward.1} parent=0 // pred_check_branch
    %22 = sbr.rel (0) target = $region5
  $region4: #{lstm_attention_forward.1} parent=0 // pred_region
    _
  $region5: #{lstm_attention_forward.1} parent=0 // pred_fallthru
    _
  // Predicated region
  $region6: #{lstm_attention_forward.1} parent=0 // pred_check
    _
  $region7: #{lstm_attention_forward.1} parent=0 // pred_check_branch
    %24 = sbr.rel (0) target = $region9
  $region8: #{lstm_attention_forward.1} parent=0 // pred_region
    _
  $region9: #{lstm_attention_forward.1} parent=0 // pred_fallthru
    _
  // Predicated region
  $region10: #{lstm_attention_forward.1} parent=0 // pred_check
    _
  $region11: #{lstm_attention_forward.1} parent=0 // pred_check_branch
    %26 = sbr.rel (0) target = $region13
  $region12: #{lstm_attention_forward.1} parent=0 // pred_region
    _
  $region13: #{lstm_attention_forward.1} parent=0 // pred_fallthru
    _
  // Predicated region
  $region14: #{lstm_attention_forward.1} parent=0 // pred_check
    _
  $region15: #{lstm_attention_forward.1} parent=0 // pred_check_branch
    %28 = sbr.rel (0) target = $region17
  $region16: #{lstm_attention_forward.1} parent=0 // pred_region
    _
  $region17: #{lstm_attention_forward.1} parent=0 // pred_fallthru
    _
  // Predicated region
  $region18: #{lstm_attention_forward.1} parent=0 // pred_check
    _
  $region19: #{lstm_attention_forward.1} parent=0 // pred_check_branch
    %30 = sbr.rel (0) target = $region21
  $region20: #{lstm_attention_forward.1} parent=0 // pred_region
    _
  $region21: #{lstm_attention_forward.1} parent=0 // pred_fallthru
    _
  // Predicated region
  $region22: #{lstm_attention_forward.1} parent=0 // pred_check
    _
  $region23: #{lstm_attention_forward.1} parent=0 // pred_check_branch
    %32 = sbr.rel (0) target = $region25
  $region24: #{lstm_attention_forward.1} parent=0 // pred_region
    _
  $region25: #{lstm_attention_forward.1} parent=0 // pred_fallthru
    _
  // Predicated region
  $region26: #{lstm_attention_forward.1} parent=0 // pred_check
    _
  $region27: #{lstm_attention_forward.1} parent=0 // pred_check_branch
    %34 = sbr.rel (0) target = $region29
  $region28: #{lstm_attention_forward.1} parent=0 // pred_region
    _
  $region29: #{lstm_attention_forward.1} parent=0 // pred_fallthru
    _
  // Predicated region
  $region30: #{lstm_attention_forward.1} parent=0 // pred_check
    _
  $region31: #{lstm_attention_forward.1} parent=0 // pred_check_branch
    %36 = sbr.rel (0) target = $region33
  $region32: #{lstm_attention_forward.1} parent=0 // pred_region
    _
  $region33: #{lstm_attention_forward.1} parent=0 // pred_fallthru
    _
  // Predicated region
  $region34: #{lstm_attention_forward.1} parent=0 // pred_check
    _
  $region35: #{lstm_attention_forward.1} parent=0 // pred_check_branch
    %38 = sbr.rel (0) target = $region37
  $region36: #{lstm_attention_forward.1} parent=0 // pred_region
    _
  $region37: #{lstm_attention_forward.1} parent=0 // pred_fallthru
    _
  // Predicated region
  $region38: #{lstm_attention_forward.1} parent=0 // pred_check
    _
  $region39: #{lstm_attention_forward.1} parent=0 // pred_check_branch
    %40 = sbr.rel (0) target = $region41
  $region40: #{lstm_attention_forward.1} parent=0 // pred_region
    _
  $region41: #{lstm_attention_forward.1} parent=0 // pred_fallthru
    _
  // Predicated region
  $region42: #{lstm_attention_forward.1} parent=0 // pred_check
    _
  $region43: #{lstm_attention_forward.1} parent=0 // pred_check_branch
    %42 = sbr.rel (0) target = $region45
  $region44: #{lstm_attention_forward.1} parent=0 // pred_region
    _
  $region45: #{lstm_attention_forward.1} parent=0 // pred_fallthru
    _
  // Predicated region
  $region46: #{lstm_attention_forward.1} parent=0 // pred_check
    _
  $region47: #{lstm_attention_forward.1} parent=0 // pred_check_branch
    %44 = sbr.rel (0) target = $region49
  $region48: #{lstm_attention_forward.1} parent=0 // pred_region
    _
  $region49: #{lstm_attention_forward.1} parent=0 // pred_fallthru
    _
  // Predicated region
  $region50: #{lstm_attention_forward.1} parent=0 // pred_check
    _
  $region51: #{lstm_attention_forward.1} parent=0 // pred_check_branch
    %46 = sbr.rel (0) target = $region53
  $region52: #{lstm_attention_forward.1} parent=0 // pred_region
    _
  $region53: #{lstm_attention_forward.1} parent=0 // pred_fallthru
    _
  // Predicated region
  $region54: #{lstm_attention_forward.1} parent=0 // pred_check
    _
  $region55: #{lstm_attention_forward.1} parent=0 // pred_check_branch
    %48 = sbr.rel (0) target = $region57
  $region56: #{lstm_attention_forward.1} parent=0 // pred_region
    _
  $region57: #{lstm_attention_forward.1} parent=0 // pred_fallthru
    _
  // Predicated region
  $region58: #{lstm_attention_forward.1} parent=0 // pred_check
    _
  $region59: #{lstm_attention_forward.1} parent=0 // pred_check_branch
    %50 = sbr.rel (0) target = $region61
  $region60: #{lstm_attention_forward.1} parent=0 // pred_region
    _
  $region61: #{lstm_attention_forward.1} parent=0 // pred_fallthru
    _
  // Predicated region
  $region62: #{lstm_attention_forward.1} parent=0 // pred_check
    _
  $region63: #{lstm_attention_forward.1} parent=0 // pred_check_branch
    %52 = sbr.rel (0) target = $region65
  $region64: #{lstm_attention_forward.1} parent=0 // pred_region
    _
  $region65: #{lstm_attention_forward.1} parent=0 // pred_fallthru
    _
  %v53 = vld [vmem:[%s0] sm:$0xff]
  %v54 = vld [vmem:[%s0 + $0x8] sm:$0xff]
  %v55 = vld [vmem:[%s0 + $0x10] sm:$0xff]
  %v56 = vld [vmem:[%s0 + $0x18] sm:$0xff]
  %v57 = vld [vmem:[%s0 + $0x20] sm:$0xff]
  %v58 = vld [vmem:[%s0 + $0x28] sm:$0xff]
  %v59 = vld [vmem:[%s0 + $0x30] sm:$0xff]
  %v60 = vld [vmem:[%s0 + $0x38] sm:$0xff]
  %v61 = vlaneseq
  %v62 = vand.u32 %v61, 127
  %63 = vset.pattern.permute.xlu0 0
  %64 = vperm.xlu0 %63, %v53
  %v65 = vpop.permute.xlu0 %64
  %66 = vset.pattern.permute.xlu0 0
  %67 = vperm.xlu0 %66, %v54
  %v68 = vpop.permute.xlu0 %67
  %69 = vset.pattern.permute.xlu0 0
  %70 = vperm.xlu0 %69, %v55
  %v71 = vpop.permute.xlu0 %70
  %72 = vset.pattern.permute.xlu0 0
  %73 = vperm.xlu0 %72, %v56
  %v74 = vpop.permute.xlu0 %73
  %75 = vset.pattern.permute.xlu0 0
  %76 = vperm.xlu0 %75, %v57
  %v77 = vpop.permute.xlu0 %76
  %78 = vset.pattern.permute.xlu0 0
  %79 = vperm.xlu0 %78, %v58
  %v80 = vpop.permute.xlu0 %79
  %81 = vset.pattern.permute.xlu0 0
  %82 = vperm.xlu0 %81, %v59
  %v83 = vpop.permute.xlu0 %82
  %84 = vset.pattern.permute.xlu0 0
  %85 = vperm.xlu0 %84, %v60
  %v86 = vpop.permute.xlu0 %85
  %vm87 = vcmp.eq.s32.totalorder %v65, %v62
  %vm88 = vcmp.eq.s32.totalorder %v68, %v62
  %vm89 = vcmp.eq.s32.totalorder %v71, %v62
  %vm90 = vcmp.eq.s32.totalorder %v74, %v62
  %vm91 = vcmp.eq.s32.totalorder %v77, %v62
  %vm92 = vcmp.eq.s32.totalorder %v80, %v62
  %vm93 = vcmp.eq.s32.totalorder %v83, %v62
  %vm94 = vcmp.eq.s32.totalorder %v86, %v62
  %v95 = vsel %vm87, 1, 0
  %v96 = vsel %vm88, 1, 0
  %v97 = vsel %vm89, 1, 0
  %v98 = vsel %vm90, 1, 0
  %v99 = vsel %vm91, 1, 0
  %v100 = vsel %vm92, 1, 0
  %v101 = vsel %vm93, 1, 0
  %v102 = vsel %vm94, 1, 0
  %v103 = vcvt.s32.f32 %v95
  %v104 = vcvt.s32.f32 %v96
  %v105 = vcvt.s32.f32 %v97
  %v106 = vcvt.s32.f32 %v98
  %v107 = vcvt.s32.f32 %v99
  %v108 = vcvt.s32.f32 %v100
  %v109 = vcvt.s32.f32 %v101
  %v110 = vcvt.s32.f32 %v102
  %v111 = vld [vmem:[%s2] sm:$0xff]
  %v112 = vld [vmem:[%s2 + $0x8] sm:$0xff]
  %v113 = vld [vmem:[%s2 + $0x10] sm:$0xff]
  %v114 = vld [vmem:[%s2 + $0x18] sm:$0xff]
  %v115 = vld [vmem:[%s2 + $0x20] sm:$0xff]
  %v116 = vld [vmem:[%s2 + $0x28] sm:$0xff]
  %v117 = vld [vmem:[%s2 + $0x30] sm:$0xff]
  %v118 = vld [vmem:[%s2 + $0x38] sm:$0xff]
  %vm119 = vcmask 523264
  %v121 = vsel %vm119, %v103, 0
  %v124 = vsel %vm119, %v104, 0
  %v127 = vsel %vm119, %v105, 0
  %v130 = vsel %vm119, %v106, 0
  %v133 = vsel %vm119, %v107, 0
  %v136 = vsel %vm119, %v108, 0
  %v139 = vsel %vm119, %v109, 0
  %v142 = vsel %vm119, %v110, 0
  %144 = vmatprep.subr.mxu0 0.0
  %145 = vmatpush1.msra.mxu0 0.0
  %146 = vmatprep.subr.mxu0 0.0
  %147 = vmatpush1.msra.mxu0 0.0
  %148 = vmatprep.subr.mxu0 0.0
  %149 = vmatpush1.msra.mxu0 0.0
  %150 = vmatprep.subr.mxu0 0.0
  %151 = vmatpush1.msra.mxu0 0.0
  %152 = vmatprep.subr.mxu0 0.0
  %153 = vmatpush1.msra.mxu0 0.0
  %154 = vmatprep.subr.mxu0 0.0
  %155 = vmatpush1.msra.mxu0 0.0
  %156 = vmatprep.subr.mxu0 0.0
  %157 = vmatpush1.msra.mxu0 0.0
  %158 = vmatprep.subr.mxu0 0.0
  %159 = vmatpush1.msra.mxu0 0.0
  %160 = vmatprep.subr.mxu0 0.0
  %161 = vmatpush1.msra.mxu0 %v118
  %162 = vmatprep.subr.mxu0 0.0
  %163 = vmatpush1.msra.mxu0 %v117
  %164 = vmatprep.subr.mxu0 0.0
  %165 = vmatpush1.msra.mxu0 %v116
  %166 = vmatprep.subr.mxu0 0.0
  %167 = vmatpush1.msra.mxu0 %v115
  %168 = vmatprep.subr.mxu0 0.0
  %169 = vmatpush1.msra.mxu0 %v114
  %170 = vmatprep.subr.mxu0 0.0
  %171 = vmatpush1.msra.mxu0 %v113
  %172 = vmatprep.subr.mxu0 0.0
  %173 = vmatpush1.msra.mxu0 %v112
  %174 = vmatprep.subr.mxu0 0.0
  %175 = vmatpush1.msra.mxu0 %v111
  %176 = vmatprep.subr.mxu0 0.0
  %177 = vmatpush2.msra.mxu0 0.0
  %178 = vmatprep.subr.mxu0 0.0
  %179 = vmatpush2.msra.mxu0 0.0
  %180 = vmatprep.subr.mxu0 0.0
  %181 = vmatpush2.msra.mxu0 0.0
  %182 = vmatprep.subr.mxu0 0.0
  %183 = vmatpush2.msra.mxu0 0.0
  %184 = vmatprep.subr.mxu0 0.0
  %185 = vmatpush2.msra.mxu0 0.0
  %186 = vmatprep.subr.mxu0 0.0
  %187 = vmatpush2.msra.mxu0 0.0
  %188 = vmatprep.subr.mxu0 0.0
  %189 = vmatpush2.msra.mxu0 0.0
  %190 = vmatprep.subr.mxu0 0.0
  %191 = vmatpush2.msra.mxu0 0.0
  %192 = vmatprep.subr.mxu0 0.0
  %193 = vmatpush2.msra.mxu0 0.0
  %194 = vmatprep.subr.mxu0 0.0
  %195 = vmatpush2.msra.mxu0 0.0
  %196 = vmatprep.subr.mxu0 0.0
  %197 = vmatpush2.msra.mxu0 0.0
  %198 = vmatprep.subr.mxu0 0.0
  %199 = vmatpush2.msra.mxu0 0.0
  %200 = vmatprep.subr.mxu0 0.0
  %201 = vmatpush2.msra.mxu0 0.0
  %202 = vmatprep.subr.mxu0 0.0
  %203 = vmatpush2.msra.mxu0 0.0
  %204 = vmatprep.subr.mxu0 0.0
  %205 = vmatpush2.msra.mxu0 0.0
  %206 = vmatprep.subr.mxu0 0.0
  %207 = vmatpush2.msra.mxu0 0.0
  %208 = vmatprep.mubr.f32.mxu0 0.0
  %209 = vmatmul.mubr.f32.gmra.mxu0 %v121
  %v210 = vpop.f32.mrf.mxu0
  %v211 = vadd.f32 0.0, %v210
  %v212 = vpop.f32.mrf.mxu0
  %213 = vmatprep.mubr.f32.mxu0 0.0
  %214 = vmatmul.mubr.f32.gmra.mxu0 %v124
  %v215 = vpop.f32.mrf.mxu0
  %v216 = vadd.f32 0.0, %v215
  %v217 = vpop.f32.mrf.mxu0
  %218 = vmatprep.mubr.f32.mxu0 0.0
  %219 = vmatmul.mubr.f32.gmra.mxu0 %v127
  %v220 = vpop.f32.mrf.mxu0
  %v221 = vadd.f32 0.0, %v220
  %v222 = vpop.f32.mrf.mxu0
  %223 = vmatprep.mubr.f32.mxu0 0.0
  %224 = vmatmul.mubr.f32.gmra.mxu0 %v130
  %v225 = vpop.f32.mrf.mxu0
  %v226 = vadd.f32 0.0, %v225
  %v227 = vpop.f32.mrf.mxu0
  %228 = vmatprep.mubr.f32.mxu0 0.0
  %229 = vmatmul.mubr.f32.gmra.mxu0 %v133
  %v230 = vpop.f32.mrf.mxu0
  %v231 = vadd.f32 0.0, %v230
  %v232 = vpop.f32.mrf.mxu0
  %233 = vmatprep.mubr.f32.mxu0 0.0
  %234 = vmatmul.mubr.f32.gmra.mxu0 %v136
  %v235 = vpop.f32.mrf.mxu0
  %v236 = vadd.f32 0.0, %v235
  %v237 = vpop.f32.mrf.mxu0
  %238 = vmatprep.mubr.f32.mxu0 0.0
  %239 = vmatmul.mubr.f32.gmra.mxu0 %v139
  %v240 = vpop.f32.mrf.mxu0
  %v241 = vadd.f32 0.0, %v240
  %v242 = vpop.f32.mrf.mxu0
  %243 = vmatprep.mubr.f32.mxu0 0.0
  %244 = vmatmul.mubr.f32.gmra.mxu0 %v142
  %v245 = vpop.f32.mrf.mxu0
  %v246 = vadd.f32 0.0, %v245
  %v247 = vpop.f32.mrf.mxu0
  %248 = vdwg.mxu0
  %v249 = vld [vmem:[%s1] sm:$0xff]
  %vm250 = vcmp.gt.s32.totalorder %v249, 0
  %vm251 = vcmp.gt.s32.totalorder %v249, 1
  %vm252 = vcmp.gt.s32.totalorder %v249, 2
  %vm253 = vcmp.gt.s32.totalorder %v249, 3
  %vm254 = vcmp.gt.s32.totalorder %v249, 4
  %vm255 = vcmp.gt.s32.totalorder %v249, 5
  %vm256 = vcmp.gt.s32.totalorder %v249, 6
  %vm257 = vcmp.gt.s32.totalorder %v249, 7
  %v258 = vld [vmem:[%s3] sm:$0xff]
  %v259 = vld [vmem:[%s3 + $0x8] sm:$0xff]
  %v260 = vld [vmem:[%s3 + $0x10] sm:$0xff]
  %v261 = vld [vmem:[%s3 + $0x18] sm:$0xff]
  %v262 = vld [vmem:[%s3 + $0x20] sm:$0xff]
  %v263 = vld [vmem:[%s3 + $0x28] sm:$0xff]
  %v264 = vld [vmem:[%s3 + $0x30] sm:$0xff]
  %v265 = vld [vmem:[%s3 + $0x38] sm:$0xff]
  %v266 = vld [vmem:[%s6] sm:$0x3]
  %v268 = vlaneseq
  %v269 = vshrl.u32 %v268, 7
  %v270 = vsub.s32 0, %v269
  %v271 = vrot.slane %v266, %v270
  %v272 = vlaneseq
  %v273 = vshrl.u32 %v272, 7
  %v274 = vsub.s32 1, %v273
  %v275 = vrot.slane %v266, %v274
  %vm278 = vcmask 261120
  %v280 = vsel %vm278, %v211, 0
  %v283 = vsel %vm278, %v216, 0
  %v286 = vsel %vm278, %v221, 0
  %v289 = vsel %vm278, %v226, 0
  %v292 = vsel %vm278, %v231, 0
  %v295 = vsel %vm278, %v236, 0
  %v298 = vsel %vm278, %v241, 0
  %v301 = vsel %vm278, %v246, 0
  %303 = vmatprep.subr.mxu0 0.0
  %304 = vmatpush1.msra.mxu0 0.0
  %305 = vmatprep.subr.mxu0 0.0
  %306 = vmatpush1.msra.mxu0 0.0
  %307 = vmatprep.subr.mxu0 0.0
  %308 = vmatpush1.msra.mxu0 0.0
  %309 = vmatprep.subr.mxu0 0.0
  %310 = vmatpush1.msra.mxu0 0.0
  %311 = vmatprep.subr.mxu0 0.0
  %312 = vmatpush1.msra.mxu0 0.0
  %313 = vmatprep.subr.mxu0 0.0
  %314 = vmatpush1.msra.mxu0 0.0
  %315 = vmatprep.subr.mxu0 0.0
  %316 = vmatpush1.msra.mxu0 0.0
  %317 = vmatprep.subr.mxu0 0.0
  %318 = vmatpush1.msra.mxu0 0.0
  %319 = vmatprep.subr.mxu0 0.0
  %320 = vmatpush1.msra.mxu0 0.0
  %321 = vmatprep.subr.mxu0 0.0
  %322 = vmatpush1.msra.mxu0 0.0
  %323 = vmatprep.subr.mxu0 0.0
  %324 = vmatpush1.msra.mxu0 0.0
  %325 = vmatprep.subr.mxu0 0.0
  %326 = vmatpush1.msra.mxu0 0.0
  %327 = vmatprep.subr.mxu0 %v265
  %328 = vmatpush1.msra.mxu0 %v264
  %329 = vmatprep.subr.mxu0 %v263
  %330 = vmatpush1.msra.mxu0 %v262
  %331 = vmatprep.subr.mxu0 %v261
  %332 = vmatpush1.msra.mxu0 %v260
  %333 = vmatprep.subr.mxu0 %v259
  %334 = vmatpush1.msra.mxu0 %v258
  %335 = vmatprep.subr.mxu0 0.0
  %336 = vmatpush2.msra.mxu0 0.0
  %337 = vmatprep.subr.mxu0 0.0
  %338 = vmatpush2.msra.mxu0 0.0
  %339 = vmatprep.subr.mxu0 0.0
  %340 = vmatpush2.msra.mxu0 0.0
  %341 = vmatprep.subr.mxu0 0.0
  %342 = vmatpush2.msra.mxu0 0.0
  %343 = vmatprep.subr.mxu0 0.0
  %344 = vmatpush2.msra.mxu0 0.0
  %345 = vmatprep.subr.mxu0 0.0
  %346 = vmatpush2.msra.mxu0 0.0
  %347 = vmatprep.subr.mxu0 0.0
  %348 = vmatpush2.msra.mxu0 0.0
  %349 = vmatprep.subr.mxu0 0.0
  %350 = vmatpush2.msra.mxu0 0.0
  %351 = vmatprep.subr.mxu0 0.0
  %352 = vmatpush2.msra.mxu0 0.0
  %353 = vmatprep.subr.mxu0 0.0
  %354 = vmatpush2.msra.mxu0 0.0
  %355 = vmatprep.subr.mxu0 0.0
  %356 = vmatpush2.msra.mxu0 0.0
  %357 = vmatprep.subr.mxu0 0.0
  %358 = vmatpush2.msra.mxu0 0.0
  %359 = vmatprep.subr.mxu0 0.0
  %360 = vmatpush2.msra.mxu0 0.0
  %361 = vmatprep.subr.mxu0 0.0
  %362 = vmatpush2.msra.mxu0 0.0
  %363 = vmatprep.subr.mxu0 0.0
  %364 = vmatpush2.msra.mxu0 0.0
  %365 = vmatprep.subr.mxu0 0.0
  %366 = vmatpush2.msra.mxu0 0.0
  %367 = vmatprep.mubr.f32.mxu0 0.0
  %368 = vmatmul.mubr.f32.gmra.mxu0 %v280
  %v369 = vpop.f32.mrf.mxu0
  %v370 = vadd.f32 %v271, %v369
  %v371 = vpop.f32.mrf.mxu0
  %v372 = vadd.f32 %v275, %v371
  %373 = vmatprep.mubr.f32.mxu0 0.0
  %374 = vmatmul.mubr.f32.gmra.mxu0 %v283
  %v375 = vpop.f32.mrf.mxu0
  %v376 = vadd.f32 %v271, %v375
  %v377 = vpop.f32.mrf.mxu0
  %v378 = vadd.f32 %v275, %v377
  %379 = vmatprep.mubr.f32.mxu0 0.0
  %380 = vmatmul.mubr.f32.gmra.mxu0 %v286
  %v381 = vpop.f32.mrf.mxu0
  %v382 = vadd.f32 %v271, %v381
  %v383 = vpop.f32.mrf.mxu0
  %v384 = vadd.f32 %v275, %v383
  %385 = vmatprep.mubr.f32.mxu0 0.0
  %386 = vmatmul.mubr.f32.gmra.mxu0 %v289
  %v387 = vpop.f32.mrf.mxu0
  %v388 = vadd.f32 %v271, %v387
  %v389 = vpop.f32.mrf.mxu0
  %v390 = vadd.f32 %v275, %v389
  %391 = vmatprep.mubr.f32.mxu0 0.0
  %392 = vmatmul.mubr.f32.gmra.mxu0 %v292
  %v393 = vpop.f32.mrf.mxu0
  %v394 = vadd.f32 %v271, %v393
  %v395 = vpop.f32.mrf.mxu0
  %v396 = vadd.f32 %v275, %v395
  %397 = vmatprep.mubr.f32.mxu0 0.0
  %398 = vmatmul.mubr.f32.gmra.mxu0 %v295
  %v399 = vpop.f32.mrf.mxu0
  %v400 = vadd.f32 %v271, %v399
  %v401 = vpop.f32.mrf.mxu0
  %v402 = vadd.f32 %v275, %v401
  %403 = vmatprep.mubr.f32.mxu0 0.0
  %404 = vmatmul.mubr.f32.gmra.mxu0 %v298
  %v405 = vpop.f32.mrf.mxu0
  %v406 = vadd.f32 %v271, %v405
  %v407 = vpop.f32.mrf.mxu0
  %v408 = vadd.f32 %v275, %v407
  %409 = vmatprep.mubr.f32.mxu0 0.0
  %410 = vmatmul.mubr.f32.gmra.mxu0 %v301
  %v411 = vpop.f32.mrf.mxu0
  %v412 = vadd.f32 %v271, %v411
  %v413 = vpop.f32.mrf.mxu0
  %v414 = vadd.f32 %v275, %v413
  %415 = vdwg.mxu0
  %v416 = vld [vmem:[%s4] sm:$0xff]
  %v417 = vld [vmem:[%s4 + $0x8] sm:$0xff]
  %v418 = vld [vmem:[%s4 + $0x10] sm:$0xff]
  %v419 = vld [vmem:[%s4 + $0x18] sm:$0xff]
  %v420 = vld [vmem:[%s5] sm:$0xff]
  %v421 = vld [vmem:[%s5 + $0x8] sm:$0xff]
  %v422 = vld [vmem:[%s5 + $0x10] sm:$0xff]
  %v423 = vld [vmem:[%s5 + $0x18] sm:$0xff]
  %v425 = vsel %vm278, 0.0, 0
  %427 = vmatprep.subr.mxu0 0.0
  %428 = vmatpush1.msra.mxu0 0.0
  %429 = vmatprep.subr.mxu0 0.0
  %430 = vmatpush1.msra.mxu0 0.0
  %431 = vmatprep.subr.mxu0 0.0
  %432 = vmatpush1.msra.mxu0 0.0
  %433 = vmatprep.subr.mxu0 0.0
  %434 = vmatpush1.msra.mxu0 0.0
  %435 = vmatprep.subr.mxu0 0.0
  %436 = vmatpush1.msra.mxu0 0.0
  %437 = vmatprep.subr.mxu0 0.0
  %438 = vmatpush1.msra.mxu0 0.0
  %439 = vmatprep.subr.mxu0 0.0
  %440 = vmatpush1.msra.mxu0 0.0
  %441 = vmatprep.subr.mxu0 0.0
  %442 = vmatpush1.msra.mxu0 0.0
  %443 = vmatprep.subr.mxu0 0.0
  %444 = vmatpush1.msra.mxu0 0.0
  %445 = vmatprep.subr.mxu0 0.0
  %446 = vmatpush1.msra.mxu0 0.0
  %447 = vmatprep.subr.mxu0 0.0
  %448 = vmatpush1.msra.mxu0 0.0
  %449 = vmatprep.subr.mxu0 0.0
  %450 = vmatpush1.msra.mxu0 0.0
  %451 = vmatprep.subr.mxu0 0.0
  %452 = vmatpush1.msra.mxu0 %v419
  %453 = vmatprep.subr.mxu0 0.0
  %454 = vmatpush1.msra.mxu0 %v418
  %455 = vmatprep.subr.mxu0 0.0
  %456 = vmatpush1.msra.mxu0 %v417
  %457 = vmatprep.subr.mxu0 0.0
  %458 = vmatpush1.msra.mxu0 %v416
  %459 = vmatprep.subr.mxu0 0.0
  %460 = vmatpush2.msra.mxu0 0.0
  %461 = vmatprep.subr.mxu0 0.0
  %462 = vmatpush2.msra.mxu0 0.0
  %463 = vmatprep.subr.mxu0 0.0
  %464 = vmatpush2.msra.mxu0 0.0
  %465 = vmatprep.subr.mxu0 0.0
  %466 = vmatpush2.msra.mxu0 0.0
  %467 = vmatprep.subr.mxu0 0.0
  %468 = vmatpush2.msra.mxu0 0.0
  %469 = vmatprep.subr.mxu0 0.0
  %470 = vmatpush2.msra.mxu0 0.0
  %471 = vmatprep.subr.mxu0 0.0
  %472 = vmatpush2.msra.mxu0 0.0
  %473 = vmatprep.subr.mxu0 0.0
  %474 = vmatpush2.msra.mxu0 0.0
  %475 = vmatprep.subr.mxu0 0.0
  %476 = vmatpush2.msra.mxu0 0.0
  %477 = vmatprep.subr.mxu0 0.0
  %478 = vmatpush2.msra.mxu0 0.0
  %479 = vmatprep.subr.mxu0 0.0
  %480 = vmatpush2.msra.mxu0 0.0
  %481 = vmatprep.subr.mxu0 0.0
  %482 = vmatpush2.msra.mxu0 0.0
  %483 = vmatprep.subr.mxu0 0.0
  %484 = vmatpush2.msra.mxu0 0.0
  %485 = vmatprep.subr.mxu0 0.0
  %486 = vmatpush2.msra.mxu0 0.0
  %487 = vmatprep.subr.mxu0 0.0
  %488 = vmatpush2.msra.mxu0 0.0
  %489 = vmatprep.subr.mxu0 0.0
  %490 = vmatpush2.msra.mxu0 0.0
  %491 = vmatprep.mubr.f32.mxu0 0.0
  %492 = vmatmul.mubr.f32.gmra.mxu0 %v425
  %v493 = vpop.f32.mrf.mxu0
  %v494 = vadd.f32 0.0, %v493
  %v495 = vpop.f32.mrf.mxu0
  %496 = vdwg.mxu0
  %v497 = vadd.f32 %v370, %v494
  %498 = vmatprep.subr.mxu0 0.0
  %499 = vmatpush1.msra.mxu0 0.0
  %500 = vmatprep.subr.mxu0 0.0
  %501 = vmatpush1.msra.mxu0 0.0
  %502 = vmatprep.subr.mxu0 0.0
  %503 = vmatpush1.msra.mxu0 0.0
  %504 = vmatprep.subr.mxu0 0.0
  %505 = vmatpush1.msra.mxu0 0.0
  %506 = vmatprep.subr.mxu0 0.0
  %507 = vmatpush1.msra.mxu0 0.0
  %508 = vmatprep.subr.mxu0 0.0
  %509 = vmatpush1.msra.mxu0 0.0
  %510 = vmatprep.subr.mxu0 0.0
  %511 = vmatpush1.msra.mxu0 0.0
  %512 = vmatprep.subr.mxu0 0.0
  %513 = vmatpush1.msra.mxu0 0.0
  %514 = vmatprep.subr.mxu0 0.0
  %515 = vmatpush1.msra.mxu0 0.0
  %516 = vmatprep.subr.mxu0 0.0
  %517 = vmatpush1.msra.mxu0 0.0
  %518 = vmatprep.subr.mxu0 0.0
  %519 = vmatpush1.msra.mxu0 0.0
  %520 = vmatprep.subr.mxu0 0.0
  %521 = vmatpush1.msra.mxu0 0.0
  %522 = vmatprep.subr.mxu0 0.0
  %523 = vmatpush1.msra.mxu0 %v423
  %524 = vmatprep.subr.mxu0 0.0
  %525 = vmatpush1.msra.mxu0 %v422
  %526 = vmatprep.subr.mxu0 0.0
  %527 = vmatpush1.msra.mxu0 %v421
  %528 = vmatprep.subr.mxu0 0.0
  %529 = vmatpush1.msra.mxu0 %v420
  %530 = vmatprep.subr.mxu0 0.0
  %531 = vmatpush2.msra.mxu0 0.0
  %532 = vmatprep.subr.mxu0 0.0
  %533 = vmatpush2.msra.mxu0 0.0
  %534 = vmatprep.subr.mxu0 0.0
  %535 = vmatpush2.msra.mxu0 0.0
  %536 = vmatprep.subr.mxu0 0.0
  %537 = vmatpush2.msra.mxu0 0.0
  %538 = vmatprep.subr.mxu0 0.0
  %539 = vmatpush2.msra.mxu0 0.0
  %540 = vmatprep.subr.mxu0 0.0
  %541 = vmatpush2.msra.mxu0 0.0
  %542 = vmatprep.subr.mxu0 0.0
  %543 = vmatpush2.msra.mxu0 0.0
  %544 = vmatprep.subr.mxu0 0.0
  %545 = vmatpush2.msra.mxu0 0.0
  %546 = vmatprep.subr.mxu0 0.0
  %547 = vmatpush2.msra.mxu0 0.0
  %548 = vmatprep.subr.mxu0 0.0
  %549 = vmatpush2.msra.mxu0 0.0
  %550 = vmatprep.subr.mxu0 0.0
  %551 = vmatpush2.msra.mxu0 0.0
  %552 = vmatprep.subr.mxu0 0.0
  %553 = vmatpush2.msra.mxu0 0.0
  %554 = vmatprep.subr.mxu0 0.0
  %555 = vmatpush2.msra.mxu0 0.0
  %556 = vmatprep.subr.mxu0 0.0
  %557 = vmatpush2.msra.mxu0 0.0
  %558 = vmatprep.subr.mxu0 0.0
  %559 = vmatpush2.msra.mxu0 0.0
  %560 = vmatprep.subr.mxu0 0.0
  %561 = vmatpush2.msra.mxu0 0.0
  %562 = vmatprep.mubr.f32.mxu0 0.0
  %563 = vmatmul.mubr.f32.gmra.mxu0 %v425
  %v564 = vpop.f32.mrf.mxu0
  %v565 = vadd.f32 0.0, %v564
  %v566 = vpop.f32.mrf.mxu0
  %567 = vdwg.mxu0
  %v568 = vadd.f32 %v414, %v565
  %v569 = vxor.u32 %v497, 2147483648
  %v570 = vmul.f32 %v569, 1.442695
  %v571 = vpow.pop %v570
  %v572 = vadd.f32 %v571, 1.0
  %v573 = vrcp.pop %v572
  %v574 = vmul.f32 1.0, %v573
  %v575 = vtanh.pop %v497
  %v576 = vxor.u32 %v568, 2147483648
  %v577 = vmul.f32 %v576, 1.442695
  %v578 = vpow.pop %v577
  %v579 = vadd.f32 %v578, 1.0
  %v580 = vrcp.pop %v579
  %v581 = vmul.f32 1.0, %v580
  %v582 = vtanh.pop %v568
  %v583 = vmul.f32 %v574, 0.0
  %585 = vrot.lane.b32.xlu0 %v575, 32
  %v586 = vpop.permute.xlu0 %585
  %v588 = vmul.f32 %v574, %v586
  %590 = vrot.lane.b32.xlu0 %v588, 32
  %v591 = vpop.permute.xlu0 %590
  %v593 = vadd.f32 %v583, %v591
  %v594 = vmul.f32 %v581, 0.0
  %596 = vrot.lane.b32.xlu0 %v582, 32
  %v597 = vpop.permute.xlu0 %596
  %v599 = vmul.f32 %v581, %v597
  %601 = vrot.lane.b32.xlu0 %v599, 32
  %v602 = vpop.permute.xlu0 %601
  %v604 = vadd.f32 %v594, %v602
  %v605 = vtanh.pop %v593
  %607 = vrot.lane.b32.xlu0 %v605, 32
  %v608 = vpop.permute.xlu0 %607
  %v610 = vmul.f32 %v574, %v608
  %v611 = vtanh.pop %v604
  %613 = vrot.lane.b32.xlu0 %v611, 32
  %v614 = vpop.permute.xlu0 %613
  %v616 = vmul.f32 %v581, %v614
  %v617 = vsel %vm250, 1, 0
  %618 = vset.pattern.permute.xlu0 0
  %619 = vperm.xlu0 %618, %v617
  %v620 = vpop.permute.xlu0 %619
  %vm621 = vcmp.eq.s32.totalorder %v620, 1
  %v622 = vsel %vm621, %v610, 0.0
  %v623 = vsel %vm621, %v593, 0.0
  %v624 = vsel %vm257, 1, 0
  %625 = vset.pattern.permute.xlu0 0
  %626 = vperm.xlu0 %625, %v624
  %v627 = vpop.permute.xlu0 %626
  %vm628 = vcmp.eq.s32.totalorder %v627, 1
  %v629 = vsel %vm628, %v616, 0.0
  %v630 = vsel %vm628, %v604, 0.0
  %632 = vrot.lane.b32.xlu0 %v622, 64
  %v633 = vpop.permute.xlu0 %632
  %v634 = vsel %vm278, %v633, 0
  %636 = vmatprep.subr.mxu0 0.0
  %637 = vmatpush1.msra.mxu0 0.0
  %638 = vmatprep.subr.mxu0 0.0
  %639 = vmatpush1.msra.mxu0 0.0
  %640 = vmatprep.subr.mxu0 0.0
  %641 = vmatpush1.msra.mxu0 0.0
  %642 = vmatprep.subr.mxu0 0.0
  %643 = vmatpush1.msra.mxu0 0.0
  %644 = vmatprep.subr.mxu0 0.0
  %645 = vmatpush1.msra.mxu0 0.0
  %646 = vmatprep.subr.mxu0 0.0
  %647 = vmatpush1.msra.mxu0 0.0
  %648 = vmatprep.subr.mxu0 0.0
  %649 = vmatpush1.msra.mxu0 0.0
  %650 = vmatprep.subr.mxu0 0.0
  %651 = vmatpush1.msra.mxu0 0.0
  %652 = vmatprep.subr.mxu0 0.0
  %653 = vmatpush1.msra.mxu0 0.0
  %654 = vmatprep.subr.mxu0 0.0
  %655 = vmatpush1.msra.mxu0 0.0
  %656 = vmatprep.subr.mxu0 0.0
  %657 = vmatpush1.msra.mxu0 0.0
  %658 = vmatprep.subr.mxu0 0.0
  %659 = vmatpush1.msra.mxu0 0.0
  %660 = vmatprep.subr.mxu0 0.0
  %661 = vmatpush1.msra.mxu0 %v419
  %662 = vmatprep.subr.mxu0 0.0
  %663 = vmatpush1.msra.mxu0 %v418
  %664 = vmatprep.subr.mxu0 0.0
  %665 = vmatpush1.msra.mxu0 %v417
  %666 = vmatprep.subr.mxu0 0.0
  %667 = vmatpush1.msra.mxu0 %v416
  %668 = vmatprep.subr.mxu0 0.0
  %669 = vmatpush2.msra.mxu0 0.0
  %670 = vmatprep.subr.mxu0 0.0
  %671 = vmatpush2.msra.mxu0 0.0
  %672 = vmatprep.subr.mxu0 0.0
  %673 = vmatpush2.msra.mxu0 0.0
  %674 = vmatprep.subr.mxu0 0.0
  %675 = vmatpush2.msra.mxu0 0.0
  %676 = vmatprep.subr.mxu0 0.0
  %677 = vmatpush2.msra.mxu0 0.0
  %678 = vmatprep.subr.mxu0 0.0
  %679 = vmatpush2.msra.mxu0 0.0
  %680 = vmatprep.subr.mxu0 0.0
  %681 = vmatpush2.msra.mxu0 0.0
  %682 = vmatprep.subr.mxu0 0.0
  %683 = vmatpush2.msra.mxu0 0.0
  %684 = vmatprep.subr.mxu0 0.0
  %685 = vmatpush2.msra.mxu0 0.0
  %686 = vmatprep.subr.mxu0 0.0
  %687 = vmatpush2.msra.mxu0 0.0
  %688 = vmatprep.subr.mxu0 0.0
  %689 = vmatpush2.msra.mxu0 0.0
  %690 = vmatprep.subr.mxu0 0.0
  %691 = vmatpush2.msra.mxu0 0.0
  %692 = vmatprep.subr.mxu0 0.0
  %693 = vmatpush2.msra.mxu0 0.0
  %694 = vmatprep.subr.mxu0 0.0
  %695 = vmatpush2.msra.mxu0 0.0
  %696 = vmatprep.subr.mxu0 0.0
  %697 = vmatpush2.msra.mxu0 0.0
  %698 = vmatprep.subr.mxu0 0.0
  %699 = vmatpush2.msra.mxu0 0.0
  %700 = vmatprep.mubr.f32.mxu0 0.0
  %701 = vmatmul.mubr.f32.gmra.mxu0 %v634
  %v702 = vpop.f32.mrf.mxu0
  %v703 = vadd.f32 0.0, %v702
  %v704 = vpop.f32.mrf.mxu0
  %705 = vdwg.mxu0
  %v706 = vadd.f32 %v376, %v703
  %708 = vrot.lane.b32.xlu0 %v629, 64
  %v709 = vpop.permute.xlu0 %708
  %v710 = vsel %vm278, %v709, 0
  %712 = vmatprep.subr.mxu0 0.0
  %713 = vmatpush1.msra.mxu0 0.0
  %714 = vmatprep.subr.mxu0 0.0
  %715 = vmatpush1.msra.mxu0 0.0
  %716 = vmatprep.subr.mxu0 0.0
  %717 = vmatpush1.msra.mxu0 0.0
  %718 = vmatprep.subr.mxu0 0.0
  %719 = vmatpush1.msra.mxu0 0.0
  %720 = vmatprep.subr.mxu0 0.0
  %721 = vmatpush1.msra.mxu0 0.0
  %722 = vmatprep.subr.mxu0 0.0
  %723 = vmatpush1.msra.mxu0 0.0
  %724 = vmatprep.subr.mxu0 0.0
  %725 = vmatpush1.msra.mxu0 0.0
  %726 = vmatprep.subr.mxu0 0.0
  %727 = vmatpush1.msra.mxu0 0.0
  %728 = vmatprep.subr.mxu0 0.0
  %729 = vmatpush1.msra.mxu0 0.0
  %730 = vmatprep.subr.mxu0 0.0
  %731 = vmatpush1.msra.mxu0 0.0
  %732 = vmatprep.subr.mxu0 0.0
  %733 = vmatpush1.msra.mxu0 0.0
  %734 = vmatprep.subr.mxu0 0.0
  %735 = vmatpush1.msra.mxu0 0.0
  %736 = vmatprep.subr.mxu0 0.0
  %737 = vmatpush1.msra.mxu0 %v423
  %738 = vmatprep.subr.mxu0 0.0
  %739 = vmatpush1.msra.mxu0 %v422
  %740 = vmatprep.subr.mxu0 0.0
  %741 = vmatpush1.msra.mxu0 %v421
  %742 = vmatprep.subr.mxu0 0.0
  %743 = vmatpush1.msra.mxu0 %v420
  %744 = vmatprep.subr.mxu0 0.0
  %745 = vmatpush2.msra.mxu0 0.0
  %746 = vmatprep.subr.mxu0 0.0
  %747 = vmatpush2.msra.mxu0 0.0
  %748 = vmatprep.subr.mxu0 0.0
  %749 = vmatpush2.msra.mxu0 0.0
  %750 = vmatprep.subr.mxu0 0.0
  %751 = vmatpush2.msra.mxu0 0.0
  %752 = vmatprep.subr.mxu0 0.0
  %753 = vmatpush2.msra.mxu0 0.0
  %754 = vmatprep.subr.mxu0 0.0
  %755 = vmatpush2.msra.mxu0 0.0
  %756 = vmatprep.subr.mxu0 0.0
  %757 = vmatpush2.msra.mxu0 0.0
  %758 = vmatprep.subr.mxu0 0.0
  %759 = vmatpush2.msra.mxu0 0.0
  %760 = vmatprep.subr.mxu0 0.0
  %761 = vmatpush2.msra.mxu0 0.0
  %762 = vmatprep.subr.mxu0 0.0
  %763 = vmatpush2.msra.mxu0 0.0
  %764 = vmatprep.subr.mxu0 0.0
  %765 = vmatpush2.msra.mxu0 0.0
  %766 = vmatprep.subr.mxu0 0.0
  %767 = vmatpush2.msra.mxu0 0.0
  %768 = vmatprep.subr.mxu0 0.0
  %769 = vmatpush2.msra.mxu0 0.0
  %770 = vmatprep.subr.mxu0 0.0
  %771 = vmatpush2.msra.mxu0 0.0
  %772 = vmatprep.subr.mxu0 0.0
  %773 = vmatpush2.msra.mxu0 0.0
  %774 = vmatprep.subr.mxu0 0.0
  %775 = vmatpush2.msra.mxu0 0.0
  %776 = vmatprep.mubr.f32.mxu0 0.0
  %777 = vmatmul.mubr.f32.gmra.mxu0 %v710
  %v778 = vpop.f32.mrf.mxu0
  %v779 = vadd.f32 0.0, %v778
  %v780 = vpop.f32.mrf.mxu0
  %781 = vdwg.mxu0
  %v782 = vadd.f32 %v408, %v779
  %v783 = vxor.u32 %v706, 2147483648
  %v784 = vmul.f32 %v783, 1.442695
  %v785 = vpow.pop %v784
  %v786 = vadd.f32 %v785, 1.0
  %v787 = vrcp.pop %v786
  %v788 = vmul.f32 1.0, %v787
  %v789 = vtanh.pop %v706
  %v790 = vxor.u32 %v782, 2147483648
  %v791 = vmul.f32 %v790, 1.442695
  %v792 = vpow.pop %v791
  %v793 = vadd.f32 %v792, 1.0
  %v794 = vrcp.pop %v793
  %v795 = vmul.f32 1.0, %v794
  %v796 = vtanh.pop %v782
  %v797 = vmul.f32 %v788, %v623
  %799 = vrot.lane.b32.xlu0 %v789, 32
  %v800 = vpop.permute.xlu0 %799
  %v802 = vmul.f32 %v788, %v800
  %804 = vrot.lane.b32.xlu0 %v802, 32
  %v805 = vpop.permute.xlu0 %804
  %v807 = vadd.f32 %v797, %v805
  %v808 = vmul.f32 %v795, %v630
  %810 = vrot.lane.b32.xlu0 %v796, 32
  %v811 = vpop.permute.xlu0 %810
  %v813 = vmul.f32 %v795, %v811
  %815 = vrot.lane.b32.xlu0 %v813, 32
  %v816 = vpop.permute.xlu0 %815
  %v818 = vadd.f32 %v808, %v816
  %v819 = vtanh.pop %v807
  %821 = vrot.lane.b32.xlu0 %v819, 32
  %v822 = vpop.permute.xlu0 %821
  %v824 = vmul.f32 %v788, %v822
  %v825 = vtanh.pop %v818
  %827 = vrot.lane.b32.xlu0 %v825, 32
  %v828 = vpop.permute.xlu0 %827
  %v830 = vmul.f32 %v795, %v828
  %v831 = vsel %vm251, 1, 0
  %832 = vset.pattern.permute.xlu0 0
  %833 = vperm.xlu0 %832, %v831
  %v834 = vpop.permute.xlu0 %833
  %vm835 = vcmp.eq.s32.totalorder %v834, 1
  %v836 = vsel %vm835, %v824, %v622
  %v837 = vsel %vm835, %v807, %v623
  %v838 = vsel %vm256, 1, 0
  %839 = vset.pattern.permute.xlu0 0
  %840 = vperm.xlu0 %839, %v838
  %v841 = vpop.permute.xlu0 %840
  %vm842 = vcmp.eq.s32.totalorder %v841, 1
  %v843 = vsel %vm842, %v830, %v629
  %v844 = vsel %vm842, %v818, %v630
  %v845 = vsel %vm835, %v824, 0.0
  %v846 = vsel %vm842, %v830, 0.0
  %848 = vrot.lane.b32.xlu0 %v836, 64
  %v849 = vpop.permute.xlu0 %848
  %v850 = vsel %vm278, %v849, 0
  %852 = vmatprep.subr.mxu0 0.0
  %853 = vmatpush1.msra.mxu0 0.0
  %854 = vmatprep.subr.mxu0 0.0
  %855 = vmatpush1.msra.mxu0 0.0
  %856 = vmatprep.subr.mxu0 0.0
  %857 = vmatpush1.msra.mxu0 0.0
  %858 = vmatprep.subr.mxu0 0.0
  %859 = vmatpush1.msra.mxu0 0.0
  %860 = vmatprep.subr.mxu0 0.0
  %861 = vmatpush1.msra.mxu0 0.0
  %862 = vmatprep.subr.mxu0 0.0
  %863 = vmatpush1.msra.mxu0 0.0
  %864 = vmatprep.subr.mxu0 0.0
  %865 = vmatpush1.msra.mxu0 0.0
  %866 = vmatprep.subr.mxu0 0.0
  %867 = vmatpush1.msra.mxu0 0.0
  %868 = vmatprep.subr.mxu0 0.0
  %869 = vmatpush1.msra.mxu0 0.0
  %870 = vmatprep.subr.mxu0 0.0
  %871 = vmatpush1.msra.mxu0 0.0
  %872 = vmatprep.subr.mxu0 0.0
  %873 = vmatpush1.msra.mxu0 0.0
  %874 = vmatprep.subr.mxu0 0.0
  %875 = vmatpush1.msra.mxu0 0.0
  %876 = vmatprep.subr.mxu0 0.0
  %877 = vmatpush1.msra.mxu0 %v419
  %878 = vmatprep.subr.mxu0 0.0
  %879 = vmatpush1.msra.mxu0 %v418
  %880 = vmatprep.subr.mxu0 0.0
  %881 = vmatpush1.msra.mxu0 %v417
  %882 = vmatprep.subr.mxu0 0.0
  %883 = vmatpush1.msra.mxu0 %v416
  %884 = vmatprep.subr.mxu0 0.0
  %885 = vmatpush2.msra.mxu0 0.0
  %886 = vmatprep.subr.mxu0 0.0
  %887 = vmatpush2.msra.mxu0 0.0
  %888 = vmatprep.subr.mxu0 0.0
  %889 = vmatpush2.msra.mxu0 0.0
  %890 = vmatprep.subr.mxu0 0.0
  %891 = vmatpush2.msra.mxu0 0.0
  %892 = vmatprep.subr.mxu0 0.0
  %893 = vmatpush2.msra.mxu0 0.0
  %894 = vmatprep.subr.mxu0 0.0
  %895 = vmatpush2.msra.mxu0 0.0
  %896 = vmatprep.subr.mxu0 0.0
  %897 = vmatpush2.msra.mxu0 0.0
  %898 = vmatprep.subr.mxu0 0.0
  %899 = vmatpush2.msra.mxu0 0.0
  %900 = vmatprep.subr.mxu0 0.0
  %901 = vmatpush2.msra.mxu0 0.0
  %902 = vmatprep.subr.mxu0 0.0
  %903 = vmatpush2.msra.mxu0 0.0
  %904 = vmatprep.subr.mxu0 0.0
  %905 = vmatpush2.msra.mxu0 0.0
  %906 = vmatprep.subr.mxu0 0.0
  %907 = vmatpush2.msra.mxu0 0.0
  %908 = vmatprep.subr.mxu0 0.0
  %909 = vmatpush2.msra.mxu0 0.0
  %910 = vmatprep.subr.mxu0 0.0
  %911 = vmatpush2.msra.mxu0 0.0
  %912 = vmatprep.subr.mxu0 0.0
  %913 = vmatpush2.msra.mxu0 0.0
  %914 = vmatprep.subr.mxu0 0.0
  %915 = vmatpush2.msra.mxu0 0.0
  %916 = vmatprep.mubr.f32.mxu0 0.0
  %917 = vmatmul.mubr.f32.gmra.mxu0 %v850
  %v918 = vpop.f32.mrf.mxu0
  %v919 = vadd.f32 0.0, %v918
  %v920 = vpop.f32.mrf.mxu0
  %921 = vdwg.mxu0
  %v922 = vadd.f32 %v382, %v919
  %924 = vrot.lane.b32.xlu0 %v843, 64
  %v925 = vpop.permute.xlu0 %924
  %v926 = vsel %vm278, %v925, 0
  %928 = vmatprep.subr.mxu0 0.0
  %929 = vmatpush1.msra.mxu0 0.0
  %930 = vmatprep.subr.mxu0 0.0
  %931 = vmatpush1.msra.mxu0 0.0
  %932 = vmatprep.subr.mxu0 0.0
  %933 = vmatpush1.msra.mxu0 0.0
  %934 = vmatprep.subr.mxu0 0.0
  %935 = vmatpush1.msra.mxu0 0.0
  %936 = vmatprep.subr.mxu0 0.0
  %937 = vmatpush1.msra.mxu0 0.0
  %938 = vmatprep.subr.mxu0 0.0
  %939 = vmatpush1.msra.mxu0 0.0
  %940 = vmatprep.subr.mxu0 0.0
  %941 = vmatpush1.msra.mxu0 0.0
  %942 = vmatprep.subr.mxu0 0.0
  %943 = vmatpush1.msra.mxu0 0.0
  %944 = vmatprep.subr.mxu0 0.0
  %945 = vmatpush1.msra.mxu0 0.0
  %946 = vmatprep.subr.mxu0 0.0
  %947 = vmatpush1.msra.mxu0 0.0
  %948 = vmatprep.subr.mxu0 0.0
  %949 = vmatpush1.msra.mxu0 0.0
  %950 = vmatprep.subr.mxu0 0.0
  %951 = vmatpush1.msra.mxu0 0.0
  %952 = vmatprep.subr.mxu0 0.0
  %953 = vmatpush1.msra.mxu0 %v423
  %954 = vmatprep.subr.mxu0 0.0
  %955 = vmatpush1.msra.mxu0 %v422
  %956 = vmatprep.subr.mxu0 0.0
  %957 = vmatpush1.msra.mxu0 %v421
  %958 = vmatprep.subr.mxu0 0.0
  %959 = vmatpush1.msra.mxu0 %v420
  %960 = vmatprep.subr.mxu0 0.0
  %961 = vmatpush2.msra.mxu0 0.0
  %962 = vmatprep.subr.mxu0 0.0
  %963 = vmatpush2.msra.mxu0 0.0
  %964 = vmatprep.subr.mxu0 0.0
  %965 = vmatpush2.msra.mxu0 0.0
  %966 = vmatprep.subr.mxu0 0.0
  %967 = vmatpush2.msra.mxu0 0.0
  %968 = vmatprep.subr.mxu0 0.0
  %969 = vmatpush2.msra.mxu0 0.0
  %970 = vmatprep.subr.mxu0 0.0
  %971 = vmatpush2.msra.mxu0 0.0
  %972 = vmatprep.subr.mxu0 0.0
  %973 = vmatpush2.msra.mxu0 0.0
  %974 = vmatprep.subr.mxu0 0.0
  %975 = vmatpush2.msra.mxu0 0.0
  %976 = vmatprep.subr.mxu0 0.0
  %977 = vmatpush2.msra.mxu0 0.0
  %978 = vmatprep.subr.mxu0 0.0
  %979 = vmatpush2.msra.mxu0 0.0
  %980 = vmatprep.subr.mxu0 0.0
  %981 = vmatpush2.msra.mxu0 0.0
  %982 = vmatprep.subr.mxu0 0.0
  %983 = vmatpush2.msra.mxu0 0.0
  %984 = vmatprep.subr.mxu0 0.0
  %985 = vmatpush2.msra.mxu0 0.0
  %986 = vmatprep.subr.mxu0 0.0
  %987 = vmatpush2.msra.mxu0 0.0
  %988 = vmatprep.subr.mxu0 0.0
  %989 = vmatpush2.msra.mxu0 0.0
  %990 = vmatprep.subr.mxu0 0.0
  %991 = vmatpush2.msra.mxu0 0.0
  %992 = vmatprep.mubr.f32.mxu0 0.0
  %993 = vmatmul.mubr.f32.gmra.mxu0 %v926
  %v994 = vpop.f32.mrf.mxu0
  %v995 = vadd.f32 0.0, %v994
  %v996 = vpop.f32.mrf.mxu0
  %997 = vdwg.mxu0
  %v998 = vadd.f32 %v402, %v995
  %v999 = vxor.u32 %v922, 2147483648
  %v1000 = vmul.f32 %v999, 1.442695
  %v1001 = vpow.pop %v1000
  %v1002 = vadd.f32 %v1001, 1.0
  %v1003 = vrcp.pop %v1002
  %v1004 = vmul.f32 1.0, %v1003
  %v1005 = vtanh.pop %v922
  %v1006 = vxor.u32 %v998, 2147483648
  %v1007 = vmul.f32 %v1006, 1.442695
  %v1008 = vpow.pop %v1007
  %v1009 = vadd.f32 %v1008, 1.0
  %v1010 = vrcp.pop %v1009
  %v1011 = vmul.f32 1.0, %v1010
  %v1012 = vtanh.pop %v998
  %v1013 = vmul.f32 %v1004, %v837
  %1015 = vrot.lane.b32.xlu0 %v1005, 32
  %v1016 = vpop.permute.xlu0 %1015
  %v1018 = vmul.f32 %v1004, %v1016
  %1020 = vrot.lane.b32.xlu0 %v1018, 32
  %v1021 = vpop.permute.xlu0 %1020
  %v1023 = vadd.f32 %v1013, %v1021
  %v1024 = vmul.f32 %v1011, %v844
  %1026 = vrot.lane.b32.xlu0 %v1012, 32
  %v1027 = vpop.permute.xlu0 %1026
  %v1029 = vmul.f32 %v1011, %v1027
  %1031 = vrot.lane.b32.xlu0 %v1029, 32
  %v1032 = vpop.permute.xlu0 %1031
  %v1034 = vadd.f32 %v1024, %v1032
  %v1035 = vtanh.pop %v1023
  %1037 = vrot.lane.b32.xlu0 %v1035, 32
  %v1038 = vpop.permute.xlu0 %1037
  %v1040 = vmul.f32 %v1004, %v1038
  %v1041 = vtanh.pop %v1034
  %1043 = vrot.lane.b32.xlu0 %v1041, 32
  %v1044 = vpop.permute.xlu0 %1043
  %v1046 = vmul.f32 %v1011, %v1044
  %v1047 = vsel %vm252, 1, 0
  %1048 = vset.pattern.permute.xlu0 0
  %1049 = vperm.xlu0 %1048, %v1047
  %v1050 = vpop.permute.xlu0 %1049
  %vm1051 = vcmp.eq.s32.totalorder %v1050, 1
  %v1052 = vsel %vm1051, %v1040, %v836
  %v1053 = vsel %vm1051, %v1023, %v837
  %v1054 = vsel %vm255, 1, 0
  %1055 = vset.pattern.permute.xlu0 0
  %1056 = vperm.xlu0 %1055, %v1054
  %v1057 = vpop.permute.xlu0 %1056
  %vm1058 = vcmp.eq.s32.totalorder %v1057, 1
  %v1059 = vsel %vm1058, %v1046, %v843
  %v1060 = vsel %vm1058, %v1034, %v844
  %v1061 = vsel %vm1051, %v1040, 0.0
  %v1062 = vsel %vm1058, %v1046, 0.0
  %1064 = vrot.lane.b32.xlu0 %v1052, 64
  %v1065 = vpop.permute.xlu0 %1064
  %v1066 = vsel %vm278, %v1065, 0
  %1068 = vmatprep.subr.mxu0 0.0
  %1069 = vmatpush1.msra.mxu0 0.0
  %1070 = vmatprep.subr.mxu0 0.0
  %1071 = vmatpush1.msra.mxu0 0.0
  %1072 = vmatprep.subr.mxu0 0.0
  %1073 = vmatpush1.msra.mxu0 0.0
  %1074 = vmatprep.subr.mxu0 0.0
  %1075 = vmatpush1.msra.mxu0 0.0
  %1076 = vmatprep.subr.mxu0 0.0
  %1077 = vmatpush1.msra.mxu0 0.0
  %1078 = vmatprep.subr.mxu0 0.0
  %1079 = vmatpush1.msra.mxu0 0.0
  %1080 = vmatprep.subr.mxu0 0.0
  %1081 = vmatpush1.msra.mxu0 0.0
  %1082 = vmatprep.subr.mxu0 0.0
  %1083 = vmatpush1.msra.mxu0 0.0
  %1084 = vmatprep.subr.mxu0 0.0
  %1085 = vmatpush1.msra.mxu0 0.0
  %1086 = vmatprep.subr.mxu0 0.0
  %1087 = vmatpush1.msra.mxu0 0.0
  %1088 = vmatprep.subr.mxu0 0.0
  %1089 = vmatpush1.msra.mxu0 0.0
  %1090 = vmatprep.subr.mxu0 0.0
  %1091 = vmatpush1.msra.mxu0 0.0
  %1092 = vmatprep.subr.mxu0 0.0
  %1093 = vmatpush1.msra.mxu0 %v419
  %1094 = vmatprep.subr.mxu0 0.0
  %1095 = vmatpush1.msra.mxu0 %v418
  %1096 = vmatprep.subr.mxu0 0.0
  %1097 = vmatpush1.msra.mxu0 %v417
  %1098 = vmatprep.subr.mxu0 0.0
  %1099 = vmatpush1.msra.mxu0 %v416
  %1100 = vmatprep.subr.mxu0 0.0
  %1101 = vmatpush2.msra.mxu0 0.0
  %1102 = vmatprep.subr.mxu0 0.0
  %1103 = vmatpush2.msra.mxu0 0.0
  %1104 = vmatprep.subr.mxu0 0.0
  %1105 = vmatpush2.msra.mxu0 0.0
  %1106 = vmatprep.subr.mxu0 0.0
  %1107 = vmatpush2.msra.mxu0 0.0
  %1108 = vmatprep.subr.mxu0 0.0
  %1109 = vmatpush2.msra.mxu0 0.0
  %1110 = vmatprep.subr.mxu0 0.0
  %1111 = vmatpush2.msra.mxu0 0.0
  %1112 = vmatprep.subr.mxu0 0.0
  %1113 = vmatpush2.msra.mxu0 0.0
  %1114 = vmatprep.subr.mxu0 0.0
  %1115 = vmatpush2.msra.mxu0 0.0
  %1116 = vmatprep.subr.mxu0 0.0
  %1117 = vmatpush2.msra.mxu0 0.0
  %1118 = vmatprep.subr.mxu0 0.0
  %1119 = vmatpush2.msra.mxu0 0.0
  %1120 = vmatprep.subr.mxu0 0.0
  %1121 = vmatpush2.msra.mxu0 0.0
  %1122 = vmatprep.subr.mxu0 0.0
  %1123 = vmatpush2.msra.mxu0 0.0
  %1124 = vmatprep.subr.mxu0 0.0
  %1125 = vmatpush2.msra.mxu0 0.0
  %1126 = vmatprep.subr.mxu0 0.0
  %1127 = vmatpush2.msra.mxu0 0.0
  %1128 = vmatprep.subr.mxu0 0.0
  %1129 = vmatpush2.msra.mxu0 0.0
  %1130 = vmatprep.subr.mxu0 0.0
  %1131 = vmatpush2.msra.mxu0 0.0
  %1132 = vmatprep.mubr.f32.mxu0 0.0
  %1133 = vmatmul.mubr.f32.gmra.mxu0 %v1066
  %v1134 = vpop.f32.mrf.mxu0
  %v1135 = vadd.f32 0.0, %v1134
  %v1136 = vpop.f32.mrf.mxu0
  %1137 = vdwg.mxu0
  %v1138 = vadd.f32 %v388, %v1135
  %1140 = vrot.lane.b32.xlu0 %v1059, 64
  %v1141 = vpop.permute.xlu0 %1140
  %v1142 = vsel %vm278, %v1141, 0
  %1144 = vmatprep.subr.mxu0 0.0
  %1145 = vmatpush1.msra.mxu0 0.0
  %1146 = vmatprep.subr.mxu0 0.0
  %1147 = vmatpush1.msra.mxu0 0.0
  %1148 = vmatprep.subr.mxu0 0.0
  %1149 = vmatpush1.msra.mxu0 0.0
  %1150 = vmatprep.subr.mxu0 0.0
  %1151 = vmatpush1.msra.mxu0 0.0
  %1152 = vmatprep.subr.mxu0 0.0
  %1153 = vmatpush1.msra.mxu0 0.0
  %1154 = vmatprep.subr.mxu0 0.0
  %1155 = vmatpush1.msra.mxu0 0.0
  %1156 = vmatprep.subr.mxu0 0.0
  %1157 = vmatpush1.msra.mxu0 0.0
  %1158 = vmatprep.subr.mxu0 0.0
  %1159 = vmatpush1.msra.mxu0 0.0
  %1160 = vmatprep.subr.mxu0 0.0
  %1161 = vmatpush1.msra.mxu0 0.0
  %1162 = vmatprep.subr.mxu0 0.0
  %1163 = vmatpush1.msra.mxu0 0.0
  %1164 = vmatprep.subr.mxu0 0.0
  %1165 = vmatpush1.msra.mxu0 0.0
  %1166 = vmatprep.subr.mxu0 0.0
  %1167 = vmatpush1.msra.mxu0 0.0
  %1168 = vmatprep.subr.mxu0 0.0
  %1169 = vmatpush1.msra.mxu0 %v423
  %1170 = vmatprep.subr.mxu0 0.0
  %1171 = vmatpush1.msra.mxu0 %v422
  %1172 = vmatprep.subr.mxu0 0.0
  %1173 = vmatpush1.msra.mxu0 %v421
  %1174 = vmatprep.subr.mxu0 0.0
  %1175 = vmatpush1.msra.mxu0 %v420
  %1176 = vmatprep.subr.mxu0 0.0
  %1177 = vmatpush2.msra.mxu0 0.0
  %1178 = vmatprep.subr.mxu0 0.0
  %1179 = vmatpush2.msra.mxu0 0.0
  %1180 = vmatprep.subr.mxu0 0.0
  %1181 = vmatpush2.msra.mxu0 0.0
  %1182 = vmatprep.subr.mxu0 0.0
  %1183 = vmatpush2.msra.mxu0 0.0
  %1184 = vmatprep.subr.mxu0 0.0
  %1185 = vmatpush2.msra.mxu0 0.0
  %1186 = vmatprep.subr.mxu0 0.0
  %1187 = vmatpush2.msra.mxu0 0.0
  %1188 = vmatprep.subr.mxu0 0.0
  %1189 = vmatpush2.msra.mxu0 0.0
  %1190 = vmatprep.subr.mxu0 0.0
  %1191 = vmatpush2.msra.mxu0 0.0
  %1192 = vmatprep.subr.mxu0 0.0
  %1193 = vmatpush2.msra.mxu0 0.0
  %1194 = vmatprep.subr.mxu0 0.0
  %1195 = vmatpush2.msra.mxu0 0.0
  %1196 = vmatprep.subr.mxu0 0.0
  %1197 = vmatpush2.msra.mxu0 0.0
  %1198 = vmatprep.subr.mxu0 0.0
  %1199 = vmatpush2.msra.mxu0 0.0
  %1200 = vmatprep.subr.mxu0 0.0
  %1201 = vmatpush2.msra.mxu0 0.0
  %1202 = vmatprep.subr.mxu0 0.0
  %1203 = vmatpush2.msra.mxu0 0.0
  %1204 = vmatprep.subr.mxu0 0.0
  %1205 = vmatpush2.msra.mxu0 0.0
  %1206 = vmatprep.subr.mxu0 0.0
  %1207 = vmatpush2.msra.mxu0 0.0
  %1208 = vmatprep.mubr.f32.mxu0 0.0
  %1209 = vmatmul.mubr.f32.gmra.mxu0 %v1142
  %v1210 = vpop.f32.mrf.mxu0
  %v1211 = vadd.f32 0.0, %v1210
  %v1212 = vpop.f32.mrf.mxu0
  %1213 = vdwg.mxu0
  %v1214 = vadd.f32 %v396, %v1211
  %v1215 = vxor.u32 %v1138, 2147483648
  %v1216 = vmul.f32 %v1215, 1.442695
  %v1217 = vpow.pop %v1216
  %v1218 = vadd.f32 %v1217, 1.0
  %v1219 = vrcp.pop %v1218
  %v1220 = vmul.f32 1.0, %v1219
  %v1221 = vtanh.pop %v1138
  %v1222 = vxor.u32 %v1214, 2147483648
  %v1223 = vmul.f32 %v1222, 1.442695
  %v1224 = vpow.pop %v1223
  %v1225 = vadd.f32 %v1224, 1.0
  %v1226 = vrcp.pop %v1225
  %v1227 = vmul.f32 1.0, %v1226
  %v1228 = vtanh.pop %v1214
  %v1229 = vmul.f32 %v1220, %v1053
  %1231 = vrot.lane.b32.xlu0 %v1221, 32
  %v1232 = vpop.permute.xlu0 %1231
  %v1234 = vmul.f32 %v1220, %v1232
  %1236 = vrot.lane.b32.xlu0 %v1234, 32
  %v1237 = vpop.permute.xlu0 %1236
  %v1239 = vadd.f32 %v1229, %v1237
  %v1240 = vmul.f32 %v1227, %v1060
  %1242 = vrot.lane.b32.xlu0 %v1228, 32
  %v1243 = vpop.permute.xlu0 %1242
  %v1245 = vmul.f32 %v1227, %v1243
  %1247 = vrot.lane.b32.xlu0 %v1245, 32
  %v1248 = vpop.permute.xlu0 %1247
  %v1250 = vadd.f32 %v1240, %v1248
  %v1251 = vtanh.pop %v1239
  %1253 = vrot.lane.b32.xlu0 %v1251, 32
  %v1254 = vpop.permute.xlu0 %1253
  %v1256 = vmul.f32 %v1220, %v1254
  %v1257 = vtanh.pop %v1250
  %1259 = vrot.lane.b32.xlu0 %v1257, 32
  %v1260 = vpop.permute.xlu0 %1259
  %v1262 = vmul.f32 %v1227, %v1260
  %v1263 = vsel %vm253, 1, 0
  %1264 = vset.pattern.permute.xlu0 0
  %1265 = vperm.xlu0 %1264, %v1263
  %v1266 = vpop.permute.xlu0 %1265
  %vm1267 = vcmp.eq.s32.totalorder %v1266, 1
  %v1268 = vsel %vm1267, %v1256, %v1052
  %v1269 = vsel %vm1267, %v1239, %v1053
  %v1270 = vsel %vm254, 1, 0
  %1271 = vset.pattern.permute.xlu0 0
  %1272 = vperm.xlu0 %1271, %v1270
  %v1273 = vpop.permute.xlu0 %1272
  %vm1274 = vcmp.eq.s32.totalorder %v1273, 1
  %v1275 = vsel %vm1274, %v1262, %v1059
  %v1276 = vsel %vm1274, %v1250, %v1060
  %v1277 = vsel %vm1267, %v1256, 0.0
  %v1278 = vsel %vm1274, %v1262, 0.0
  %1280 = vrot.lane.b32.xlu0 %v1268, 64
  %v1281 = vpop.permute.xlu0 %1280
  %v1282 = vsel %vm278, %v1281, 0
  %1284 = vmatprep.subr.mxu0 0.0
  %1285 = vmatpush1.msra.mxu0 0.0
  %1286 = vmatprep.subr.mxu0 0.0
  %1287 = vmatpush1.msra.mxu0 0.0
  %1288 = vmatprep.subr.mxu0 0.0
  %1289 = vmatpush1.msra.mxu0 0.0
  %1290 = vmatprep.subr.mxu0 0.0
  %1291 = vmatpush1.msra.mxu0 0.0
  %1292 = vmatprep.subr.mxu0 0.0
  %1293 = vmatpush1.msra.mxu0 0.0
  %1294 = vmatprep.subr.mxu0 0.0
  %1295 = vmatpush1.msra.mxu0 0.0
  %1296 = vmatprep.subr.mxu0 0.0
  %1297 = vmatpush1.msra.mxu0 0.0
  %1298 = vmatprep.subr.mxu0 0.0
  %1299 = vmatpush1.msra.mxu0 0.0
  %1300 = vmatprep.subr.mxu0 0.0
  %1301 = vmatpush1.msra.mxu0 0.0
  %1302 = vmatprep.subr.mxu0 0.0
  %1303 = vmatpush1.msra.mxu0 0.0
  %1304 = vmatprep.subr.mxu0 0.0
  %1305 = vmatpush1.msra.mxu0 0.0
  %1306 = vmatprep.subr.mxu0 0.0
  %1307 = vmatpush1.msra.mxu0 0.0
  %1308 = vmatprep.subr.mxu0 0.0
  %1309 = vmatpush1.msra.mxu0 %v419
  %1310 = vmatprep.subr.mxu0 0.0
  %1311 = vmatpush1.msra.mxu0 %v418
  %1312 = vmatprep.subr.mxu0 0.0
  %1313 = vmatpush1.msra.mxu0 %v417
  %1314 = vmatprep.subr.mxu0 0.0
  %1315 = vmatpush1.msra.mxu0 %v416
  %1316 = vmatprep.subr.mxu0 0.0
  %1317 = vmatpush2.msra.mxu0 0.0
  %1318 = vmatprep.subr.mxu0 0.0
  %1319 = vmatpush2.msra.mxu0 0.0
  %1320 = vmatprep.subr.mxu0 0.0
  %1321 = vmatpush2.msra.mxu0 0.0
  %1322 = vmatprep.subr.mxu0 0.0
  %1323 = vmatpush2.msra.mxu0 0.0
  %1324 = vmatprep.subr.mxu0 0.0
  %1325 = vmatpush2.msra.mxu0 0.0
  %1326 = vmatprep.subr.mxu0 0.0
  %1327 = vmatpush2.msra.mxu0 0.0
  %1328 = vmatprep.subr.mxu0 0.0
  %1329 = vmatpush2.msra.mxu0 0.0
  %1330 = vmatprep.subr.mxu0 0.0
  %1331 = vmatpush2.msra.mxu0 0.0
  %1332 = vmatprep.subr.mxu0 0.0
  %1333 = vmatpush2.msra.mxu0 0.0
  %1334 = vmatprep.subr.mxu0 0.0
  %1335 = vmatpush2.msra.mxu0 0.0
  %1336 = vmatprep.subr.mxu0 0.0
  %1337 = vmatpush2.msra.mxu0 0.0
  %1338 = vmatprep.subr.mxu0 0.0
  %1339 = vmatpush2.msra.mxu0 0.0
  %1340 = vmatprep.subr.mxu0 0.0
  %1341 = vmatpush2.msra.mxu0 0.0
  %1342 = vmatprep.subr.mxu0 0.0
  %1343 = vmatpush2.msra.mxu0 0.0
  %1344 = vmatprep.subr.mxu0 0.0
  %1345 = vmatpush2.msra.mxu0 0.0
  %1346 = vmatprep.subr.mxu0 0.0
  %1347 = vmatpush2.msra.mxu0 0.0
  %1348 = vmatprep.mubr.f32.mxu0 0.0
  %1349 = vmatmul.mubr.f32.gmra.mxu0 %v1282
  %v1350 = vpop.f32.mrf.mxu0
  %v1351 = vadd.f32 0.0, %v1350
  %v1352 = vpop.f32.mrf.mxu0
  %1353 = vdwg.mxu0
  %v1354 = vadd.f32 %v394, %v1351
  %1356 = vrot.lane.b32.xlu0 %v1275, 64
  %v1357 = vpop.permute.xlu0 %1356
  %v1358 = vsel %vm278, %v1357, 0
  %1360 = vmatprep.subr.mxu0 0.0
  %1361 = vmatpush1.msra.mxu0 0.0
  %1362 = vmatprep.subr.mxu0 0.0
  %1363 = vmatpush1.msra.mxu0 0.0
  %1364 = vmatprep.subr.mxu0 0.0
  %1365 = vmatpush1.msra.mxu0 0.0
  %1366 = vmatprep.subr.mxu0 0.0
  %1367 = vmatpush1.msra.mxu0 0.0
  %1368 = vmatprep.subr.mxu0 0.0
  %1369 = vmatpush1.msra.mxu0 0.0
  %1370 = vmatprep.subr.mxu0 0.0
  %1371 = vmatpush1.msra.mxu0 0.0
  %1372 = vmatprep.subr.mxu0 0.0
  %1373 = vmatpush1.msra.mxu0 0.0
  %1374 = vmatprep.subr.mxu0 0.0
  %1375 = vmatpush1.msra.mxu0 0.0
  %1376 = vmatprep.subr.mxu0 0.0
  %1377 = vmatpush1.msra.mxu0 0.0
  %1378 = vmatprep.subr.mxu0 0.0
  %1379 = vmatpush1.msra.mxu0 0.0
  %1380 = vmatprep.subr.mxu0 0.0
  %1381 = vmatpush1.msra.mxu0 0.0
  %1382 = vmatprep.subr.mxu0 0.0
  %1383 = vmatpush1.msra.mxu0 0.0
  %1384 = vmatprep.subr.mxu0 0.0
  %1385 = vmatpush1.msra.mxu0 %v423
  %1386 = vmatprep.subr.mxu0 0.0
  %1387 = vmatpush1.msra.mxu0 %v422
  %1388 = vmatprep.subr.mxu0 0.0
  %1389 = vmatpush1.msra.mxu0 %v421
  %1390 = vmatprep.subr.mxu0 0.0
  %1391 = vmatpush1.msra.mxu0 %v420
  %1392 = vmatprep.subr.mxu0 0.0
  %1393 = vmatpush2.msra.mxu0 0.0
  %1394 = vmatprep.subr.mxu0 0.0
  %1395 = vmatpush2.msra.mxu0 0.0
  %1396 = vmatprep.subr.mxu0 0.0
  %1397 = vmatpush2.msra.mxu0 0.0
  %1398 = vmatprep.subr.mxu0 0.0
  %1399 = vmatpush2.msra.mxu0 0.0
  %1400 = vmatprep.subr.mxu0 0.0
  %1401 = vmatpush2.msra.mxu0 0.0
  %1402 = vmatprep.subr.mxu0 0.0
  %1403 = vmatpush2.msra.mxu0 0.0
  %1404 = vmatprep.subr.mxu0 0.0
  %1405 = vmatpush2.msra.mxu0 0.0
  %1406 = vmatprep.subr.mxu0 0.0
  %1407 = vmatpush2.msra.mxu0 0.0
  %1408 = vmatprep.subr.mxu0 0.0
  %1409 = vmatpush2.msra.mxu0 0.0
  %1410 = vmatprep.subr.mxu0 0.0
  %1411 = vmatpush2.msra.mxu0 0.0
  %1412 = vmatprep.subr.mxu0 0.0
  %1413 = vmatpush2.msra.mxu0 0.0
  %1414 = vmatprep.subr.mxu0 0.0
  %1415 = vmatpush2.msra.mxu0 0.0
  %1416 = vmatprep.subr.mxu0 0.0
  %1417 = vmatpush2.msra.mxu0 0.0
  %1418 = vmatprep.subr.mxu0 0.0
  %1419 = vmatpush2.msra.mxu0 0.0
  %1420 = vmatprep.subr.mxu0 0.0
  %1421 = vmatpush2.msra.mxu0 0.0
  %1422 = vmatprep.subr.mxu0 0.0
  %1423 = vmatpush2.msra.mxu0 0.0
  %1424 = vmatprep.mubr.f32.mxu0 0.0
  %1425 = vmatmul.mubr.f32.gmra.mxu0 %v1358
  %v1426 = vpop.f32.mrf.mxu0
  %v1427 = vadd.f32 0.0, %v1426
  %v1428 = vpop.f32.mrf.mxu0
  %1429 = vdwg.mxu0
  %v1430 = vadd.f32 %v390, %v1427
  %v1431 = vxor.u32 %v1354, 2147483648
  %v1432 = vmul.f32 %v1431, 1.442695
  %v1433 = vpow.pop %v1432
  %v1434 = vadd.f32 %v1433, 1.0
  %v1435 = vrcp.pop %v1434
  %v1436 = vmul.f32 1.0, %v1435
  %v1437 = vtanh.pop %v1354
  %v1438 = vxor.u32 %v1430, 2147483648
  %v1439 = vmul.f32 %v1438, 1.442695
  %v1440 = vpow.pop %v1439
  %v1441 = vadd.f32 %v1440, 1.0
  %v1442 = vrcp.pop %v1441
  %v1443 = vmul.f32 1.0, %v1442
  %v1444 = vtanh.pop %v1430
  %v1445 = vmul.f32 %v1436, %v1269
  %1447 = vrot.lane.b32.xlu0 %v1437, 32
  %v1448 = vpop.permute.xlu0 %1447
  %v1450 = vmul.f32 %v1436, %v1448
  %1452 = vrot.lane.b32.xlu0 %v1450, 32
  %v1453 = vpop.permute.xlu0 %1452
  %v1455 = vadd.f32 %v1445, %v1453
  %v1456 = vmul.f32 %v1443, %v1276
  %1458 = vrot.lane.b32.xlu0 %v1444, 32
  %v1459 = vpop.permute.xlu0 %1458
  %v1461 = vmul.f32 %v1443, %v1459
  %1463 = vrot.lane.b32.xlu0 %v1461, 32
  %v1464 = vpop.permute.xlu0 %1463
  %v1466 = vadd.f32 %v1456, %v1464
  %v1467 = vtanh.pop %v1455
  %1469 = vrot.lane.b32.xlu0 %v1467, 32
  %v1470 = vpop.permute.xlu0 %1469
  %v1472 = vmul.f32 %v1436, %v1470
  %v1473 = vtanh.pop %v1466
  %1475 = vrot.lane.b32.xlu0 %v1473, 32
  %v1476 = vpop.permute.xlu0 %1475
  %v1478 = vmul.f32 %v1443, %v1476
  %v1479 = vsel %vm1274, %v1472, %v1268
  %v1480 = vsel %vm1274, %v1455, %v1269
  %v1481 = vsel %vm1267, %v1478, %v1275
  %v1482 = vsel %vm1267, %v1466, %v1276
  %v1483 = vsel %vm1274, %v1472, 0.0
  %v1484 = vsel %vm1267, %v1478, 0.0
  %1486 = vrot.lane.b32.xlu0 %v1479, 64
  %v1487 = vpop.permute.xlu0 %1486
  %v1488 = vsel %vm278, %v1487, 0
  %1490 = vmatprep.subr.mxu0 0.0
  %1491 = vmatpush1.msra.mxu0 0.0
  %1492 = vmatprep.subr.mxu0 0.0
  %1493 = vmatpush1.msra.mxu0 0.0
  %1494 = vmatprep.subr.mxu0 0.0
  %1495 = vmatpush1.msra.mxu0 0.0
  %1496 = vmatprep.subr.mxu0 0.0
  %1497 = vmatpush1.msra.mxu0 0.0
  %1498 = vmatprep.subr.mxu0 0.0
  %1499 = vmatpush1.msra.mxu0 0.0
  %1500 = vmatprep.subr.mxu0 0.0
  %1501 = vmatpush1.msra.mxu0 0.0
  %1502 = vmatprep.subr.mxu0 0.0
  %1503 = vmatpush1.msra.mxu0 0.0
  %1504 = vmatprep.subr.mxu0 0.0
  %1505 = vmatpush1.msra.mxu0 0.0
  %1506 = vmatprep.subr.mxu0 0.0
  %1507 = vmatpush1.msra.mxu0 0.0
  %1508 = vmatprep.subr.mxu0 0.0
  %1509 = vmatpush1.msra.mxu0 0.0
  %1510 = vmatprep.subr.mxu0 0.0
  %1511 = vmatpush1.msra.mxu0 0.0
  %1512 = vmatprep.subr.mxu0 0.0
  %1513 = vmatpush1.msra.mxu0 0.0
  %1514 = vmatprep.subr.mxu0 0.0
  %1515 = vmatpush1.msra.mxu0 %v419
  %1516 = vmatprep.subr.mxu0 0.0
  %1517 = vmatpush1.msra.mxu0 %v418
  %1518 = vmatprep.subr.mxu0 0.0
  %1519 = vmatpush1.msra.mxu0 %v417
  %1520 = vmatprep.subr.mxu0 0.0
  %1521 = vmatpush1.msra.mxu0 %v416
  %1522 = vmatprep.subr.mxu0 0.0
  %1523 = vmatpush2.msra.mxu0 0.0
  %1524 = vmatprep.subr.mxu0 0.0
  %1525 = vmatpush2.msra.mxu0 0.0
  %1526 = vmatprep.subr.mxu0 0.0
  %1527 = vmatpush2.msra.mxu0 0.0
  %1528 = vmatprep.subr.mxu0 0.0
  %1529 = vmatpush2.msra.mxu0 0.0
  %1530 = vmatprep.subr.mxu0 0.0
  %1531 = vmatpush2.msra.mxu0 0.0
  %1532 = vmatprep.subr.mxu0 0.0
  %1533 = vmatpush2.msra.mxu0 0.0
  %1534 = vmatprep.subr.mxu0 0.0
  %1535 = vmatpush2.msra.mxu0 0.0
  %1536 = vmatprep.subr.mxu0 0.0
  %1537 = vmatpush2.msra.mxu0 0.0
  %1538 = vmatprep.subr.mxu0 0.0
  %1539 = vmatpush2.msra.mxu0 0.0
  %1540 = vmatprep.subr.mxu0 0.0
  %1541 = vmatpush2.msra.mxu0 0.0
  %1542 = vmatprep.subr.mxu0 0.0
  %1543 = vmatpush2.msra.mxu0 0.0
  %1544 = vmatprep.subr.mxu0 0.0
  %1545 = vmatpush2.msra.mxu0 0.0
  %1546 = vmatprep.subr.mxu0 0.0
  %1547 = vmatpush2.msra.mxu0 0.0
  %1548 = vmatprep.subr.mxu0 0.0
  %1549 = vmatpush2.msra.mxu0 0.0
  %1550 = vmatprep.subr.mxu0 0.0
  %1551 = vmatpush2.msra.mxu0 0.0
  %1552 = vmatprep.subr.mxu0 0.0
  %1553 = vmatpush2.msra.mxu0 0.0
  %1554 = vmatprep.mubr.f32.mxu0 0.0
  %1555 = vmatmul.mubr.f32.gmra.mxu0 %v1488
  %v1556 = vpop.f32.mrf.mxu0
  %v1557 = vadd.f32 0.0, %v1556
  %v1558 = vpop.f32.mrf.mxu0
  %1559 = vdwg.mxu0
  %v1560 = vadd.f32 %v400, %v1557
  %1562 = vrot.lane.b32.xlu0 %v1481, 64
  %v1563 = vpop.permute.xlu0 %1562
  %v1564 = vsel %vm278, %v1563, 0
  %1566 = vmatprep.subr.mxu0 0.0
  %1567 = vmatpush1.msra.mxu0 0.0
  %1568 = vmatprep.subr.mxu0 0.0
  %1569 = vmatpush1.msra.mxu0 0.0
  %1570 = vmatprep.subr.mxu0 0.0
  %1571 = vmatpush1.msra.mxu0 0.0
  %1572 = vmatprep.subr.mxu0 0.0
  %1573 = vmatpush1.msra.mxu0 0.0
  %1574 = vmatprep.subr.mxu0 0.0
  %1575 = vmatpush1.msra.mxu0 0.0
  %1576 = vmatprep.subr.mxu0 0.0
  %1577 = vmatpush1.msra.mxu0 0.0
  %1578 = vmatprep.subr.mxu0 0.0
  %1579 = vmatpush1.msra.mxu0 0.0
  %1580 = vmatprep.subr.mxu0 0.0
  %1581 = vmatpush1.msra.mxu0 0.0
  %1582 = vmatprep.subr.mxu0 0.0
  %1583 = vmatpush1.msra.mxu0 0.0
  %1584 = vmatprep.subr.mxu0 0.0
  %1585 = vmatpush1.msra.mxu0 0.0
  %1586 = vmatprep.subr.mxu0 0.0
  %1587 = vmatpush1.msra.mxu0 0.0
  %1588 = vmatprep.subr.mxu0 0.0
  %1589 = vmatpush1.msra.mxu0 0.0
  %1590 = vmatprep.subr.mxu0 0.0
  %1591 = vmatpush1.msra.mxu0 %v423
  %1592 = vmatprep.subr.mxu0 0.0
  %1593 = vmatpush1.msra.mxu0 %v422
  %1594 = vmatprep.subr.mxu0 0.0
  %1595 = vmatpush1.msra.mxu0 %v421
  %1596 = vmatprep.subr.mxu0 0.0
  %1597 = vmatpush1.msra.mxu0 %v420
  %1598 = vmatprep.subr.mxu0 0.0
  %1599 = vmatpush2.msra.mxu0 0.0
  %1600 = vmatprep.subr.mxu0 0.0
  %1601 = vmatpush2.msra.mxu0 0.0
  %1602 = vmatprep.subr.mxu0 0.0
  %1603 = vmatpush2.msra.mxu0 0.0
  %1604 = vmatprep.subr.mxu0 0.0
  %1605 = vmatpush2.msra.mxu0 0.0
  %1606 = vmatprep.subr.mxu0 0.0
  %1607 = vmatpush2.msra.mxu0 0.0
  %1608 = vmatprep.subr.mxu0 0.0
  %1609 = vmatpush2.msra.mxu0 0.0
  %1610 = vmatprep.subr.mxu0 0.0
  %1611 = vmatpush2.msra.mxu0 0.0
  %1612 = vmatprep.subr.mxu0 0.0
  %1613 = vmatpush2.msra.mxu0 0.0
  %1614 = vmatprep.subr.mxu0 0.0
  %1615 = vmatpush2.msra.mxu0 0.0
  %1616 = vmatprep.subr.mxu0 0.0
  %1617 = vmatpush2.msra.mxu0 0.0
  %1618 = vmatprep.subr.mxu0 0.0
  %1619 = vmatpush2.msra.mxu0 0.0
  %1620 = vmatprep.subr.mxu0 0.0
  %1621 = vmatpush2.msra.mxu0 0.0
  %1622 = vmatprep.subr.mxu0 0.0
  %1623 = vmatpush2.msra.mxu0 0.0
  %1624 = vmatprep.subr.mxu0 0.0
  %1625 = vmatpush2.msra.mxu0 0.0
  %1626 = vmatprep.subr.mxu0 0.0
  %1627 = vmatpush2.msra.mxu0 0.0
  %1628 = vmatprep.subr.mxu0 0.0
  %1629 = vmatpush2.msra.mxu0 0.0
  %1630 = vmatprep.mubr.f32.mxu0 0.0
  %1631 = vmatmul.mubr.f32.gmra.mxu0 %v1564
  %v1632 = vpop.f32.mrf.mxu0
  %v1633 = vadd.f32 0.0, %v1632
  %v1634 = vpop.f32.mrf.mxu0
  %1635 = vdwg.mxu0
  %v1636 = vadd.f32 %v384, %v1633
  %v1637 = vxor.u32 %v1560, 2147483648
  %v1638 = vmul.f32 %v1637, 1.442695
  %v1639 = vpow.pop %v1638
  %v1640 = vadd.f32 %v1639, 1.0
  %v1641 = vrcp.pop %v1640
  %v1642 = vmul.f32 1.0, %v1641
  %v1643 = vtanh.pop %v1560
  %v1644 = vxor.u32 %v1636, 2147483648
  %v1645 = vmul.f32 %v1644, 1.442695
  %v1646 = vpow.pop %v1645
  %v1647 = vadd.f32 %v1646, 1.0
  %v1648 = vrcp.pop %v1647
  %v1649 = vmul.f32 1.0, %v1648
  %v1650 = vtanh.pop %v1636
  %v1651 = vmul.f32 %v1642, %v1480
  %1653 = vrot.lane.b32.xlu0 %v1643, 32
  %v1654 = vpop.permute.xlu0 %1653
  %v1656 = vmul.f32 %v1642, %v1654
  %1658 = vrot.lane.b32.xlu0 %v1656, 32
  %v1659 = vpop.permute.xlu0 %1658
  %v1661 = vadd.f32 %v1651, %v1659
  %v1662 = vmul.f32 %v1649, %v1482
  %1664 = vrot.lane.b32.xlu0 %v1650, 32
  %v1665 = vpop.permute.xlu0 %1664
  %v1667 = vmul.f32 %v1649, %v1665
  %1669 = vrot.lane.b32.xlu0 %v1667, 32
  %v1670 = vpop.permute.xlu0 %1669
  %v1672 = vadd.f32 %v1662, %v1670
  %v1673 = vtanh.pop %v1661
  %1675 = vrot.lane.b32.xlu0 %v1673, 32
  %v1676 = vpop.permute.xlu0 %1675
  %v1678 = vmul.f32 %v1642, %v1676
  %v1679 = vtanh.pop %v1672
  %1681 = vrot.lane.b32.xlu0 %v1679, 32
  %v1682 = vpop.permute.xlu0 %1681
  %v1684 = vmul.f32 %v1649, %v1682
  %v1685 = vsel %vm1058, %v1678, %v1479
  %v1686 = vsel %vm1058, %v1661, %v1480
  %v1687 = vsel %vm1051, %v1684, %v1481
  %v1688 = vsel %vm1051, %v1672, %v1482
  %v1689 = vsel %vm1058, %v1678, 0.0
  %v1690 = vsel %vm1051, %v1684, 0.0
  %1692 = vrot.lane.b32.xlu0 %v1685, 64
  %v1693 = vpop.permute.xlu0 %1692
  %v1694 = vsel %vm278, %v1693, 0
  %1696 = vmatprep.subr.mxu0 0.0
  %1697 = vmatpush1.msra.mxu0 0.0
  %1698 = vmatprep.subr.mxu0 0.0
  %1699 = vmatpush1.msra.mxu0 0.0
  %1700 = vmatprep.subr.mxu0 0.0
  %1701 = vmatpush1.msra.mxu0 0.0
  %1702 = vmatprep.subr.mxu0 0.0
  %1703 = vmatpush1.msra.mxu0 0.0
  %1704 = vmatprep.subr.mxu0 0.0
  %1705 = vmatpush1.msra.mxu0 0.0
  %1706 = vmatprep.subr.mxu0 0.0
  %1707 = vmatpush1.msra.mxu0 0.0
  %1708 = vmatprep.subr.mxu0 0.0
  %1709 = vmatpush1.msra.mxu0 0.0
  %1710 = vmatprep.subr.mxu0 0.0
  %1711 = vmatpush1.msra.mxu0 0.0
  %1712 = vmatprep.subr.mxu0 0.0
  %1713 = vmatpush1.msra.mxu0 0.0
  %1714 = vmatprep.subr.mxu0 0.0
  %1715 = vmatpush1.msra.mxu0 0.0
  %1716 = vmatprep.subr.mxu0 0.0
  %1717 = vmatpush1.msra.mxu0 0.0
  %1718 = vmatprep.subr.mxu0 0.0
  %1719 = vmatpush1.msra.mxu0 0.0
  %1720 = vmatprep.subr.mxu0 0.0
  %1721 = vmatpush1.msra.mxu0 %v419
  %1722 = vmatprep.subr.mxu0 0.0
  %1723 = vmatpush1.msra.mxu0 %v418
  %1724 = vmatprep.subr.mxu0 0.0
  %1725 = vmatpush1.msra.mxu0 %v417
  %1726 = vmatprep.subr.mxu0 0.0
  %1727 = vmatpush1.msra.mxu0 %v416
  %1728 = vmatprep.subr.mxu0 0.0
  %1729 = vmatpush2.msra.mxu0 0.0
  %1730 = vmatprep.subr.mxu0 0.0
  %1731 = vmatpush2.msra.mxu0 0.0
  %1732 = vmatprep.subr.mxu0 0.0
  %1733 = vmatpush2.msra.mxu0 0.0
  %1734 = vmatprep.subr.mxu0 0.0
  %1735 = vmatpush2.msra.mxu0 0.0
  %1736 = vmatprep.subr.mxu0 0.0
  %1737 = vmatpush2.msra.mxu0 0.0
  %1738 = vmatprep.subr.mxu0 0.0
  %1739 = vmatpush2.msra.mxu0 0.0
  %1740 = vmatprep.subr.mxu0 0.0
  %1741 = vmatpush2.msra.mxu0 0.0
  %1742 = vmatprep.subr.mxu0 0.0
  %1743 = vmatpush2.msra.mxu0 0.0
  %1744 = vmatprep.subr.mxu0 0.0
  %1745 = vmatpush2.msra.mxu0 0.0
  %1746 = vmatprep.subr.mxu0 0.0
  %1747 = vmatpush2.msra.mxu0 0.0
  %1748 = vmatprep.subr.mxu0 0.0
  %1749 = vmatpush2.msra.mxu0 0.0
  %1750 = vmatprep.subr.mxu0 0.0
  %1751 = vmatpush2.msra.mxu0 0.0
  %1752 = vmatprep.subr.mxu0 0.0
  %1753 = vmatpush2.msra.mxu0 0.0
  %1754 = vmatprep.subr.mxu0 0.0
  %1755 = vmatpush2.msra.mxu0 0.0
  %1756 = vmatprep.subr.mxu0 0.0
  %1757 = vmatpush2.msra.mxu0 0.0
  %1758 = vmatprep.subr.mxu0 0.0
  %1759 = vmatpush2.msra.mxu0 0.0
  %1760 = vmatprep.mubr.f32.mxu0 0.0
  %1761 = vmatmul.mubr.f32.gmra.mxu0 %v1694
  %v1762 = vpop.f32.mrf.mxu0
  %v1763 = vadd.f32 0.0, %v1762
  %v1764 = vpop.f32.mrf.mxu0
  %1765 = vdwg.mxu0
  %v1766 = vadd.f32 %v406, %v1763
  %1768 = vrot.lane.b32.xlu0 %v1687, 64
  %v1769 = vpop.permute.xlu0 %1768
  %v1770 = vsel %vm278, %v1769, 0
  %1772 = vmatprep.subr.mxu0 0.0
  %1773 = vmatpush1.msra.mxu0 0.0
  %1774 = vmatprep.subr.mxu0 0.0
  %1775 = vmatpush1.msra.mxu0 0.0
  %1776 = vmatprep.subr.mxu0 0.0
  %1777 = vmatpush1.msra.mxu0 0.0
  %1778 = vmatprep.subr.mxu0 0.0
  %1779 = vmatpush1.msra.mxu0 0.0
  %1780 = vmatprep.subr.mxu0 0.0
  %1781 = vmatpush1.msra.mxu0 0.0
  %1782 = vmatprep.subr.mxu0 0.0
  %1783 = vmatpush1.msra.mxu0 0.0
  %1784 = vmatprep.subr.mxu0 0.0
  %1785 = vmatpush1.msra.mxu0 0.0
  %1786 = vmatprep.subr.mxu0 0.0
  %1787 = vmatpush1.msra.mxu0 0.0
  %1788 = vmatprep.subr.mxu0 0.0
  %1789 = vmatpush1.msra.mxu0 0.0
  %1790 = vmatprep.subr.mxu0 0.0
  %1791 = vmatpush1.msra.mxu0 0.0
  %1792 = vmatprep.subr.mxu0 0.0
  %1793 = vmatpush1.msra.mxu0 0.0
  %1794 = vmatprep.subr.mxu0 0.0
  %1795 = vmatpush1.msra.mxu0 0.0
  %1796 = vmatprep.subr.mxu0 0.0
  %1797 = vmatpush1.msra.mxu0 %v423
  %1798 = vmatprep.subr.mxu0 0.0
  %1799 = vmatpush1.msra.mxu0 %v422
  %1800 = vmatprep.subr.mxu0 0.0
  %1801 = vmatpush1.msra.mxu0 %v421
  %1802 = vmatprep.subr.mxu0 0.0
  %1803 = vmatpush1.msra.mxu0 %v420
  %1804 = vmatprep.subr.mxu0 0.0
  %1805 = vmatpush2.msra.mxu0 0.0
  %1806 = vmatprep.subr.mxu0 0.0
  %1807 = vmatpush2.msra.mxu0 0.0
  %1808 = vmatprep.subr.mxu0 0.0
  %1809 = vmatpush2.msra.mxu0 0.0
  %1810 = vmatprep.subr.mxu0 0.0
  %1811 = vmatpush2.msra.mxu0 0.0
  %1812 = vmatprep.subr.mxu0 0.0
  %1813 = vmatpush2.msra.mxu0 0.0
  %1814 = vmatprep.subr.mxu0 0.0
  %1815 = vmatpush2.msra.mxu0 0.0
  %1816 = vmatprep.subr.mxu0 0.0
  %1817 = vmatpush2.msra.mxu0 0.0
  %1818 = vmatprep.subr.mxu0 0.0
  %1819 = vmatpush2.msra.mxu0 0.0
  %1820 = vmatprep.subr.mxu0 0.0
  %1821 = vmatpush2.msra.mxu0 0.0
  %1822 = vmatprep.subr.mxu0 0.0
  %1823 = vmatpush2.msra.mxu0 0.0
  %1824 = vmatprep.subr.mxu0 0.0
  %1825 = vmatpush2.msra.mxu0 0.0
  %1826 = vmatprep.subr.mxu0 0.0
  %1827 = vmatpush2.msra.mxu0 0.0
  %1828 = vmatprep.subr.mxu0 0.0
  %1829 = vmatpush2.msra.mxu0 0.0
  %1830 = vmatprep.subr.mxu0 0.0
  %1831 = vmatpush2.msra.mxu0 0.0
  %1832 = vmatprep.subr.mxu0 0.0
  %1833 = vmatpush2.msra.mxu0 0.0
  %1834 = vmatprep.subr.mxu0 0.0
  %1835 = vmatpush2.msra.mxu0 0.0
  %1836 = vmatprep.mubr.f32.mxu0 0.0
  %1837 = vmatmul.mubr.f32.gmra.mxu0 %v1770
  %v1838 = vpop.f32.mrf.mxu0
  %v1839 = vadd.f32 0.0, %v1838
  %v1840 = vpop.f32.mrf.mxu0
  %1841 = vdwg.mxu0
  %v1842 = vadd.f32 %v378, %v1839
  %v1843 = vxor.u32 %v1766, 2147483648
  %v1844 = vmul.f32 %v1843, 1.442695
  %v1845 = vpow.pop %v1844
  %v1846 = vadd.f32 %v1845, 1.0
  %v1847 = vrcp.pop %v1846
  %v1848 = vmul.f32 1.0, %v1847
  %v1849 = vtanh.pop %v1766
  %v1850 = vxor.u32 %v1842, 2147483648
  %v1851 = vmul.f32 %v1850, 1.442695
  %v1852 = vpow.pop %v1851
  %v1853 = vadd.f32 %v1852, 1.0
  %v1854 = vrcp.pop %v1853
  %v1855 = vmul.f32 1.0, %v1854
  %v1856 = vtanh.pop %v1842
  %v1857 = vmul.f32 %v1848, %v1686
  %1859 = vrot.lane.b32.xlu0 %v1849, 32
  %v1860 = vpop.permute.xlu0 %1859
  %v1862 = vmul.f32 %v1848, %v1860
  %1864 = vrot.lane.b32.xlu0 %v1862, 32
  %v1865 = vpop.permute.xlu0 %1864
  %v1867 = vadd.f32 %v1857, %v1865
  %v1868 = vmul.f32 %v1855, %v1688
  %1870 = vrot.lane.b32.xlu0 %v1856, 32
  %v1871 = vpop.permute.xlu0 %1870
  %v1873 = vmul.f32 %v1855, %v1871
  %1875 = vrot.lane.b32.xlu0 %v1873, 32
  %v1876 = vpop.permute.xlu0 %1875
  %v1878 = vadd.f32 %v1868, %v1876
  %v1879 = vtanh.pop %v1867
  %1881 = vrot.lane.b32.xlu0 %v1879, 32
  %v1882 = vpop.permute.xlu0 %1881
  %v1884 = vmul.f32 %v1848, %v1882
  %v1885 = vtanh.pop %v1878
  %1887 = vrot.lane.b32.xlu0 %v1885, 32
  %v1888 = vpop.permute.xlu0 %1887
  %v1890 = vmul.f32 %v1855, %v1888
  %v1891 = vsel %vm842, %v1884, %v1685
  %v1892 = vsel %vm842, %v1867, %v1686
  %v1893 = vsel %vm835, %v1890, %v1687
  %v1894 = vsel %vm835, %v1878, %v1688
  %v1895 = vsel %vm842, %v1884, 0.0
  %v1896 = vsel %vm835, %v1890, 0.0
  %1898 = vrot.lane.b32.xlu0 %v1891, 64
  %v1899 = vpop.permute.xlu0 %1898
  %v1900 = vsel %vm278, %v1899, 0
  %1902 = vmatprep.subr.mxu0 0.0
  %1903 = vmatpush1.msra.mxu0 0.0
  %1904 = vmatprep.subr.mxu0 0.0
  %1905 = vmatpush1.msra.mxu0 0.0
  %1906 = vmatprep.subr.mxu0 0.0
  %1907 = vmatpush1.msra.mxu0 0.0
  %1908 = vmatprep.subr.mxu0 0.0
  %1909 = vmatpush1.msra.mxu0 0.0
  %1910 = vmatprep.subr.mxu0 0.0
  %1911 = vmatpush1.msra.mxu0 0.0
  %1912 = vmatprep.subr.mxu0 0.0
  %1913 = vmatpush1.msra.mxu0 0.0
  %1914 = vmatprep.subr.mxu0 0.0
  %1915 = vmatpush1.msra.mxu0 0.0
  %1916 = vmatprep.subr.mxu0 0.0
  %1917 = vmatpush1.msra.mxu0 0.0
  %1918 = vmatprep.subr.mxu0 0.0
  %1919 = vmatpush1.msra.mxu0 0.0
  %1920 = vmatprep.subr.mxu0 0.0
  %1921 = vmatpush1.msra.mxu0 0.0
  %1922 = vmatprep.subr.mxu0 0.0
  %1923 = vmatpush1.msra.mxu0 0.0
  %1924 = vmatprep.subr.mxu0 0.0
  %1925 = vmatpush1.msra.mxu0 0.0
  %1926 = vmatprep.subr.mxu0 0.0
  %1927 = vmatpush1.msra.mxu0 %v419
  %1928 = vmatprep.subr.mxu0 0.0
  %1929 = vmatpush1.msra.mxu0 %v418
  %1930 = vmatprep.subr.mxu0 0.0
  %1931 = vmatpush1.msra.mxu0 %v417
  %1932 = vmatprep.subr.mxu0 0.0
  %1933 = vmatpush1.msra.mxu0 %v416
  %1934 = vmatprep.subr.mxu0 0.0
  %1935 = vmatpush2.msra.mxu0 0.0
  %1936 = vmatprep.subr.mxu0 0.0
  %1937 = vmatpush2.msra.mxu0 0.0
  %1938 = vmatprep.subr.mxu0 0.0
  %1939 = vmatpush2.msra.mxu0 0.0
  %1940 = vmatprep.subr.mxu0 0.0
  %1941 = vmatpush2.msra.mxu0 0.0
  %1942 = vmatprep.subr.mxu0 0.0
  %1943 = vmatpush2.msra.mxu0 0.0
  %1944 = vmatprep.subr.mxu0 0.0
  %1945 = vmatpush2.msra.mxu0 0.0
  %1946 = vmatprep.subr.mxu0 0.0
  %1947 = vmatpush2.msra.mxu0 0.0
  %1948 = vmatprep.subr.mxu0 0.0
  %1949 = vmatpush2.msra.mxu0 0.0
  %1950 = vmatprep.subr.mxu0 0.0
  %1951 = vmatpush2.msra.mxu0 0.0
  %1952 = vmatprep.subr.mxu0 0.0
  %1953 = vmatpush2.msra.mxu0 0.0
  %1954 = vmatprep.subr.mxu0 0.0
  %1955 = vmatpush2.msra.mxu0 0.0
  %1956 = vmatprep.subr.mxu0 0.0
  %1957 = vmatpush2.msra.mxu0 0.0
  %1958 = vmatprep.subr.mxu0 0.0
  %1959 = vmatpush2.msra.mxu0 0.0
  %1960 = vmatprep.subr.mxu0 0.0
  %1961 = vmatpush2.msra.mxu0 0.0
  %1962 = vmatprep.subr.mxu0 0.0
  %1963 = vmatpush2.msra.mxu0 0.0
  %1964 = vmatprep.subr.mxu0 0.0
  %1965 = vmatpush2.msra.mxu0 0.0
  %1966 = vmatprep.mubr.f32.mxu0 0.0
  %1967 = vmatmul.mubr.f32.gmra.mxu0 %v1900
  %v1968 = vpop.f32.mrf.mxu0
  %v1969 = vadd.f32 0.0, %v1968
  %v1970 = vpop.f32.mrf.mxu0
  %1971 = vdwg.mxu0
  %v1972 = vadd.f32 %v412, %v1969
  %1974 = vrot.lane.b32.xlu0 %v1893, 64
  %v1975 = vpop.permute.xlu0 %1974
  %v1976 = vsel %vm278, %v1975, 0
  %1978 = vmatprep.subr.mxu0 0.0
  %1979 = vmatpush1.msra.mxu0 0.0
  %1980 = vmatprep.subr.mxu0 0.0
  %1981 = vmatpush1.msra.mxu0 0.0
  %1982 = vmatprep.subr.mxu0 0.0
  %1983 = vmatpush1.msra.mxu0 0.0
  %1984 = vmatprep.subr.mxu0 0.0
  %1985 = vmatpush1.msra.mxu0 0.0
  %1986 = vmatprep.subr.mxu0 0.0
  %1987 = vmatpush1.msra.mxu0 0.0
  %1988 = vmatprep.subr.mxu0 0.0
  %1989 = vmatpush1.msra.mxu0 0.0
  %1990 = vmatprep.subr.mxu0 0.0
  %1991 = vmatpush1.msra.mxu0 0.0
  %1992 = vmatprep.subr.mxu0 0.0
  %1993 = vmatpush1.msra.mxu0 0.0
  %1994 = vmatprep.subr.mxu0 0.0
  %1995 = vmatpush1.msra.mxu0 0.0
  %1996 = vmatprep.subr.mxu0 0.0
  %1997 = vmatpush1.msra.mxu0 0.0
  %1998 = vmatprep.subr.mxu0 0.0
  %1999 = vmatpush1.msra.mxu0 0.0
  %2000 = vmatprep.subr.mxu0 0.0
  %2001 = vmatpush1.msra.mxu0 0.0
  %2002 = vmatprep.subr.mxu0 0.0
  %2003 = vmatpush1.msra.mxu0 %v423
  %2004 = vmatprep.subr.mxu0 0.0
  %2005 = vmatpush1.msra.mxu0 %v422
  %2006 = vmatprep.subr.mxu0 0.0
  %2007 = vmatpush1.msra.mxu0 %v421
  %2008 = vmatprep.subr.mxu0 0.0
  %2009 = vmatpush1.msra.mxu0 %v420
  %2010 = vmatprep.subr.mxu0 0.0
  %2011 = vmatpush2.msra.mxu0 0.0
  %2012 = vmatprep.subr.mxu0 0.0
  %2013 = vmatpush2.msra.mxu0 0.0
  %2014 = vmatprep.subr.mxu0 0.0
  %2015 = vmatpush2.msra.mxu0 0.0
  %2016 = vmatprep.subr.mxu0 0.0
  %2017 = vmatpush2.msra.mxu0 0.0
  %2018 = vmatprep.subr.mxu0 0.0
  %2019 = vmatpush2.msra.mxu0 0.0
  %2020 = vmatprep.subr.mxu0 0.0
  %2021 = vmatpush2.msra.mxu0 0.0
  %2022 = vmatprep.subr.mxu0 0.0
  %2023 = vmatpush2.msra.mxu0 0.0
  %2024 = vmatprep.subr.mxu0 0.0
  %2025 = vmatpush2.msra.mxu0 0.0
  %2026 = vmatprep.subr.mxu0 0.0
  %2027 = vmatpush2.msra.mxu0 0.0
  %2028 = vmatprep.subr.mxu0 0.0
  %2029 = vmatpush2.msra.mxu0 0.0
  %2030 = vmatprep.subr.mxu0 0.0
  %2031 = vmatpush2.msra.mxu0 0.0
  %2032 = vmatprep.subr.mxu0 0.0
  %2033 = vmatpush2.msra.mxu0 0.0
  %2034 = vmatprep.subr.mxu0 0.0
  %2035 = vmatpush2.msra.mxu0 0.0
  %2036 = vmatprep.subr.mxu0 0.0
  %2037 = vmatpush2.msra.mxu0 0.0
  %2038 = vmatprep.subr.mxu0 0.0
  %2039 = vmatpush2.msra.mxu0 0.0
  %2040 = vmatprep.subr.mxu0 0.0
  %2041 = vmatpush2.msra.mxu0 0.0
  %2042 = vmatprep.mubr.f32.mxu0 0.0
  %2043 = vmatmul.mubr.f32.gmra.mxu0 %v1976
  %v2044 = vpop.f32.mrf.mxu0
  %v2045 = vadd.f32 0.0, %v2044
  %v2046 = vpop.f32.mrf.mxu0
  %2047 = vdwg.mxu0
  %v2048 = vadd.f32 %v372, %v2045
  %v2049 = vxor.u32 %v1972, 2147483648
  %v2050 = vmul.f32 %v2049, 1.442695
  %v2051 = vpow.pop %v2050
  %v2052 = vadd.f32 %v2051, 1.0
  %v2053 = vrcp.pop %v2052
  %v2054 = vmul.f32 1.0, %v2053
  %v2055 = vtanh.pop %v1972
  %v2056 = vxor.u32 %v2048, 2147483648
  %v2057 = vmul.f32 %v2056, 1.442695
  %v2058 = vpow.pop %v2057
  %v2059 = vadd.f32 %v2058, 1.0
  %v2060 = vrcp.pop %v2059
  %v2061 = vmul.f32 1.0, %v2060
  %v2062 = vtanh.pop %v2048
  %v2063 = vmul.f32 %v2054, %v1892
  %2065 = vrot.lane.b32.xlu0 %v2055, 32
  %v2066 = vpop.permute.xlu0 %2065
  %v2068 = vmul.f32 %v2054, %v2066
  %2070 = vrot.lane.b32.xlu0 %v2068, 32
  %v2071 = vpop.permute.xlu0 %2070
  %v2073 = vadd.f32 %v2063, %v2071
  %v2074 = vmul.f32 %v2061, %v1894
  %2076 = vrot.lane.b32.xlu0 %v2062, 32
  %v2077 = vpop.permute.xlu0 %2076
  %v2079 = vmul.f32 %v2061, %v2077
  %2081 = vrot.lane.b32.xlu0 %v2079, 32
  %v2082 = vpop.permute.xlu0 %2081
  %v2084 = vadd.f32 %v2074, %v2082
  %v2085 = vtanh.pop %v2073
  %2087 = vrot.lane.b32.xlu0 %v2085, 32
  %v2088 = vpop.permute.xlu0 %2087
  %v2090 = vmul.f32 %v2054, %v2088
  %v2091 = vtanh.pop %v2084
  %2093 = vrot.lane.b32.xlu0 %v2091, 32
  %v2094 = vpop.permute.xlu0 %2093
  %v2096 = vmul.f32 %v2061, %v2094
  %v2097 = vsel %vm628, %v2090, 0.0
  %v2098 = vsel %vm621, %v2096, 0.0
  %2101 = vrot.lane.b32.xlu0 %v2098, 96
  %v2102 = vpop.permute.xlu0 %2101
  %v2104 = vsel %vm278, %v633, %v2102
  %2106 = vrot.lane.b32.xlu0 %v845, 64
  %v2107 = vpop.permute.xlu0 %2106
  %2110 = vrot.lane.b32.xlu0 %v1896, 96
  %v2111 = vpop.permute.xlu0 %2110
  %v2113 = vsel %vm278, %v2107, %v2111
  %2115 = vrot.lane.b32.xlu0 %v1061, 64
  %v2116 = vpop.permute.xlu0 %2115
  %2119 = vrot.lane.b32.xlu0 %v1690, 96
  %v2120 = vpop.permute.xlu0 %2119
  %v2122 = vsel %vm278, %v2116, %v2120
  %2124 = vrot.lane.b32.xlu0 %v1277, 64
  %v2125 = vpop.permute.xlu0 %2124
  %2128 = vrot.lane.b32.xlu0 %v1484, 96
  %v2129 = vpop.permute.xlu0 %2128
  %v2131 = vsel %vm278, %v2125, %v2129
  %2133 = vrot.lane.b32.xlu0 %v1483, 64
  %v2134 = vpop.permute.xlu0 %2133
  %2137 = vrot.lane.b32.xlu0 %v1278, 96
  %v2138 = vpop.permute.xlu0 %2137
  %v2140 = vsel %vm278, %v2134, %v2138
  %2142 = vrot.lane.b32.xlu0 %v1689, 64
  %v2143 = vpop.permute.xlu0 %2142
  %2146 = vrot.lane.b32.xlu0 %v1062, 96
  %v2147 = vpop.permute.xlu0 %2146
  %v2149 = vsel %vm278, %v2143, %v2147
  %2151 = vrot.lane.b32.xlu0 %v1895, 64
  %v2152 = vpop.permute.xlu0 %2151
  %2155 = vrot.lane.b32.xlu0 %v846, 96
  %v2156 = vpop.permute.xlu0 %2155
  %v2158 = vsel %vm278, %v2152, %v2156
  %2160 = vrot.lane.b32.xlu0 %v2097, 64
  %v2161 = vpop.permute.xlu0 %2160
  %2163 = vrot.lane.b32.xlu0 %v629, 96
  %v2164 = vpop.permute.xlu0 %2163
  %v2166 = vsel %vm278, %v2161, %v2164
  %v2167 = vld [vmem:[%s7] sm:$0xff]
  %v2168 = vld [vmem:[%s7 + $0x8] sm:$0xff]
  %v2169 = vld [vmem:[%s7 + $0x10] sm:$0xff]
  %v2170 = vld [vmem:[%s7 + $0x18] sm:$0xff]
  %v2171 = vld [vmem:[%s7 + $0x20] sm:$0xff]
  %v2172 = vld [vmem:[%s7 + $0x28] sm:$0xff]
  %v2173 = vld [vmem:[%s7 + $0x30] sm:$0xff]
  %v2174 = vld [vmem:[%s7 + $0x38] sm:$0xff]
  %v2175 = vld [vmem:[%s7 + $0x40] sm:$0xff]
  %v2176 = vld [vmem:[%s7 + $0x48] sm:$0xff]
  %v2177 = vld [vmem:[%s7 + $0x50] sm:$0xff]
  %v2178 = vld [vmem:[%s7 + $0x58] sm:$0xff]
  %v2179 = vld [vmem:[%s7 + $0x60] sm:$0xff]
  %v2180 = vld [vmem:[%s7 + $0x68] sm:$0xff]
  %v2181 = vld [vmem:[%s7 + $0x70] sm:$0xff]
  %v2182 = vld [vmem:[%s7 + $0x78] sm:$0xff]
  %v2183 = vld [vmem:[%s10] sm:$0x3]
  %v2185 = vlaneseq
  %v2186 = vshrl.u32 %v2185, 7
  %v2187 = vsub.s32 0, %v2186
  %v2188 = vrot.slane %v2183, %v2187
  %v2189 = vlaneseq
  %v2190 = vshrl.u32 %v2189, 7
  %v2191 = vsub.s32 1, %v2190
  %v2192 = vrot.slane %v2183, %v2191
  %v2196 = vsel %vm119, %v2104, 0
  %v2199 = vsel %vm119, %v2113, 0
  %v2202 = vsel %vm119, %v2122, 0
  %v2205 = vsel %vm119, %v2131, 0
  %v2208 = vsel %vm119, %v2140, 0
  %v2211 = vsel %vm119, %v2149, 0
  %v2214 = vsel %vm119, %v2158, 0
  %v2217 = vsel %vm119, %v2166, 0
  %2219 = vmatprep.subr.mxu0 0.0
  %2220 = vmatpush1.msra.mxu0 0.0
  %2221 = vmatprep.subr.mxu0 0.0
  %2222 = vmatpush1.msra.mxu0 0.0
  %2223 = vmatprep.subr.mxu0 0.0
  %2224 = vmatpush1.msra.mxu0 0.0
  %2225 = vmatprep.subr.mxu0 0.0
  %2226 = vmatpush1.msra.mxu0 0.0
  %2227 = vmatprep.subr.mxu0 0.0
  %2228 = vmatpush1.msra.mxu0 0.0
  %2229 = vmatprep.subr.mxu0 0.0
  %2230 = vmatpush1.msra.mxu0 0.0
  %2231 = vmatprep.subr.mxu0 0.0
  %2232 = vmatpush1.msra.mxu0 0.0
  %2233 = vmatprep.subr.mxu0 0.0
  %2234 = vmatpush1.msra.mxu0 0.0
  %2235 = vmatprep.subr.mxu0 %v2182
  %2236 = vmatpush1.msra.mxu0 %v2181
  %2237 = vmatprep.subr.mxu0 %v2180
  %2238 = vmatpush1.msra.mxu0 %v2179
  %2239 = vmatprep.subr.mxu0 %v2178
  %2240 = vmatpush1.msra.mxu0 %v2177
  %2241 = vmatprep.subr.mxu0 %v2176
  %2242 = vmatpush1.msra.mxu0 %v2175
  %2243 = vmatprep.subr.mxu0 %v2174
  %2244 = vmatpush1.msra.mxu0 %v2173
  %2245 = vmatprep.subr.mxu0 %v2172
  %2246 = vmatpush1.msra.mxu0 %v2171
  %2247 = vmatprep.subr.mxu0 %v2170
  %2248 = vmatpush1.msra.mxu0 %v2169
  %2249 = vmatprep.subr.mxu0 %v2168
  %2250 = vmatpush1.msra.mxu0 %v2167
  %2251 = vmatprep.subr.mxu0 0.0
  %2252 = vmatpush2.msra.mxu0 0.0
  %2253 = vmatprep.subr.mxu0 0.0
  %2254 = vmatpush2.msra.mxu0 0.0
  %2255 = vmatprep.subr.mxu0 0.0
  %2256 = vmatpush2.msra.mxu0 0.0
  %2257 = vmatprep.subr.mxu0 0.0
  %2258 = vmatpush2.msra.mxu0 0.0
  %2259 = vmatprep.subr.mxu0 0.0
  %2260 = vmatpush2.msra.mxu0 0.0
  %2261 = vmatprep.subr.mxu0 0.0
  %2262 = vmatpush2.msra.mxu0 0.0
  %2263 = vmatprep.subr.mxu0 0.0
  %2264 = vmatpush2.msra.mxu0 0.0
  %2265 = vmatprep.subr.mxu0 0.0
  %2266 = vmatpush2.msra.mxu0 0.0
  %2267 = vmatprep.subr.mxu0 0.0
  %2268 = vmatpush2.msra.mxu0 0.0
  %2269 = vmatprep.subr.mxu0 0.0
  %2270 = vmatpush2.msra.mxu0 0.0
  %2271 = vmatprep.subr.mxu0 0.0
  %2272 = vmatpush2.msra.mxu0 0.0
  %2273 = vmatprep.subr.mxu0 0.0
  %2274 = vmatpush2.msra.mxu0 0.0
  %2275 = vmatprep.subr.mxu0 0.0
  %2276 = vmatpush2.msra.mxu0 0.0
  %2277 = vmatprep.subr.mxu0 0.0
  %2278 = vmatpush2.msra.mxu0 0.0
  %2279 = vmatprep.subr.mxu0 0.0
  %2280 = vmatpush2.msra.mxu0 0.0
  %2281 = vmatprep.subr.mxu0 0.0
  %2282 = vmatpush2.msra.mxu0 0.0
  %2283 = vmatprep.mubr.f32.mxu0 0.0
  %2284 = vmatmul.mubr.f32.gmra.mxu0 %v2196
  %v2285 = vpop.f32.mrf.mxu0
  %v2286 = vadd.f32 %v2188, %v2285
  %v2287 = vpop.f32.mrf.mxu0
  %v2288 = vadd.f32 %v2192, %v2287
  %2289 = vmatprep.mubr.f32.mxu0 0.0
  %2290 = vmatmul.mubr.f32.gmra.mxu0 %v2199
  %v2291 = vpop.f32.mrf.mxu0
  %v2292 = vadd.f32 %v2188, %v2291
  %v2293 = vpop.f32.mrf.mxu0
  %v2294 = vadd.f32 %v2192, %v2293
  %2295 = vmatprep.mubr.f32.mxu0 0.0
  %2296 = vmatmul.mubr.f32.gmra.mxu0 %v2202
  %v2297 = vpop.f32.mrf.mxu0
  %v2298 = vadd.f32 %v2188, %v2297
  %v2299 = vpop.f32.mrf.mxu0
  %v2300 = vadd.f32 %v2192, %v2299
  %2301 = vmatprep.mubr.f32.mxu0 0.0
  %2302 = vmatmul.mubr.f32.gmra.mxu0 %v2205
  %v2303 = vpop.f32.mrf.mxu0
  %v2304 = vadd.f32 %v2188, %v2303
  %v2305 = vpop.f32.mrf.mxu0
  %v2306 = vadd.f32 %v2192, %v2305
  %2307 = vmatprep.mubr.f32.mxu0 0.0
  %2308 = vmatmul.mubr.f32.gmra.mxu0 %v2208
  %v2309 = vpop.f32.mrf.mxu0
  %v2310 = vadd.f32 %v2188, %v2309
  %v2311 = vpop.f32.mrf.mxu0
  %v2312 = vadd.f32 %v2192, %v2311
  %2313 = vmatprep.mubr.f32.mxu0 0.0
  %2314 = vmatmul.mubr.f32.gmra.mxu0 %v2211
  %v2315 = vpop.f32.mrf.mxu0
  %v2316 = vadd.f32 %v2188, %v2315
  %v2317 = vpop.f32.mrf.mxu0
  %v2318 = vadd.f32 %v2192, %v2317
  %2319 = vmatprep.mubr.f32.mxu0 0.0
  %2320 = vmatmul.mubr.f32.gmra.mxu0 %v2214
  %v2321 = vpop.f32.mrf.mxu0
  %v2322 = vadd.f32 %v2188, %v2321
  %v2323 = vpop.f32.mrf.mxu0
  %v2324 = vadd.f32 %v2192, %v2323
  %2325 = vmatprep.mubr.f32.mxu0 0.0
  %2326 = vmatmul.mubr.f32.gmra.mxu0 %v2217
  %v2327 = vpop.f32.mrf.mxu0
  %v2328 = vadd.f32 %v2188, %v2327
  %v2329 = vpop.f32.mrf.mxu0
  %v2330 = vadd.f32 %v2192, %v2329
  %2331 = vdwg.mxu0
  %v2332 = vld [vmem:[%s8] sm:$0xff]
  %v2333 = vld [vmem:[%s8 + $0x8] sm:$0xff]
  %v2334 = vld [vmem:[%s8 + $0x10] sm:$0xff]
  %v2335 = vld [vmem:[%s8 + $0x18] sm:$0xff]
  %v2336 = vld [vmem:[%s9] sm:$0xff]
  %v2337 = vld [vmem:[%s9 + $0x8] sm:$0xff]
  %v2338 = vld [vmem:[%s9 + $0x10] sm:$0xff]
  %v2339 = vld [vmem:[%s9 + $0x18] sm:$0xff]
  %2340 = vmatprep.subr.mxu0 0.0
  %2341 = vmatpush1.msra.mxu0 0.0
  %2342 = vmatprep.subr.mxu0 0.0
  %2343 = vmatpush1.msra.mxu0 0.0
  %2344 = vmatprep.subr.mxu0 0.0
  %2345 = vmatpush1.msra.mxu0 0.0
  %2346 = vmatprep.subr.mxu0 0.0
  %2347 = vmatpush1.msra.mxu0 0.0
  %2348 = vmatprep.subr.mxu0 0.0
  %2349 = vmatpush1.msra.mxu0 0.0
  %2350 = vmatprep.subr.mxu0 0.0
  %2351 = vmatpush1.msra.mxu0 0.0
  %2352 = vmatprep.subr.mxu0 0.0
  %2353 = vmatpush1.msra.mxu0 0.0
  %2354 = vmatprep.subr.mxu0 0.0
  %2355 = vmatpush1.msra.mxu0 0.0
  %2356 = vmatprep.subr.mxu0 0.0
  %2357 = vmatpush1.msra.mxu0 0.0
  %2358 = vmatprep.subr.mxu0 0.0
  %2359 = vmatpush1.msra.mxu0 0.0
  %2360 = vmatprep.subr.mxu0 0.0
  %2361 = vmatpush1.msra.mxu0 0.0
  %2362 = vmatprep.subr.mxu0 0.0
  %2363 = vmatpush1.msra.mxu0 0.0
  %2364 = vmatprep.subr.mxu0 0.0
  %2365 = vmatpush1.msra.mxu0 %v2335
  %2366 = vmatprep.subr.mxu0 0.0
  %2367 = vmatpush1.msra.mxu0 %v2334
  %2368 = vmatprep.subr.mxu0 0.0
  %2369 = vmatpush1.msra.mxu0 %v2333
  %2370 = vmatprep.subr.mxu0 0.0
  %2371 = vmatpush1.msra.mxu0 %v2332
  %2372 = vmatprep.subr.mxu0 0.0
  %2373 = vmatpush2.msra.mxu0 0.0
  %2374 = vmatprep.subr.mxu0 0.0
  %2375 = vmatpush2.msra.mxu0 0.0
  %2376 = vmatprep.subr.mxu0 0.0
  %2377 = vmatpush2.msra.mxu0 0.0
  %2378 = vmatprep.subr.mxu0 0.0
  %2379 = vmatpush2.msra.mxu0 0.0
  %2380 = vmatprep.subr.mxu0 0.0
  %2381 = vmatpush2.msra.mxu0 0.0
  %2382 = vmatprep.subr.mxu0 0.0
  %2383 = vmatpush2.msra.mxu0 0.0
  %2384 = vmatprep.subr.mxu0 0.0
  %2385 = vmatpush2.msra.mxu0 0.0
  %2386 = vmatprep.subr.mxu0 0.0
  %2387 = vmatpush2.msra.mxu0 0.0
  %2388 = vmatprep.subr.mxu0 0.0
  %2389 = vmatpush2.msra.mxu0 0.0
  %2390 = vmatprep.subr.mxu0 0.0
  %2391 = vmatpush2.msra.mxu0 0.0
  %2392 = vmatprep.subr.mxu0 0.0
  %2393 = vmatpush2.msra.mxu0 0.0
  %2394 = vmatprep.subr.mxu0 0.0
  %2395 = vmatpush2.msra.mxu0 0.0
  %2396 = vmatprep.subr.mxu0 0.0
  %2397 = vmatpush2.msra.mxu0 0.0
  %2398 = vmatprep.subr.mxu0 0.0
  %2399 = vmatpush2.msra.mxu0 0.0
  %2400 = vmatprep.subr.mxu0 0.0
  %2401 = vmatpush2.msra.mxu0 0.0
  %2402 = vmatprep.subr.mxu0 0.0
  %2403 = vmatpush2.msra.mxu0 0.0
  %2404 = vmatprep.mubr.f32.mxu0 0.0
  %2405 = vmatmul.mubr.f32.gmra.mxu0 %v425
  %v2406 = vpop.f32.mrf.mxu0
  %v2407 = vadd.f32 0.0, %v2406
  %v2408 = vpop.f32.mrf.mxu0
  %2409 = vdwg.mxu0
  %v2410 = vadd.f32 %v2286, %v2407
  %2411 = vmatprep.subr.mxu0 0.0
  %2412 = vmatpush1.msra.mxu0 0.0
  %2413 = vmatprep.subr.mxu0 0.0
  %2414 = vmatpush1.msra.mxu0 0.0
  %2415 = vmatprep.subr.mxu0 0.0
  %2416 = vmatpush1.msra.mxu0 0.0
  %2417 = vmatprep.subr.mxu0 0.0
  %2418 = vmatpush1.msra.mxu0 0.0
  %2419 = vmatprep.subr.mxu0 0.0
  %2420 = vmatpush1.msra.mxu0 0.0
  %2421 = vmatprep.subr.mxu0 0.0
  %2422 = vmatpush1.msra.mxu0 0.0
  %2423 = vmatprep.subr.mxu0 0.0
  %2424 = vmatpush1.msra.mxu0 0.0
  %2425 = vmatprep.subr.mxu0 0.0
  %2426 = vmatpush1.msra.mxu0 0.0
  %2427 = vmatprep.subr.mxu0 0.0
  %2428 = vmatpush1.msra.mxu0 0.0
  %2429 = vmatprep.subr.mxu0 0.0
  %2430 = vmatpush1.msra.mxu0 0.0
  %2431 = vmatprep.subr.mxu0 0.0
  %2432 = vmatpush1.msra.mxu0 0.0
  %2433 = vmatprep.subr.mxu0 0.0
  %2434 = vmatpush1.msra.mxu0 0.0
  %2435 = vmatprep.subr.mxu0 0.0
  %2436 = vmatpush1.msra.mxu0 %v2339
  %2437 = vmatprep.subr.mxu0 0.0
  %2438 = vmatpush1.msra.mxu0 %v2338
  %2439 = vmatprep.subr.mxu0 0.0
  %2440 = vmatpush1.msra.mxu0 %v2337
  %2441 = vmatprep.subr.mxu0 0.0
  %2442 = vmatpush1.msra.mxu0 %v2336
  %2443 = vmatprep.subr.mxu0 0.0
  %2444 = vmatpush2.msra.mxu0 0.0
  %2445 = vmatprep.subr.mxu0 0.0
  %2446 = vmatpush2.msra.mxu0 0.0
  %2447 = vmatprep.subr.mxu0 0.0
  %2448 = vmatpush2.msra.mxu0 0.0
  %2449 = vmatprep.subr.mxu0 0.0
  %2450 = vmatpush2.msra.mxu0 0.0
  %2451 = vmatprep.subr.mxu0 0.0
  %2452 = vmatpush2.msra.mxu0 0.0
  %2453 = vmatprep.subr.mxu0 0.0
  %2454 = vmatpush2.msra.mxu0 0.0
  %2455 = vmatprep.subr.mxu0 0.0
  %2456 = vmatpush2.msra.mxu0 0.0
  %2457 = vmatprep.subr.mxu0 0.0
  %2458 = vmatpush2.msra.mxu0 0.0
  %2459 = vmatprep.subr.mxu0 0.0
  %2460 = vmatpush2.msra.mxu0 0.0
  %2461 = vmatprep.subr.mxu0 0.0
  %2462 = vmatpush2.msra.mxu0 0.0
  %2463 = vmatprep.subr.mxu0 0.0
  %2464 = vmatpush2.msra.mxu0 0.0
  %2465 = vmatprep.subr.mxu0 0.0
  %2466 = vmatpush2.msra.mxu0 0.0
  %2467 = vmatprep.subr.mxu0 0.0
  %2468 = vmatpush2.msra.mxu0 0.0
  %2469 = vmatprep.subr.mxu0 0.0
  %2470 = vmatpush2.msra.mxu0 0.0
  %2471 = vmatprep.subr.mxu0 0.0
  %2472 = vmatpush2.msra.mxu0 0.0
  %2473 = vmatprep.subr.mxu0 0.0
  %2474 = vmatpush2.msra.mxu0 0.0
  %2475 = vmatprep.mubr.f32.mxu0 0.0
  %2476 = vmatmul.mubr.f32.gmra.mxu0 %v425
  %v2477 = vpop.f32.mrf.mxu0
  %v2478 = vadd.f32 0.0, %v2477
  %v2479 = vpop.f32.mrf.mxu0
  %2480 = vdwg.mxu0
  %v2481 = vadd.f32 %v2330, %v2478
  %v2482 = vxor.u32 %v2410, 2147483648
  %v2483 = vmul.f32 %v2482, 1.442695
  %v2484 = vpow.pop %v2483
  %v2485 = vadd.f32 %v2484, 1.0
  %v2486 = vrcp.pop %v2485
  %v2487 = vmul.f32 1.0, %v2486
  %v2488 = vtanh.pop %v2410
  %v2489 = vxor.u32 %v2481, 2147483648
  %v2490 = vmul.f32 %v2489, 1.442695
  %v2491 = vpow.pop %v2490
  %v2492 = vadd.f32 %v2491, 1.0
  %v2493 = vrcp.pop %v2492
  %v2494 = vmul.f32 1.0, %v2493
  %v2495 = vtanh.pop %v2481
  %v2496 = vmul.f32 %v2487, 0.0
  %2498 = vrot.lane.b32.xlu0 %v2488, 32
  %v2499 = vpop.permute.xlu0 %2498
  %v2501 = vmul.f32 %v2487, %v2499
  %2503 = vrot.lane.b32.xlu0 %v2501, 32
  %v2504 = vpop.permute.xlu0 %2503
  %v2506 = vadd.f32 %v2496, %v2504
  %v2507 = vmul.f32 %v2494, 0.0
  %2509 = vrot.lane.b32.xlu0 %v2495, 32
  %v2510 = vpop.permute.xlu0 %2509
  %v2512 = vmul.f32 %v2494, %v2510
  %2514 = vrot.lane.b32.xlu0 %v2512, 32
  %v2515 = vpop.permute.xlu0 %2514
  %v2517 = vadd.f32 %v2507, %v2515
  %v2518 = vtanh.pop %v2506
  %2520 = vrot.lane.b32.xlu0 %v2518, 32
  %v2521 = vpop.permute.xlu0 %2520
  %v2523 = vmul.f32 %v2487, %v2521
  %v2524 = vtanh.pop %v2517
  %2526 = vrot.lane.b32.xlu0 %v2524, 32
  %v2527 = vpop.permute.xlu0 %2526
  %v2529 = vmul.f32 %v2494, %v2527
  %v2530 = vsel %vm621, %v2523, 0.0
  %v2531 = vsel %vm621, %v2506, 0.0
  %v2532 = vsel %vm628, %v2529, 0.0
  %v2533 = vsel %vm628, %v2517, 0.0
  %2535 = vrot.lane.b32.xlu0 %v2530, 64
  %v2536 = vpop.permute.xlu0 %2535
  %v2537 = vsel %vm278, %v2536, 0
  %2539 = vmatprep.subr.mxu0 0.0
  %2540 = vmatpush1.msra.mxu0 0.0
  %2541 = vmatprep.subr.mxu0 0.0
  %2542 = vmatpush1.msra.mxu0 0.0
  %2543 = vmatprep.subr.mxu0 0.0
  %2544 = vmatpush1.msra.mxu0 0.0
  %2545 = vmatprep.subr.mxu0 0.0
  %2546 = vmatpush1.msra.mxu0 0.0
  %2547 = vmatprep.subr.mxu0 0.0
  %2548 = vmatpush1.msra.mxu0 0.0
  %2549 = vmatprep.subr.mxu0 0.0
  %2550 = vmatpush1.msra.mxu0 0.0
  %2551 = vmatprep.subr.mxu0 0.0
  %2552 = vmatpush1.msra.mxu0 0.0
  %2553 = vmatprep.subr.mxu0 0.0
  %2554 = vmatpush1.msra.mxu0 0.0
  %2555 = vmatprep.subr.mxu0 0.0
  %2556 = vmatpush1.msra.mxu0 0.0
  %2557 = vmatprep.subr.mxu0 0.0
  %2558 = vmatpush1.msra.mxu0 0.0
  %2559 = vmatprep.subr.mxu0 0.0
  %2560 = vmatpush1.msra.mxu0 0.0
  %2561 = vmatprep.subr.mxu0 0.0
  %2562 = vmatpush1.msra.mxu0 0.0
  %2563 = vmatprep.subr.mxu0 0.0
  %2564 = vmatpush1.msra.mxu0 %v2335
  %2565 = vmatprep.subr.mxu0 0.0
  %2566 = vmatpush1.msra.mxu0 %v2334
  %2567 = vmatprep.subr.mxu0 0.0
  %2568 = vmatpush1.msra.mxu0 %v2333
  %2569 = vmatprep.subr.mxu0 0.0
  %2570 = vmatpush1.msra.mxu0 %v2332
  %2571 = vmatprep.subr.mxu0 0.0
  %2572 = vmatpush2.msra.mxu0 0.0
  %2573 = vmatprep.subr.mxu0 0.0
  %2574 = vmatpush2.msra.mxu0 0.0
  %2575 = vmatprep.subr.mxu0 0.0
  %2576 = vmatpush2.msra.mxu0 0.0
  %2577 = vmatprep.subr.mxu0 0.0
  %2578 = vmatpush2.msra.mxu0 0.0
  %2579 = vmatprep.subr.mxu0 0.0
  %2580 = vmatpush2.msra.mxu0 0.0
  %2581 = vmatprep.subr.mxu0 0.0
  %2582 = vmatpush2.msra.mxu0 0.0
  %2583 = vmatprep.subr.mxu0 0.0
  %2584 = vmatpush2.msra.mxu0 0.0
  %2585 = vmatprep.subr.mxu0 0.0
  %2586 = vmatpush2.msra.mxu0 0.0
  %2587 = vmatprep.subr.mxu0 0.0
  %2588 = vmatpush2.msra.mxu0 0.0
  %2589 = vmatprep.subr.mxu0 0.0
  %2590 = vmatpush2.msra.mxu0 0.0
  %2591 = vmatprep.subr.mxu0 0.0
  %2592 = vmatpush2.msra.mxu0 0.0
  %2593 = vmatprep.subr.mxu0 0.0
  %2594 = vmatpush2.msra.mxu0 0.0
  %2595 = vmatprep.subr.mxu0 0.0
  %2596 = vmatpush2.msra.mxu0 0.0
  %2597 = vmatprep.subr.mxu0 0.0
  %2598 = vmatpush2.msra.mxu0 0.0
  %2599 = vmatprep.subr.mxu0 0.0
  %2600 = vmatpush2.msra.mxu0 0.0
  %2601 = vmatprep.subr.mxu0 0.0
  %2602 = vmatpush2.msra.mxu0 0.0
  %2603 = vmatprep.mubr.f32.mxu0 0.0
  %2604 = vmatmul.mubr.f32.gmra.mxu0 %v2537
  %v2605 = vpop.f32.mrf.mxu0
  %v2606 = vadd.f32 0.0, %v2605
  %v2607 = vpop.f32.mrf.mxu0
  %2608 = vdwg.mxu0
  %v2609 = vadd.f32 %v2292, %v2606
  %2611 = vrot.lane.b32.xlu0 %v2532, 64
  %v2612 = vpop.permute.xlu0 %2611
  %v2613 = vsel %vm278, %v2612, 0
  %2615 = vmatprep.subr.mxu0 0.0
  %2616 = vmatpush1.msra.mxu0 0.0
  %2617 = vmatprep.subr.mxu0 0.0
  %2618 = vmatpush1.msra.mxu0 0.0
  %2619 = vmatprep.subr.mxu0 0.0
  %2620 = vmatpush1.msra.mxu0 0.0
  %2621 = vmatprep.subr.mxu0 0.0
  %2622 = vmatpush1.msra.mxu0 0.0
  %2623 = vmatprep.subr.mxu0 0.0
  %2624 = vmatpush1.msra.mxu0 0.0
  %2625 = vmatprep.subr.mxu0 0.0
  %2626 = vmatpush1.msra.mxu0 0.0
  %2627 = vmatprep.subr.mxu0 0.0
  %2628 = vmatpush1.msra.mxu0 0.0
  %2629 = vmatprep.subr.mxu0 0.0
  %2630 = vmatpush1.msra.mxu0 0.0
  %2631 = vmatprep.subr.mxu0 0.0
  %2632 = vmatpush1.msra.mxu0 0.0
  %2633 = vmatprep.subr.mxu0 0.0
  %2634 = vmatpush1.msra.mxu0 0.0
  %2635 = vmatprep.subr.mxu0 0.0
  %2636 = vmatpush1.msra.mxu0 0.0
  %2637 = vmatprep.subr.mxu0 0.0
  %2638 = vmatpush1.msra.mxu0 0.0
  %2639 = vmatprep.subr.mxu0 0.0
  %2640 = vmatpush1.msra.mxu0 %v2339
  %2641 = vmatprep.subr.mxu0 0.0
  %2642 = vmatpush1.msra.mxu0 %v2338
  %2643 = vmatprep.subr.mxu0 0.0
  %2644 = vmatpush1.msra.mxu0 %v2337
  %2645 = vmatprep.subr.mxu0 0.0
  %2646 = vmatpush1.msra.mxu0 %v2336
  %2647 = vmatprep.subr.mxu0 0.0
  %2648 = vmatpush2.msra.mxu0 0.0
  %2649 = vmatprep.subr.mxu0 0.0
  %2650 = vmatpush2.msra.mxu0 0.0
  %2651 = vmatprep.subr.mxu0 0.0
  %2652 = vmatpush2.msra.mxu0 0.0
  %2653 = vmatprep.subr.mxu0 0.0
  %2654 = vmatpush2.msra.mxu0 0.0
  %2655 = vmatprep.subr.mxu0 0.0
  %2656 = vmatpush2.msra.mxu0 0.0
  %2657 = vmatprep.subr.mxu0 0.0
  %2658 = vmatpush2.msra.mxu0 0.0
  %2659 = vmatprep.subr.mxu0 0.0
  %2660 = vmatpush2.msra.mxu0 0.0
  %2661 = vmatprep.subr.mxu0 0.0
  %2662 = vmatpush2.msra.mxu0 0.0
  %2663 = vmatprep.subr.mxu0 0.0
  %2664 = vmatpush2.msra.mxu0 0.0
  %2665 = vmatprep.subr.mxu0 0.0
  %2666 = vmatpush2.msra.mxu0 0.0
  %2667 = vmatprep.subr.mxu0 0.0
  %2668 = vmatpush2.msra.mxu0 0.0
  %2669 = vmatprep.subr.mxu0 0.0
  %2670 = vmatpush2.msra.mxu0 0.0
  %2671 = vmatprep.subr.mxu0 0.0
  %2672 = vmatpush2.msra.mxu0 0.0
  %2673 = vmatprep.subr.mxu0 0.0
  %2674 = vmatpush2.msra.mxu0 0.0
  %2675 = vmatprep.subr.mxu0 0.0
  %2676 = vmatpush2.msra.mxu0 0.0
  %2677 = vmatprep.subr.mxu0 0.0
  %2678 = vmatpush2.msra.mxu0 0.0
  %2679 = vmatprep.mubr.f32.mxu0 0.0
  %2680 = vmatmul.mubr.f32.gmra.mxu0 %v2613
  %v2681 = vpop.f32.mrf.mxu0
  %v2682 = vadd.f32 0.0, %v2681
  %v2683 = vpop.f32.mrf.mxu0
  %2684 = vdwg.mxu0
  %v2685 = vadd.f32 %v2324, %v2682
  %v2686 = vxor.u32 %v2609, 2147483648
  %v2687 = vmul.f32 %v2686, 1.442695
  %v2688 = vpow.pop %v2687
  %v2689 = vadd.f32 %v2688, 1.0
  %v2690 = vrcp.pop %v2689
  %v2691 = vmul.f32 1.0, %v2690
  %v2692 = vtanh.pop %v2609
  %v2693 = vxor.u32 %v2685, 2147483648
  %v2694 = vmul.f32 %v2693, 1.442695
  %v2695 = vpow.pop %v2694
  %v2696 = vadd.f32 %v2695, 1.0
  %v2697 = vrcp.pop %v2696
  %v2698 = vmul.f32 1.0, %v2697
  %v2699 = vtanh.pop %v2685
  %v2700 = vmul.f32 %v2691, %v2531
  %2702 = vrot.lane.b32.xlu0 %v2692, 32
  %v2703 = vpop.permute.xlu0 %2702
  %v2705 = vmul.f32 %v2691, %v2703
  %2707 = vrot.lane.b32.xlu0 %v2705, 32
  %v2708 = vpop.permute.xlu0 %2707
  %v2710 = vadd.f32 %v2700, %v2708
  %v2711 = vmul.f32 %v2698, %v2533
  %2713 = vrot.lane.b32.xlu0 %v2699, 32
  %v2714 = vpop.permute.xlu0 %2713
  %v2716 = vmul.f32 %v2698, %v2714
  %2718 = vrot.lane.b32.xlu0 %v2716, 32
  %v2719 = vpop.permute.xlu0 %2718
  %v2721 = vadd.f32 %v2711, %v2719
  %v2722 = vtanh.pop %v2710
  %2724 = vrot.lane.b32.xlu0 %v2722, 32
  %v2725 = vpop.permute.xlu0 %2724
  %v2727 = vmul.f32 %v2691, %v2725
  %v2728 = vtanh.pop %v2721
  %2730 = vrot.lane.b32.xlu0 %v2728, 32
  %v2731 = vpop.permute.xlu0 %2730
  %v2733 = vmul.f32 %v2698, %v2731
  %v2734 = vsel %vm835, %v2727, %v2530
  %v2735 = vsel %vm835, %v2710, %v2531
  %v2736 = vsel %vm842, %v2733, %v2532
  %v2737 = vsel %vm842, %v2721, %v2533
  %v2738 = vsel %vm835, %v2727, 0.0
  %v2739 = vsel %vm842, %v2733, 0.0
  %2741 = vrot.lane.b32.xlu0 %v2734, 64
  %v2742 = vpop.permute.xlu0 %2741
  %v2743 = vsel %vm278, %v2742, 0
  %2745 = vmatprep.subr.mxu0 0.0
  %2746 = vmatpush1.msra.mxu0 0.0
  %2747 = vmatprep.subr.mxu0 0.0
  %2748 = vmatpush1.msra.mxu0 0.0
  %2749 = vmatprep.subr.mxu0 0.0
  %2750 = vmatpush1.msra.mxu0 0.0
  %2751 = vmatprep.subr.mxu0 0.0
  %2752 = vmatpush1.msra.mxu0 0.0
  %2753 = vmatprep.subr.mxu0 0.0
  %2754 = vmatpush1.msra.mxu0 0.0
  %2755 = vmatprep.subr.mxu0 0.0
  %2756 = vmatpush1.msra.mxu0 0.0
  %2757 = vmatprep.subr.mxu0 0.0
  %2758 = vmatpush1.msra.mxu0 0.0
  %2759 = vmatprep.subr.mxu0 0.0
  %2760 = vmatpush1.msra.mxu0 0.0
  %2761 = vmatprep.subr.mxu0 0.0
  %2762 = vmatpush1.msra.mxu0 0.0
  %2763 = vmatprep.subr.mxu0 0.0
  %2764 = vmatpush1.msra.mxu0 0.0
  %2765 = vmatprep.subr.mxu0 0.0
  %2766 = vmatpush1.msra.mxu0 0.0
  %2767 = vmatprep.subr.mxu0 0.0
  %2768 = vmatpush1.msra.mxu0 0.0
  %2769 = vmatprep.subr.mxu0 0.0
  %2770 = vmatpush1.msra.mxu0 %v2335
  %2771 = vmatprep.subr.mxu0 0.0
  %2772 = vmatpush1.msra.mxu0 %v2334
  %2773 = vmatprep.subr.mxu0 0.0
  %2774 = vmatpush1.msra.mxu0 %v2333
  %2775 = vmatprep.subr.mxu0 0.0
  %2776 = vmatpush1.msra.mxu0 %v2332
  %2777 = vmatprep.subr.mxu0 0.0
  %2778 = vmatpush2.msra.mxu0 0.0
  %2779 = vmatprep.subr.mxu0 0.0
  %2780 = vmatpush2.msra.mxu0 0.0
  %2781 = vmatprep.subr.mxu0 0.0
  %2782 = vmatpush2.msra.mxu0 0.0
  %2783 = vmatprep.subr.mxu0 0.0
  %2784 = vmatpush2.msra.mxu0 0.0
  %2785 = vmatprep.subr.mxu0 0.0
  %2786 = vmatpush2.msra.mxu0 0.0
  %2787 = vmatprep.subr.mxu0 0.0
  %2788 = vmatpush2.msra.mxu0 0.0
  %2789 = vmatprep.subr.mxu0 0.0
  %2790 = vmatpush2.msra.mxu0 0.0
  %2791 = vmatprep.subr.mxu0 0.0
  %2792 = vmatpush2.msra.mxu0 0.0
  %2793 = vmatprep.subr.mxu0 0.0
  %2794 = vmatpush2.msra.mxu0 0.0
  %2795 = vmatprep.subr.mxu0 0.0
  %2796 = vmatpush2.msra.mxu0 0.0
  %2797 = vmatprep.subr.mxu0 0.0
  %2798 = vmatpush2.msra.mxu0 0.0
  %2799 = vmatprep.subr.mxu0 0.0
  %2800 = vmatpush2.msra.mxu0 0.0
  %2801 = vmatprep.subr.mxu0 0.0
  %2802 = vmatpush2.msra.mxu0 0.0
  %2803 = vmatprep.subr.mxu0 0.0
  %2804 = vmatpush2.msra.mxu0 0.0
  %2805 = vmatprep.subr.mxu0 0.0
  %2806 = vmatpush2.msra.mxu0 0.0
  %2807 = vmatprep.subr.mxu0 0.0
  %2808 = vmatpush2.msra.mxu0 0.0
  %2809 = vmatprep.mubr.f32.mxu0 0.0
  %2810 = vmatmul.mubr.f32.gmra.mxu0 %v2743
  %v2811 = vpop.f32.mrf.mxu0
  %v2812 = vadd.f32 0.0, %v2811
  %v2813 = vpop.f32.mrf.mxu0
  %2814 = vdwg.mxu0
  %v2815 = vadd.f32 %v2298, %v2812
  %2817 = vrot.lane.b32.xlu0 %v2736, 64
  %v2818 = vpop.permute.xlu0 %2817
  %v2819 = vsel %vm278, %v2818, 0
  %2821 = vmatprep.subr.mxu0 0.0
  %2822 = vmatpush1.msra.mxu0 0.0
  %2823 = vmatprep.subr.mxu0 0.0
  %2824 = vmatpush1.msra.mxu0 0.0
  %2825 = vmatprep.subr.mxu0 0.0
  %2826 = vmatpush1.msra.mxu0 0.0
  %2827 = vmatprep.subr.mxu0 0.0
  %2828 = vmatpush1.msra.mxu0 0.0
  %2829 = vmatprep.subr.mxu0 0.0
  %2830 = vmatpush1.msra.mxu0 0.0
  %2831 = vmatprep.subr.mxu0 0.0
  %2832 = vmatpush1.msra.mxu0 0.0
  %2833 = vmatprep.subr.mxu0 0.0
  %2834 = vmatpush1.msra.mxu0 0.0
  %2835 = vmatprep.subr.mxu0 0.0
  %2836 = vmatpush1.msra.mxu0 0.0
  %2837 = vmatprep.subr.mxu0 0.0
  %2838 = vmatpush1.msra.mxu0 0.0
  %2839 = vmatprep.subr.mxu0 0.0
  %2840 = vmatpush1.msra.mxu0 0.0
  %2841 = vmatprep.subr.mxu0 0.0
  %2842 = vmatpush1.msra.mxu0 0.0
  %2843 = vmatprep.subr.mxu0 0.0
  %2844 = vmatpush1.msra.mxu0 0.0
  %2845 = vmatprep.subr.mxu0 0.0
  %2846 = vmatpush1.msra.mxu0 %v2339
  %2847 = vmatprep.subr.mxu0 0.0
  %2848 = vmatpush1.msra.mxu0 %v2338
  %2849 = vmatprep.subr.mxu0 0.0
  %2850 = vmatpush1.msra.mxu0 %v2337
  %2851 = vmatprep.subr.mxu0 0.0
  %2852 = vmatpush1.msra.mxu0 %v2336
  %2853 = vmatprep.subr.mxu0 0.0
  %2854 = vmatpush2.msra.mxu0 0.0
  %2855 = vmatprep.subr.mxu0 0.0
  %2856 = vmatpush2.msra.mxu0 0.0
  %2857 = vmatprep.subr.mxu0 0.0
  %2858 = vmatpush2.msra.mxu0 0.0
  %2859 = vmatprep.subr.mxu0 0.0
  %2860 = vmatpush2.msra.mxu0 0.0
  %2861 = vmatprep.subr.mxu0 0.0
  %2862 = vmatpush2.msra.mxu0 0.0
  %2863 = vmatprep.subr.mxu0 0.0
  %2864 = vmatpush2.msra.mxu0 0.0
  %2865 = vmatprep.subr.mxu0 0.0
  %2866 = vmatpush2.msra.mxu0 0.0
  %2867 = vmatprep.subr.mxu0 0.0
  %2868 = vmatpush2.msra.mxu0 0.0
  %2869 = vmatprep.subr.mxu0 0.0
  %2870 = vmatpush2.msra.mxu0 0.0
  %2871 = vmatprep.subr.mxu0 0.0
  %2872 = vmatpush2.msra.mxu0 0.0
  %2873 = vmatprep.subr.mxu0 0.0
  %2874 = vmatpush2.msra.mxu0 0.0
  %2875 = vmatprep.subr.mxu0 0.0
  %2876 = vmatpush2.msra.mxu0 0.0
  %2877 = vmatprep.subr.mxu0 0.0
  %2878 = vmatpush2.msra.mxu0 0.0
  %2879 = vmatprep.subr.mxu0 0.0
  %2880 = vmatpush2.msra.mxu0 0.0
  %2881 = vmatprep.subr.mxu0 0.0
  %2882 = vmatpush2.msra.mxu0 0.0
  %2883 = vmatprep.subr.mxu0 0.0
  %2884 = vmatpush2.msra.mxu0 0.0
  %2885 = vmatprep.mubr.f32.mxu0 0.0
  %2886 = vmatmul.mubr.f32.gmra.mxu0 %v2819
  %v2887 = vpop.f32.mrf.mxu0
  %v2888 = vadd.f32 0.0, %v2887
  %v2889 = vpop.f32.mrf.mxu0
  %2890 = vdwg.mxu0
  %v2891 = vadd.f32 %v2318, %v2888
  %v2892 = vxor.u32 %v2815, 2147483648
  %v2893 = vmul.f32 %v2892, 1.442695
  %v2894 = vpow.pop %v2893
  %v2895 = vadd.f32 %v2894, 1.0
  %v2896 = vrcp.pop %v2895
  %v2897 = vmul.f32 1.0, %v2896
  %v2898 = vtanh.pop %v2815
  %v2899 = vxor.u32 %v2891, 2147483648
  %v2900 = vmul.f32 %v2899, 1.442695
  %v2901 = vpow.pop %v2900
  %v2902 = vadd.f32 %v2901, 1.0
  %v2903 = vrcp.pop %v2902
  %v2904 = vmul.f32 1.0, %v2903
  %v2905 = vtanh.pop %v2891
  %v2906 = vmul.f32 %v2897, %v2735
  %2908 = vrot.lane.b32.xlu0 %v2898, 32
  %v2909 = vpop.permute.xlu0 %2908
  %v2911 = vmul.f32 %v2897, %v2909
  %2913 = vrot.lane.b32.xlu0 %v2911, 32
  %v2914 = vpop.permute.xlu0 %2913
  %v2916 = vadd.f32 %v2906, %v2914
  %v2917 = vmul.f32 %v2904, %v2737
  %2919 = vrot.lane.b32.xlu0 %v2905, 32
  %v2920 = vpop.permute.xlu0 %2919
  %v2922 = vmul.f32 %v2904, %v2920
  %2924 = vrot.lane.b32.xlu0 %v2922, 32
  %v2925 = vpop.permute.xlu0 %2924
  %v2927 = vadd.f32 %v2917, %v2925
  %v2928 = vtanh.pop %v2916
  %2930 = vrot.lane.b32.xlu0 %v2928, 32
  %v2931 = vpop.permute.xlu0 %2930
  %v2933 = vmul.f32 %v2897, %v2931
  %v2934 = vtanh.pop %v2927
  %2936 = vrot.lane.b32.xlu0 %v2934, 32
  %v2937 = vpop.permute.xlu0 %2936
  %v2939 = vmul.f32 %v2904, %v2937
  %v2940 = vsel %vm1051, %v2933, %v2734
  %v2941 = vsel %vm1051, %v2916, %v2735
  %v2942 = vsel %vm1058, %v2939, %v2736
  %v2943 = vsel %vm1058, %v2927, %v2737
  %v2944 = vsel %vm1051, %v2933, 0.0
  %v2945 = vsel %vm1058, %v2939, 0.0
  %2947 = vrot.lane.b32.xlu0 %v2940, 64
  %v2948 = vpop.permute.xlu0 %2947
  %v2949 = vsel %vm278, %v2948, 0
  %2951 = vmatprep.subr.mxu0 0.0
  %2952 = vmatpush1.msra.mxu0 0.0
  %2953 = vmatprep.subr.mxu0 0.0
  %2954 = vmatpush1.msra.mxu0 0.0
  %2955 = vmatprep.subr.mxu0 0.0
  %2956 = vmatpush1.msra.mxu0 0.0
  %2957 = vmatprep.subr.mxu0 0.0
  %2958 = vmatpush1.msra.mxu0 0.0
  %2959 = vmatprep.subr.mxu0 0.0
  %2960 = vmatpush1.msra.mxu0 0.0
  %2961 = vmatprep.subr.mxu0 0.0
  %2962 = vmatpush1.msra.mxu0 0.0
  %2963 = vmatprep.subr.mxu0 0.0
  %2964 = vmatpush1.msra.mxu0 0.0
  %2965 = vmatprep.subr.mxu0 0.0
  %2966 = vmatpush1.msra.mxu0 0.0
  %2967 = vmatprep.subr.mxu0 0.0
  %2968 = vmatpush1.msra.mxu0 0.0
  %2969 = vmatprep.subr.mxu0 0.0
  %2970 = vmatpush1.msra.mxu0 0.0
  %2971 = vmatprep.subr.mxu0 0.0
  %2972 = vmatpush1.msra.mxu0 0.0
  %2973 = vmatprep.subr.mxu0 0.0
  %2974 = vmatpush1.msra.mxu0 0.0
  %2975 = vmatprep.subr.mxu0 0.0
  %2976 = vmatpush1.msra.mxu0 %v2335
  %2977 = vmatprep.subr.mxu0 0.0
  %2978 = vmatpush1.msra.mxu0 %v2334
  %2979 = vmatprep.subr.mxu0 0.0
  %2980 = vmatpush1.msra.mxu0 %v2333
  %2981 = vmatprep.subr.mxu0 0.0
  %2982 = vmatpush1.msra.mxu0 %v2332
  %2983 = vmatprep.subr.mxu0 0.0
  %2984 = vmatpush2.msra.mxu0 0.0
  %2985 = vmatprep.subr.mxu0 0.0
  %2986 = vmatpush2.msra.mxu0 0.0
  %2987 = vmatprep.subr.mxu0 0.0
  %2988 = vmatpush2.msra.mxu0 0.0
  %2989 = vmatprep.subr.mxu0 0.0
  %2990 = vmatpush2.msra.mxu0 0.0
  %2991 = vmatprep.subr.mxu0 0.0
  %2992 = vmatpush2.msra.mxu0 0.0
  %2993 = vmatprep.subr.mxu0 0.0
  %2994 = vmatpush2.msra.mxu0 0.0
  %2995 = vmatprep.subr.mxu0 0.0
  %2996 = vmatpush2.msra.mxu0 0.0
  %2997 = vmatprep.subr.mxu0 0.0
  %2998 = vmatpush2.msra.mxu0 0.0
  %2999 = vmatprep.subr.mxu0 0.0
  %3000 = vmatpush2.msra.mxu0 0.0
  %3001 = vmatprep.subr.mxu0 0.0
  %3002 = vmatpush2.msra.mxu0 0.0
  %3003 = vmatprep.subr.mxu0 0.0
  %3004 = vmatpush2.msra.mxu0 0.0
  %3005 = vmatprep.subr.mxu0 0.0
  %3006 = vmatpush2.msra.mxu0 0.0
  %3007 = vmatprep.subr.mxu0 0.0
  %3008 = vmatpush2.msra.mxu0 0.0
  %3009 = vmatprep.subr.mxu0 0.0
  %3010 = vmatpush2.msra.mxu0 0.0
  %3011 = vmatprep.subr.mxu0 0.0
  %3012 = vmatpush2.msra.mxu0 0.0
  %3013 = vmatprep.subr.mxu0 0.0
  %3014 = vmatpush2.msra.mxu0 0.0
  %3015 = vmatprep.mubr.f32.mxu0 0.0
  %3016 = vmatmul.mubr.f32.gmra.mxu0 %v2949
  %v3017 = vpop.f32.mrf.mxu0
  %v3018 = vadd.f32 0.0, %v3017
  %v3019 = vpop.f32.mrf.mxu0
  %3020 = vdwg.mxu0
  %v3021 = vadd.f32 %v2304, %v3018
  %3023 = vrot.lane.b32.xlu0 %v2942, 64
  %v3024 = vpop.permute.xlu0 %3023
  %v3025 = vsel %vm278, %v3024, 0
  %3027 = vmatprep.subr.mxu0 0.0
  %3028 = vmatpush1.msra.mxu0 0.0
  %3029 = vmatprep.subr.mxu0 0.0
  %3030 = vmatpush1.msra.mxu0 0.0
  %3031 = vmatprep.subr.mxu0 0.0
  %3032 = vmatpush1.msra.mxu0 0.0
  %3033 = vmatprep.subr.mxu0 0.0
  %3034 = vmatpush1.msra.mxu0 0.0
  %3035 = vmatprep.subr.mxu0 0.0
  %3036 = vmatpush1.msra.mxu0 0.0
  %3037 = vmatprep.subr.mxu0 0.0
  %3038 = vmatpush1.msra.mxu0 0.0
  %3039 = vmatprep.subr.mxu0 0.0
  %3040 = vmatpush1.msra.mxu0 0.0
  %3041 = vmatprep.subr.mxu0 0.0
  %3042 = vmatpush1.msra.mxu0 0.0
  %3043 = vmatprep.subr.mxu0 0.0
  %3044 = vmatpush1.msra.mxu0 0.0
  %3045 = vmatprep.subr.mxu0 0.0
  %3046 = vmatpush1.msra.mxu0 0.0
  %3047 = vmatprep.subr.mxu0 0.0
  %3048 = vmatpush1.msra.mxu0 0.0
  %3049 = vmatprep.subr.mxu0 0.0
  %3050 = vmatpush1.msra.mxu0 0.0
  %3051 = vmatprep.subr.mxu0 0.0
  %3052 = vmatpush1.msra.mxu0 %v2339
  %3053 = vmatprep.subr.mxu0 0.0
  %3054 = vmatpush1.msra.mxu0 %v2338
  %3055 = vmatprep.subr.mxu0 0.0
  %3056 = vmatpush1.msra.mxu0 %v2337
  %3057 = vmatprep.subr.mxu0 0.0
  %3058 = vmatpush1.msra.mxu0 %v2336
  %3059 = vmatprep.subr.mxu0 0.0
  %3060 = vmatpush2.msra.mxu0 0.0
  %3061 = vmatprep.subr.mxu0 0.0
  %3062 = vmatpush2.msra.mxu0 0.0
  %3063 = vmatprep.subr.mxu0 0.0
  %3064 = vmatpush2.msra.mxu0 0.0
  %3065 = vmatprep.subr.mxu0 0.0
  %3066 = vmatpush2.msra.mxu0 0.0
  %3067 = vmatprep.subr.mxu0 0.0
  %3068 = vmatpush2.msra.mxu0 0.0
  %3069 = vmatprep.subr.mxu0 0.0
  %3070 = vmatpush2.msra.mxu0 0.0
  %3071 = vmatprep.subr.mxu0 0.0
  %3072 = vmatpush2.msra.mxu0 0.0
  %3073 = vmatprep.subr.mxu0 0.0
  %3074 = vmatpush2.msra.mxu0 0.0
  %3075 = vmatprep.subr.mxu0 0.0
  %3076 = vmatpush2.msra.mxu0 0.0
  %3077 = vmatprep.subr.mxu0 0.0
  %3078 = vmatpush2.msra.mxu0 0.0
  %3079 = vmatprep.subr.mxu0 0.0
  %3080 = vmatpush2.msra.mxu0 0.0
  %3081 = vmatprep.subr.mxu0 0.0
  %3082 = vmatpush2.msra.mxu0 0.0
  %3083 = vmatprep.subr.mxu0 0.0
  %3084 = vmatpush2.msra.mxu0 0.0
  %3085 = vmatprep.subr.mxu0 0.0
  %3086 = vmatpush2.msra.mxu0 0.0
  %3087 = vmatprep.subr.mxu0 0.0
  %3088 = vmatpush2.msra.mxu0 0.0
  %3089 = vmatprep.subr.mxu0 0.0
  %3090 = vmatpush2.msra.mxu0 0.0
  %3091 = vmatprep.mubr.f32.mxu0 0.0
  %3092 = vmatmul.mubr.f32.gmra.mxu0 %v3025
  %v3093 = vpop.f32.mrf.mxu0
  %v3094 = vadd.f32 0.0, %v3093
  %v3095 = vpop.f32.mrf.mxu0
  %3096 = vdwg.mxu0
  %v3097 = vadd.f32 %v2312, %v3094
  %v3098 = vxor.u32 %v3021, 2147483648
  %v3099 = vmul.f32 %v3098, 1.442695
  %v3100 = vpow.pop %v3099
  %v3101 = vadd.f32 %v3100, 1.0
  %v3102 = vrcp.pop %v3101
  %v3103 = vmul.f32 1.0, %v3102
  %v3104 = vtanh.pop %v3021
  %v3105 = vxor.u32 %v3097, 2147483648
  %v3106 = vmul.f32 %v3105, 1.442695
  %v3107 = vpow.pop %v3106
  %v3108 = vadd.f32 %v3107, 1.0
  %v3109 = vrcp.pop %v3108
  %v3110 = vmul.f32 1.0, %v3109
  %v3111 = vtanh.pop %v3097
  %v3112 = vmul.f32 %v3103, %v2941
  %3114 = vrot.lane.b32.xlu0 %v3104, 32
  %v3115 = vpop.permute.xlu0 %3114
  %v3117 = vmul.f32 %v3103, %v3115
  %3119 = vrot.lane.b32.xlu0 %v3117, 32
  %v3120 = vpop.permute.xlu0 %3119
  %v3122 = vadd.f32 %v3112, %v3120
  %v3123 = vmul.f32 %v3110, %v2943
  %3125 = vrot.lane.b32.xlu0 %v3111, 32
  %v3126 = vpop.permute.xlu0 %3125
  %v3128 = vmul.f32 %v3110, %v3126
  %3130 = vrot.lane.b32.xlu0 %v3128, 32
  %v3131 = vpop.permute.xlu0 %3130
  %v3133 = vadd.f32 %v3123, %v3131
  %v3134 = vtanh.pop %v3122
  %3136 = vrot.lane.b32.xlu0 %v3134, 32
  %v3137 = vpop.permute.xlu0 %3136
  %v3139 = vmul.f32 %v3103, %v3137
  %v3140 = vtanh.pop %v3133
  %3142 = vrot.lane.b32.xlu0 %v3140, 32
  %v3143 = vpop.permute.xlu0 %3142
  %v3145 = vmul.f32 %v3110, %v3143
  %v3146 = vsel %vm1267, %v3139, %v2940
  %v3147 = vsel %vm1267, %v3122, %v2941
  %v3148 = vsel %vm1274, %v3145, %v2942
  %v3149 = vsel %vm1274, %v3133, %v2943
  %v3150 = vsel %vm1267, %v3139, 0.0
  %v3151 = vsel %vm1274, %v3145, 0.0
  %3153 = vrot.lane.b32.xlu0 %v3146, 64
  %v3154 = vpop.permute.xlu0 %3153
  %v3155 = vsel %vm278, %v3154, 0
  %3157 = vmatprep.subr.mxu0 0.0
  %3158 = vmatpush1.msra.mxu0 0.0
  %3159 = vmatprep.subr.mxu0 0.0
  %3160 = vmatpush1.msra.mxu0 0.0
  %3161 = vmatprep.subr.mxu0 0.0
  %3162 = vmatpush1.msra.mxu0 0.0
  %3163 = vmatprep.subr.mxu0 0.0
  %3164 = vmatpush1.msra.mxu0 0.0
  %3165 = vmatprep.subr.mxu0 0.0
  %3166 = vmatpush1.msra.mxu0 0.0
  %3167 = vmatprep.subr.mxu0 0.0
  %3168 = vmatpush1.msra.mxu0 0.0
  %3169 = vmatprep.subr.mxu0 0.0
  %3170 = vmatpush1.msra.mxu0 0.0
  %3171 = vmatprep.subr.mxu0 0.0
  %3172 = vmatpush1.msra.mxu0 0.0
  %3173 = vmatprep.subr.mxu0 0.0
  %3174 = vmatpush1.msra.mxu0 0.0
  %3175 = vmatprep.subr.mxu0 0.0
  %3176 = vmatpush1.msra.mxu0 0.0
  %3177 = vmatprep.subr.mxu0 0.0
  %3178 = vmatpush1.msra.mxu0 0.0
  %3179 = vmatprep.subr.mxu0 0.0
  %3180 = vmatpush1.msra.mxu0 0.0
  %3181 = vmatprep.subr.mxu0 0.0
  %3182 = vmatpush1.msra.mxu0 %v2335
  %3183 = vmatprep.subr.mxu0 0.0
  %3184 = vmatpush1.msra.mxu0 %v2334
  %3185 = vmatprep.subr.mxu0 0.0
  %3186 = vmatpush1.msra.mxu0 %v2333
  %3187 = vmatprep.subr.mxu0 0.0
  %3188 = vmatpush1.msra.mxu0 %v2332
  %3189 = vmatprep.subr.mxu0 0.0
  %3190 = vmatpush2.msra.mxu0 0.0
  %3191 = vmatprep.subr.mxu0 0.0
  %3192 = vmatpush2.msra.mxu0 0.0
  %3193 = vmatprep.subr.mxu0 0.0
  %3194 = vmatpush2.msra.mxu0 0.0
  %3195 = vmatprep.subr.mxu0 0.0
  %3196 = vmatpush2.msra.mxu0 0.0
  %3197 = vmatprep.subr.mxu0 0.0
  %3198 = vmatpush2.msra.mxu0 0.0
  %3199 = vmatprep.subr.mxu0 0.0
  %3200 = vmatpush2.msra.mxu0 0.0
  %3201 = vmatprep.subr.mxu0 0.0
  %3202 = vmatpush2.msra.mxu0 0.0
  %3203 = vmatprep.subr.mxu0 0.0
  %3204 = vmatpush2.msra.mxu0 0.0
  %3205 = vmatprep.subr.mxu0 0.0
  %3206 = vmatpush2.msra.mxu0 0.0
  %3207 = vmatprep.subr.mxu0 0.0
  %3208 = vmatpush2.msra.mxu0 0.0
  %3209 = vmatprep.subr.mxu0 0.0
  %3210 = vmatpush2.msra.mxu0 0.0
  %3211 = vmatprep.subr.mxu0 0.0
  %3212 = vmatpush2.msra.mxu0 0.0
  %3213 = vmatprep.subr.mxu0 0.0
  %3214 = vmatpush2.msra.mxu0 0.0
  %3215 = vmatprep.subr.mxu0 0.0
  %3216 = vmatpush2.msra.mxu0 0.0
  %3217 = vmatprep.subr.mxu0 0.0
  %3218 = vmatpush2.msra.mxu0 0.0
  %3219 = vmatprep.subr.mxu0 0.0
  %3220 = vmatpush2.msra.mxu0 0.0
  %3221 = vmatprep.mubr.f32.mxu0 0.0
  %3222 = vmatmul.mubr.f32.gmra.mxu0 %v3155
  %v3223 = vpop.f32.mrf.mxu0
  %v3224 = vadd.f32 0.0, %v3223
  %v3225 = vpop.f32.mrf.mxu0
  %3226 = vdwg.mxu0
  %v3227 = vadd.f32 %v2310, %v3224
  %3229 = vrot.lane.b32.xlu0 %v3148, 64
  %v3230 = vpop.permute.xlu0 %3229
  %v3231 = vsel %vm278, %v3230, 0
  %3233 = vmatprep.subr.mxu0 0.0
  %3234 = vmatpush1.msra.mxu0 0.0
  %3235 = vmatprep.subr.mxu0 0.0
  %3236 = vmatpush1.msra.mxu0 0.0
  %3237 = vmatprep.subr.mxu0 0.0
  %3238 = vmatpush1.msra.mxu0 0.0
  %3239 = vmatprep.subr.mxu0 0.0
  %3240 = vmatpush1.msra.mxu0 0.0
  %3241 = vmatprep.subr.mxu0 0.0
  %3242 = vmatpush1.msra.mxu0 0.0
  %3243 = vmatprep.subr.mxu0 0.0
  %3244 = vmatpush1.msra.mxu0 0.0
  %3245 = vmatprep.subr.mxu0 0.0
  %3246 = vmatpush1.msra.mxu0 0.0
  %3247 = vmatprep.subr.mxu0 0.0
  %3248 = vmatpush1.msra.mxu0 0.0
  %3249 = vmatprep.subr.mxu0 0.0
  %3250 = vmatpush1.msra.mxu0 0.0
  %3251 = vmatprep.subr.mxu0 0.0
  %3252 = vmatpush1.msra.mxu0 0.0
  %3253 = vmatprep.subr.mxu0 0.0
  %3254 = vmatpush1.msra.mxu0 0.0
  %3255 = vmatprep.subr.mxu0 0.0
  %3256 = vmatpush1.msra.mxu0 0.0
  %3257 = vmatprep.subr.mxu0 0.0
  %3258 = vmatpush1.msra.mxu0 %v2339
  %3259 = vmatprep.subr.mxu0 0.0
  %3260 = vmatpush1.msra.mxu0 %v2338
  %3261 = vmatprep.subr.mxu0 0.0
  %3262 = vmatpush1.msra.mxu0 %v2337
  %3263 = vmatprep.subr.mxu0 0.0
  %3264 = vmatpush1.msra.mxu0 %v2336
  %3265 = vmatprep.subr.mxu0 0.0
  %3266 = vmatpush2.msra.mxu0 0.0
  %3267 = vmatprep.subr.mxu0 0.0
  %3268 = vmatpush2.msra.mxu0 0.0
  %3269 = vmatprep.subr.mxu0 0.0
  %3270 = vmatpush2.msra.mxu0 0.0
  %3271 = vmatprep.subr.mxu0 0.0
  %3272 = vmatpush2.msra.mxu0 0.0
  %3273 = vmatprep.subr.mxu0 0.0
  %3274 = vmatpush2.msra.mxu0 0.0
  %3275 = vmatprep.subr.mxu0 0.0
  %3276 = vmatpush2.msra.mxu0 0.0
  %3277 = vmatprep.subr.mxu0 0.0
  %3278 = vmatpush2.msra.mxu0 0.0
  %3279 = vmatprep.subr.mxu0 0.0
  %3280 = vmatpush2.msra.mxu0 0.0
  %3281 = vmatprep.subr.mxu0 0.0
  %3282 = vmatpush2.msra.mxu0 0.0
  %3283 = vmatprep.subr.mxu0 0.0
  %3284 = vmatpush2.msra.mxu0 0.0
  %3285 = vmatprep.subr.mxu0 0.0
  %3286 = vmatpush2.msra.mxu0 0.0
  %3287 = vmatprep.subr.mxu0 0.0
  %3288 = vmatpush2.msra.mxu0 0.0
  %3289 = vmatprep.subr.mxu0 0.0
  %3290 = vmatpush2.msra.mxu0 0.0
  %3291 = vmatprep.subr.mxu0 0.0
  %3292 = vmatpush2.msra.mxu0 0.0
  %3293 = vmatprep.subr.mxu0 0.0
  %3294 = vmatpush2.msra.mxu0 0.0
  %3295 = vmatprep.subr.mxu0 0.0
  %3296 = vmatpush2.msra.mxu0 0.0
  %3297 = vmatprep.mubr.f32.mxu0 0.0
  %3298 = vmatmul.mubr.f32.gmra.mxu0 %v3231
  %v3299 = vpop.f32.mrf.mxu0
  %v3300 = vadd.f32 0.0, %v3299
  %v3301 = vpop.f32.mrf.mxu0
  %3302 = vdwg.mxu0
  %v3303 = vadd.f32 %v2306, %v3300
  %v3304 = vxor.u32 %v3227, 2147483648
  %v3305 = vmul.f32 %v3304, 1.442695
  %v3306 = vpow.pop %v3305
  %v3307 = vadd.f32 %v3306, 1.0
  %v3308 = vrcp.pop %v3307
  %v3309 = vmul.f32 1.0, %v3308
  %v3310 = vtanh.pop %v3227
  %v3311 = vxor.u32 %v3303, 2147483648
  %v3312 = vmul.f32 %v3311, 1.442695
  %v3313 = vpow.pop %v3312
  %v3314 = vadd.f32 %v3313, 1.0
  %v3315 = vrcp.pop %v3314
  %v3316 = vmul.f32 1.0, %v3315
  %v3317 = vtanh.pop %v3303
  %v3318 = vmul.f32 %v3309, %v3147
  %3320 = vrot.lane.b32.xlu0 %v3310, 32
  %v3321 = vpop.permute.xlu0 %3320
  %v3323 = vmul.f32 %v3309, %v3321
  %3325 = vrot.lane.b32.xlu0 %v3323, 32
  %v3326 = vpop.permute.xlu0 %3325
  %v3328 = vadd.f32 %v3318, %v3326
  %v3329 = vmul.f32 %v3316, %v3149
  %3331 = vrot.lane.b32.xlu0 %v3317, 32
  %v3332 = vpop.permute.xlu0 %3331
  %v3334 = vmul.f32 %v3316, %v3332
  %3336 = vrot.lane.b32.xlu0 %v3334, 32
  %v3337 = vpop.permute.xlu0 %3336
  %v3339 = vadd.f32 %v3329, %v3337
  %v3340 = vtanh.pop %v3328
  %3342 = vrot.lane.b32.xlu0 %v3340, 32
  %v3343 = vpop.permute.xlu0 %3342
  %v3345 = vmul.f32 %v3309, %v3343
  %v3346 = vtanh.pop %v3339
  %3348 = vrot.lane.b32.xlu0 %v3346, 32
  %v3349 = vpop.permute.xlu0 %3348
  %v3351 = vmul.f32 %v3316, %v3349
  %v3352 = vsel %vm1274, %v3345, %v3146
  %v3353 = vsel %vm1274, %v3328, %v3147
  %v3354 = vsel %vm1267, %v3351, %v3148
  %v3355 = vsel %vm1267, %v3339, %v3149
  %v3356 = vsel %vm1274, %v3345, 0.0
  %v3357 = vsel %vm1267, %v3351, 0.0
  %3359 = vrot.lane.b32.xlu0 %v3352, 64
  %v3360 = vpop.permute.xlu0 %3359
  %v3361 = vsel %vm278, %v3360, 0
  %3363 = vmatprep.subr.mxu0 0.0
  %3364 = vmatpush1.msra.mxu0 0.0
  %3365 = vmatprep.subr.mxu0 0.0
  %3366 = vmatpush1.msra.mxu0 0.0
  %3367 = vmatprep.subr.mxu0 0.0
  %3368 = vmatpush1.msra.mxu0 0.0
  %3369 = vmatprep.subr.mxu0 0.0
  %3370 = vmatpush1.msra.mxu0 0.0
  %3371 = vmatprep.subr.mxu0 0.0
  %3372 = vmatpush1.msra.mxu0 0.0
  %3373 = vmatprep.subr.mxu0 0.0
  %3374 = vmatpush1.msra.mxu0 0.0
  %3375 = vmatprep.subr.mxu0 0.0
  %3376 = vmatpush1.msra.mxu0 0.0
  %3377 = vmatprep.subr.mxu0 0.0
  %3378 = vmatpush1.msra.mxu0 0.0
  %3379 = vmatprep.subr.mxu0 0.0
  %3380 = vmatpush1.msra.mxu0 0.0
  %3381 = vmatprep.subr.mxu0 0.0
  %3382 = vmatpush1.msra.mxu0 0.0
  %3383 = vmatprep.subr.mxu0 0.0
  %3384 = vmatpush1.msra.mxu0 0.0
  %3385 = vmatprep.subr.mxu0 0.0
  %3386 = vmatpush1.msra.mxu0 0.0
  %3387 = vmatprep.subr.mxu0 0.0
  %3388 = vmatpush1.msra.mxu0 %v2335
  %3389 = vmatprep.subr.mxu0 0.0
  %3390 = vmatpush1.msra.mxu0 %v2334
  %3391 = vmatprep.subr.mxu0 0.0
  %3392 = vmatpush1.msra.mxu0 %v2333
  %3393 = vmatprep.subr.mxu0 0.0
  %3394 = vmatpush1.msra.mxu0 %v2332
  %3395 = vmatprep.subr.mxu0 0.0
  %3396 = vmatpush2.msra.mxu0 0.0
  %3397 = vmatprep.subr.mxu0 0.0
  %3398 = vmatpush2.msra.mxu0 0.0
  %3399 = vmatprep.subr.mxu0 0.0
  %3400 = vmatpush2.msra.mxu0 0.0
  %3401 = vmatprep.subr.mxu0 0.0
  %3402 = vmatpush2.msra.mxu0 0.0
  %3403 = vmatprep.subr.mxu0 0.0
  %3404 = vmatpush2.msra.mxu0 0.0
  %3405 = vmatprep.subr.mxu0 0.0
  %3406 = vmatpush2.msra.mxu0 0.0
  %3407 = vmatprep.subr.mxu0 0.0
  %3408 = vmatpush2.msra.mxu0 0.0
  %3409 = vmatprep.subr.mxu0 0.0
  %3410 = vmatpush2.msra.mxu0 0.0
  %3411 = vmatprep.subr.mxu0 0.0
  %3412 = vmatpush2.msra.mxu0 0.0
  %3413 = vmatprep.subr.mxu0 0.0
  %3414 = vmatpush2.msra.mxu0 0.0
  %3415 = vmatprep.subr.mxu0 0.0
  %3416 = vmatpush2.msra.mxu0 0.0
  %3417 = vmatprep.subr.mxu0 0.0
  %3418 = vmatpush2.msra.mxu0 0.0
  %3419 = vmatprep.subr.mxu0 0.0
  %3420 = vmatpush2.msra.mxu0 0.0
  %3421 = vmatprep.subr.mxu0 0.0
  %3422 = vmatpush2.msra.mxu0 0.0
  %3423 = vmatprep.subr.mxu0 0.0
  %3424 = vmatpush2.msra.mxu0 0.0
  %3425 = vmatprep.subr.mxu0 0.0
  %3426 = vmatpush2.msra.mxu0 0.0
  %3427 = vmatprep.mubr.f32.mxu0 0.0
  %3428 = vmatmul.mubr.f32.gmra.mxu0 %v3361
  %v3429 = vpop.f32.mrf.mxu0
  %v3430 = vadd.f32 0.0, %v3429
  %v3431 = vpop.f32.mrf.mxu0
  %3432 = vdwg.mxu0
  %v3433 = vadd.f32 %v2316, %v3430
  %3435 = vrot.lane.b32.xlu0 %v3354, 64
  %v3436 = vpop.permute.xlu0 %3435
  %v3437 = vsel %vm278, %v3436, 0
  %3439 = vmatprep.subr.mxu0 0.0
  %3440 = vmatpush1.msra.mxu0 0.0
  %3441 = vmatprep.subr.mxu0 0.0
  %3442 = vmatpush1.msra.mxu0 0.0
  %3443 = vmatprep.subr.mxu0 0.0
  %3444 = vmatpush1.msra.mxu0 0.0
  %3445 = vmatprep.subr.mxu0 0.0
  %3446 = vmatpush1.msra.mxu0 0.0
  %3447 = vmatprep.subr.mxu0 0.0
  %3448 = vmatpush1.msra.mxu0 0.0
  %3449 = vmatprep.subr.mxu0 0.0
  %3450 = vmatpush1.msra.mxu0 0.0
  %3451 = vmatprep.subr.mxu0 0.0
  %3452 = vmatpush1.msra.mxu0 0.0
  %3453 = vmatprep.subr.mxu0 0.0
  %3454 = vmatpush1.msra.mxu0 0.0
  %3455 = vmatprep.subr.mxu0 0.0
  %3456 = vmatpush1.msra.mxu0 0.0
  %3457 = vmatprep.subr.mxu0 0.0
  %3458 = vmatpush1.msra.mxu0 0.0
  %3459 = vmatprep.subr.mxu0 0.0
  %3460 = vmatpush1.msra.mxu0 0.0
  %3461 = vmatprep.subr.mxu0 0.0
  %3462 = vmatpush1.msra.mxu0 0.0
  %3463 = vmatprep.subr.mxu0 0.0
  %3464 = vmatpush1.msra.mxu0 %v2339
  %3465 = vmatprep.subr.mxu0 0.0
  %3466 = vmatpush1.msra.mxu0 %v2338
  %3467 = vmatprep.subr.mxu0 0.0
  %3468 = vmatpush1.msra.mxu0 %v2337
  %3469 = vmatprep.subr.mxu0 0.0
  %3470 = vmatpush1.msra.mxu0 %v2336
  %3471 = vmatprep.subr.mxu0 0.0
  %3472 = vmatpush2.msra.mxu0 0.0
  %3473 = vmatprep.subr.mxu0 0.0
  %3474 = vmatpush2.msra.mxu0 0.0
  %3475 = vmatprep.subr.mxu0 0.0
  %3476 = vmatpush2.msra.mxu0 0.0
  %3477 = vmatprep.subr.mxu0 0.0
  %3478 = vmatpush2.msra.mxu0 0.0
  %3479 = vmatprep.subr.mxu0 0.0
  %3480 = vmatpush2.msra.mxu0 0.0
  %3481 = vmatprep.subr.mxu0 0.0
  %3482 = vmatpush2.msra.mxu0 0.0
  %3483 = vmatprep.subr.mxu0 0.0
  %3484 = vmatpush2.msra.mxu0 0.0
  %3485 = vmatprep.subr.mxu0 0.0
  %3486 = vmatpush2.msra.mxu0 0.0
  %3487 = vmatprep.subr.mxu0 0.0
  %3488 = vmatpush2.msra.mxu0 0.0
  %3489 = vmatprep.subr.mxu0 0.0
  %3490 = vmatpush2.msra.mxu0 0.0
  %3491 = vmatprep.subr.mxu0 0.0
  %3492 = vmatpush2.msra.mxu0 0.0
  %3493 = vmatprep.subr.mxu0 0.0
  %3494 = vmatpush2.msra.mxu0 0.0
  %3495 = vmatprep.subr.mxu0 0.0
  %3496 = vmatpush2.msra.mxu0 0.0
  %3497 = vmatprep.subr.mxu0 0.0
  %3498 = vmatpush2.msra.mxu0 0.0
  %3499 = vmatprep.subr.mxu0 0.0
  %3500 = vmatpush2.msra.mxu0 0.0
  %3501 = vmatprep.subr.mxu0 0.0
  %3502 = vmatpush2.msra.mxu0 0.0
  %3503 = vmatprep.mubr.f32.mxu0 0.0
  %3504 = vmatmul.mubr.f32.gmra.mxu0 %v3437
  %v3505 = vpop.f32.mrf.mxu0
  %v3506 = vadd.f32 0.0, %v3505
  %v3507 = vpop.f32.mrf.mxu0
  %3508 = vdwg.mxu0
  %v3509 = vadd.f32 %v2300, %v3506
  %v3510 = vxor.u32 %v3433, 2147483648
  %v3511 = vmul.f32 %v3510, 1.442695
  %v3512 = vpow.pop %v3511
  %v3513 = vadd.f32 %v3512, 1.0
  %v3514 = vrcp.pop %v3513
  %v3515 = vmul.f32 1.0, %v3514
  %v3516 = vtanh.pop %v3433
  %v3517 = vxor.u32 %v3509, 2147483648
  %v3518 = vmul.f32 %v3517, 1.442695
  %v3519 = vpow.pop %v3518
  %v3520 = vadd.f32 %v3519, 1.0
  %v3521 = vrcp.pop %v3520
  %v3522 = vmul.f32 1.0, %v3521
  %v3523 = vtanh.pop %v3509
  %v3524 = vmul.f32 %v3515, %v3353
  %3526 = vrot.lane.b32.xlu0 %v3516, 32
  %v3527 = vpop.permute.xlu0 %3526
  %v3529 = vmul.f32 %v3515, %v3527
  %3531 = vrot.lane.b32.xlu0 %v3529, 32
  %v3532 = vpop.permute.xlu0 %3531
  %v3534 = vadd.f32 %v3524, %v3532
  %v3535 = vmul.f32 %v3522, %v3355
  %3537 = vrot.lane.b32.xlu0 %v3523, 32
  %v3538 = vpop.permute.xlu0 %3537
  %v3540 = vmul.f32 %v3522, %v3538
  %3542 = vrot.lane.b32.xlu0 %v3540, 32
  %v3543 = vpop.permute.xlu0 %3542
  %v3545 = vadd.f32 %v3535, %v3543
  %v3546 = vtanh.pop %v3534
  %3548 = vrot.lane.b32.xlu0 %v3546, 32
  %v3549 = vpop.permute.xlu0 %3548
  %v3551 = vmul.f32 %v3515, %v3549
  %v3552 = vtanh.pop %v3545
  %3554 = vrot.lane.b32.xlu0 %v3552, 32
  %v3555 = vpop.permute.xlu0 %3554
  %v3557 = vmul.f32 %v3522, %v3555
  %v3558 = vsel %vm1058, %v3551, %v3352
  %v3559 = vsel %vm1058, %v3534, %v3353
  %v3560 = vsel %vm1051, %v3557, %v3354
  %v3561 = vsel %vm1051, %v3545, %v3355
  %v3562 = vsel %vm1058, %v3551, 0.0
  %v3563 = vsel %vm1051, %v3557, 0.0
  %3565 = vrot.lane.b32.xlu0 %v3558, 64
  %v3566 = vpop.permute.xlu0 %3565
  %v3567 = vsel %vm278, %v3566, 0
  %3569 = vmatprep.subr.mxu0 0.0
  %3570 = vmatpush1.msra.mxu0 0.0
  %3571 = vmatprep.subr.mxu0 0.0
  %3572 = vmatpush1.msra.mxu0 0.0
  %3573 = vmatprep.subr.mxu0 0.0
  %3574 = vmatpush1.msra.mxu0 0.0
  %3575 = vmatprep.subr.mxu0 0.0
  %3576 = vmatpush1.msra.mxu0 0.0
  %3577 = vmatprep.subr.mxu0 0.0
  %3578 = vmatpush1.msra.mxu0 0.0
  %3579 = vmatprep.subr.mxu0 0.0
  %3580 = vmatpush1.msra.mxu0 0.0
  %3581 = vmatprep.subr.mxu0 0.0
  %3582 = vmatpush1.msra.mxu0 0.0
  %3583 = vmatprep.subr.mxu0 0.0
  %3584 = vmatpush1.msra.mxu0 0.0
  %3585 = vmatprep.subr.mxu0 0.0
  %3586 = vmatpush1.msra.mxu0 0.0
  %3587 = vmatprep.subr.mxu0 0.0
  %3588 = vmatpush1.msra.mxu0 0.0
  %3589 = vmatprep.subr.mxu0 0.0
  %3590 = vmatpush1.msra.mxu0 0.0
  %3591 = vmatprep.subr.mxu0 0.0
  %3592 = vmatpush1.msra.mxu0 0.0
  %3593 = vmatprep.subr.mxu0 0.0
  %3594 = vmatpush1.msra.mxu0 %v2335
  %3595 = vmatprep.subr.mxu0 0.0
  %3596 = vmatpush1.msra.mxu0 %v2334
  %3597 = vmatprep.subr.mxu0 0.0
  %3598 = vmatpush1.msra.mxu0 %v2333
  %3599 = vmatprep.subr.mxu0 0.0
  %3600 = vmatpush1.msra.mxu0 %v2332
  %3601 = vmatprep.subr.mxu0 0.0
  %3602 = vmatpush2.msra.mxu0 0.0
  %3603 = vmatprep.subr.mxu0 0.0
  %3604 = vmatpush2.msra.mxu0 0.0
  %3605 = vmatprep.subr.mxu0 0.0
  %3606 = vmatpush2.msra.mxu0 0.0
  %3607 = vmatprep.subr.mxu0 0.0
  %3608 = vmatpush2.msra.mxu0 0.0
  %3609 = vmatprep.subr.mxu0 0.0
  %3610 = vmatpush2.msra.mxu0 0.0
  %3611 = vmatprep.subr.mxu0 0.0
  %3612 = vmatpush2.msra.mxu0 0.0
  %3613 = vmatprep.subr.mxu0 0.0
  %3614 = vmatpush2.msra.mxu0 0.0
  %3615 = vmatprep.subr.mxu0 0.0
  %3616 = vmatpush2.msra.mxu0 0.0
  %3617 = vmatprep.subr.mxu0 0.0
  %3618 = vmatpush2.msra.mxu0 0.0
  %3619 = vmatprep.subr.mxu0 0.0
  %3620 = vmatpush2.msra.mxu0 0.0
  %3621 = vmatprep.subr.mxu0 0.0
  %3622 = vmatpush2.msra.mxu0 0.0
  %3623 = vmatprep.subr.mxu0 0.0
  %3624 = vmatpush2.msra.mxu0 0.0
  %3625 = vmatprep.subr.mxu0 0.0
  %3626 = vmatpush2.msra.mxu0 0.0
  %3627 = vmatprep.subr.mxu0 0.0
  %3628 = vmatpush2.msra.mxu0 0.0
  %3629 = vmatprep.subr.mxu0 0.0
  %3630 = vmatpush2.msra.mxu0 0.0
  %3631 = vmatprep.subr.mxu0 0.0
  %3632 = vmatpush2.msra.mxu0 0.0
  %3633 = vmatprep.mubr.f32.mxu0 0.0
  %3634 = vmatmul.mubr.f32.gmra.mxu0 %v3567
  %v3635 = vpop.f32.mrf.mxu0
  %v3636 = vadd.f32 0.0, %v3635
  %v3637 = vpop.f32.mrf.mxu0
  %3638 = vdwg.mxu0
  %v3639 = vadd.f32 %v2322, %v3636
  %3641 = vrot.lane.b32.xlu0 %v3560, 64
  %v3642 = vpop.permute.xlu0 %3641
  %v3643 = vsel %vm278, %v3642, 0
  %3645 = vmatprep.subr.mxu0 0.0
  %3646 = vmatpush1.msra.mxu0 0.0
  %3647 = vmatprep.subr.mxu0 0.0
  %3648 = vmatpush1.msra.mxu0 0.0
  %3649 = vmatprep.subr.mxu0 0.0
  %3650 = vmatpush1.msra.mxu0 0.0
  %3651 = vmatprep.subr.mxu0 0.0
  %3652 = vmatpush1.msra.mxu0 0.0
  %3653 = vmatprep.subr.mxu0 0.0
  %3654 = vmatpush1.msra.mxu0 0.0
  %3655 = vmatprep.subr.mxu0 0.0
  %3656 = vmatpush1.msra.mxu0 0.0
  %3657 = vmatprep.subr.mxu0 0.0
  %3658 = vmatpush1.msra.mxu0 0.0
  %3659 = vmatprep.subr.mxu0 0.0
  %3660 = vmatpush1.msra.mxu0 0.0
  %3661 = vmatprep.subr.mxu0 0.0
  %3662 = vmatpush1.msra.mxu0 0.0
  %3663 = vmatprep.subr.mxu0 0.0
  %3664 = vmatpush1.msra.mxu0 0.0
  %3665 = vmatprep.subr.mxu0 0.0
  %3666 = vmatpush1.msra.mxu0 0.0
  %3667 = vmatprep.subr.mxu0 0.0
  %3668 = vmatpush1.msra.mxu0 0.0
  %3669 = vmatprep.subr.mxu0 0.0
  %3670 = vmatpush1.msra.mxu0 %v2339
  %3671 = vmatprep.subr.mxu0 0.0
  %3672 = vmatpush1.msra.mxu0 %v2338
  %3673 = vmatprep.subr.mxu0 0.0
  %3674 = vmatpush1.msra.mxu0 %v2337
  %3675 = vmatprep.subr.mxu0 0.0
  %3676 = vmatpush1.msra.mxu0 %v2336
  %3677 = vmatprep.subr.mxu0 0.0
  %3678 = vmatpush2.msra.mxu0 0.0
  %3679 = vmatprep.subr.mxu0 0.0
  %3680 = vmatpush2.msra.mxu0 0.0
  %3681 = vmatprep.subr.mxu0 0.0
  %3682 = vmatpush2.msra.mxu0 0.0
  %3683 = vmatprep.subr.mxu0 0.0
  %3684 = vmatpush2.msra.mxu0 0.0
  %3685 = vmatprep.subr.mxu0 0.0
  %3686 = vmatpush2.msra.mxu0 0.0
  %3687 = vmatprep.subr.mxu0 0.0
  %3688 = vmatpush2.msra.mxu0 0.0
  %3689 = vmatprep.subr.mxu0 0.0
  %3690 = vmatpush2.msra.mxu0 0.0
  %3691 = vmatprep.subr.mxu0 0.0
  %3692 = vmatpush2.msra.mxu0 0.0
  %3693 = vmatprep.subr.mxu0 0.0
  %3694 = vmatpush2.msra.mxu0 0.0
  %3695 = vmatprep.subr.mxu0 0.0
  %3696 = vmatpush2.msra.mxu0 0.0
  %3697 = vmatprep.subr.mxu0 0.0
  %3698 = vmatpush2.msra.mxu0 0.0
  %3699 = vmatprep.subr.mxu0 0.0
  %3700 = vmatpush2.msra.mxu0 0.0
  %3701 = vmatprep.subr.mxu0 0.0
  %3702 = vmatpush2.msra.mxu0 0.0
  %3703 = vmatprep.subr.mxu0 0.0
  %3704 = vmatpush2.msra.mxu0 0.0
  %3705 = vmatprep.subr.mxu0 0.0
  %3706 = vmatpush2.msra.mxu0 0.0
  %3707 = vmatprep.subr.mxu0 0.0
  %3708 = vmatpush2.msra.mxu0 0.0
  %3709 = vmatprep.mubr.f32.mxu0 0.0
  %3710 = vmatmul.mubr.f32.gmra.mxu0 %v3643
  %v3711 = vpop.f32.mrf.mxu0
  %v3712 = vadd.f32 0.0, %v3711
  %v3713 = vpop.f32.mrf.mxu0
  %3714 = vdwg.mxu0
  %v3715 = vadd.f32 %v2294, %v3712
  %v3716 = vxor.u32 %v3639, 2147483648
  %v3717 = vmul.f32 %v3716, 1.442695
  %v3718 = vpow.pop %v3717
  %v3719 = vadd.f32 %v3718, 1.0
  %v3720 = vrcp.pop %v3719
  %v3721 = vmul.f32 1.0, %v3720
  %v3722 = vtanh.pop %v3639
  %v3723 = vxor.u32 %v3715, 2147483648
  %v3724 = vmul.f32 %v3723, 1.442695
  %v3725 = vpow.pop %v3724
  %v3726 = vadd.f32 %v3725, 1.0
  %v3727 = vrcp.pop %v3726
  %v3728 = vmul.f32 1.0, %v3727
  %v3729 = vtanh.pop %v3715
  %v3730 = vmul.f32 %v3721, %v3559
  %3732 = vrot.lane.b32.xlu0 %v3722, 32
  %v3733 = vpop.permute.xlu0 %3732
  %v3735 = vmul.f32 %v3721, %v3733
  %3737 = vrot.lane.b32.xlu0 %v3735, 32
  %v3738 = vpop.permute.xlu0 %3737
  %v3740 = vadd.f32 %v3730, %v3738
  %v3741 = vmul.f32 %v3728, %v3561
  %3743 = vrot.lane.b32.xlu0 %v3729, 32
  %v3744 = vpop.permute.xlu0 %3743
  %v3746 = vmul.f32 %v3728, %v3744
  %3748 = vrot.lane.b32.xlu0 %v3746, 32
  %v3749 = vpop.permute.xlu0 %3748
  %v3751 = vadd.f32 %v3741, %v3749
  %v3752 = vtanh.pop %v3740
  %3754 = vrot.lane.b32.xlu0 %v3752, 32
  %v3755 = vpop.permute.xlu0 %3754
  %v3757 = vmul.f32 %v3721, %v3755
  %v3758 = vtanh.pop %v3751
  %3760 = vrot.lane.b32.xlu0 %v3758, 32
  %v3761 = vpop.permute.xlu0 %3760
  %v3763 = vmul.f32 %v3728, %v3761
  %v3764 = vsel %vm842, %v3757, %v3558
  %v3765 = vsel %vm842, %v3740, %v3559
  %v3766 = vsel %vm835, %v3763, %v3560
  %v3767 = vsel %vm835, %v3751, %v3561
  %v3768 = vsel %vm842, %v3757, 0.0
  %v3769 = vsel %vm835, %v3763, 0.0
  %3771 = vrot.lane.b32.xlu0 %v3764, 64
  %v3772 = vpop.permute.xlu0 %3771
  %v3773 = vsel %vm278, %v3772, 0
  %3775 = vmatprep.subr.mxu0 0.0
  %3776 = vmatpush1.msra.mxu0 0.0
  %3777 = vmatprep.subr.mxu0 0.0
  %3778 = vmatpush1.msra.mxu0 0.0
  %3779 = vmatprep.subr.mxu0 0.0
  %3780 = vmatpush1.msra.mxu0 0.0
  %3781 = vmatprep.subr.mxu0 0.0
  %3782 = vmatpush1.msra.mxu0 0.0
  %3783 = vmatprep.subr.mxu0 0.0
  %3784 = vmatpush1.msra.mxu0 0.0
  %3785 = vmatprep.subr.mxu0 0.0
  %3786 = vmatpush1.msra.mxu0 0.0
  %3787 = vmatprep.subr.mxu0 0.0
  %3788 = vmatpush1.msra.mxu0 0.0
  %3789 = vmatprep.subr.mxu0 0.0
  %3790 = vmatpush1.msra.mxu0 0.0
  %3791 = vmatprep.subr.mxu0 0.0
  %3792 = vmatpush1.msra.mxu0 0.0
  %3793 = vmatprep.subr.mxu0 0.0
  %3794 = vmatpush1.msra.mxu0 0.0
  %3795 = vmatprep.subr.mxu0 0.0
  %3796 = vmatpush1.msra.mxu0 0.0
  %3797 = vmatprep.subr.mxu0 0.0
  %3798 = vmatpush1.msra.mxu0 0.0
  %3799 = vmatprep.subr.mxu0 0.0
  %3800 = vmatpush1.msra.mxu0 %v2335
  %3801 = vmatprep.subr.mxu0 0.0
  %3802 = vmatpush1.msra.mxu0 %v2334
  %3803 = vmatprep.subr.mxu0 0.0
  %3804 = vmatpush1.msra.mxu0 %v2333
  %3805 = vmatprep.subr.mxu0 0.0
  %3806 = vmatpush1.msra.mxu0 %v2332
  %3807 = vmatprep.subr.mxu0 0.0
  %3808 = vmatpush2.msra.mxu0 0.0
  %3809 = vmatprep.subr.mxu0 0.0
  %3810 = vmatpush2.msra.mxu0 0.0
  %3811 = vmatprep.subr.mxu0 0.0
  %3812 = vmatpush2.msra.mxu0 0.0
  %3813 = vmatprep.subr.mxu0 0.0
  %3814 = vmatpush2.msra.mxu0 0.0
  %3815 = vmatprep.subr.mxu0 0.0
  %3816 = vmatpush2.msra.mxu0 0.0
  %3817 = vmatprep.subr.mxu0 0.0
  %3818 = vmatpush2.msra.mxu0 0.0
  %3819 = vmatprep.subr.mxu0 0.0
  %3820 = vmatpush2.msra.mxu0 0.0
  %3821 = vmatprep.subr.mxu0 0.0
  %3822 = vmatpush2.msra.mxu0 0.0
  %3823 = vmatprep.subr.mxu0 0.0
  %3824 = vmatpush2.msra.mxu0 0.0
  %3825 = vmatprep.subr.mxu0 0.0
  %3826 = vmatpush2.msra.mxu0 0.0
  %3827 = vmatprep.subr.mxu0 0.0
  %3828 = vmatpush2.msra.mxu0 0.0
  %3829 = vmatprep.subr.mxu0 0.0
  %3830 = vmatpush2.msra.mxu0 0.0
  %3831 = vmatprep.subr.mxu0 0.0
  %3832 = vmatpush2.msra.mxu0 0.0
  %3833 = vmatprep.subr.mxu0 0.0
  %3834 = vmatpush2.msra.mxu0 0.0
  %3835 = vmatprep.subr.mxu0 0.0
  %3836 = vmatpush2.msra.mxu0 0.0
  %3837 = vmatprep.subr.mxu0 0.0
  %3838 = vmatpush2.msra.mxu0 0.0
  %3839 = vmatprep.mubr.f32.mxu0 0.0
  %3840 = vmatmul.mubr.f32.gmra.mxu0 %v3773
  %v3841 = vpop.f32.mrf.mxu0
  %v3842 = vadd.f32 0.0, %v3841
  %v3843 = vpop.f32.mrf.mxu0
  %3844 = vdwg.mxu0
  %v3845 = vadd.f32 %v2328, %v3842
  %3847 = vrot.lane.b32.xlu0 %v3766, 64
  %v3848 = vpop.permute.xlu0 %3847
  %v3849 = vsel %vm278, %v3848, 0
  %3851 = vmatprep.subr.mxu0 0.0
  %3852 = vmatpush1.msra.mxu0 0.0
  %3853 = vmatprep.subr.mxu0 0.0
  %3854 = vmatpush1.msra.mxu0 0.0
  %3855 = vmatprep.subr.mxu0 0.0
  %3856 = vmatpush1.msra.mxu0 0.0
  %3857 = vmatprep.subr.mxu0 0.0
  %3858 = vmatpush1.msra.mxu0 0.0
  %3859 = vmatprep.subr.mxu0 0.0
  %3860 = vmatpush1.msra.mxu0 0.0
  %3861 = vmatprep.subr.mxu0 0.0
  %3862 = vmatpush1.msra.mxu0 0.0
  %3863 = vmatprep.subr.mxu0 0.0
  %3864 = vmatpush1.msra.mxu0 0.0
  %3865 = vmatprep.subr.mxu0 0.0
  %3866 = vmatpush1.msra.mxu0 0.0
  %3867 = vmatprep.subr.mxu0 0.0
  %3868 = vmatpush1.msra.mxu0 0.0
  %3869 = vmatprep.subr.mxu0 0.0
  %3870 = vmatpush1.msra.mxu0 0.0
  %3871 = vmatprep.subr.mxu0 0.0
  %3872 = vmatpush1.msra.mxu0 0.0
  %3873 = vmatprep.subr.mxu0 0.0
  %3874 = vmatpush1.msra.mxu0 0.0
  %3875 = vmatprep.subr.mxu0 0.0
  %3876 = vmatpush1.msra.mxu0 %v2339
  %3877 = vmatprep.subr.mxu0 0.0
  %3878 = vmatpush1.msra.mxu0 %v2338
  %3879 = vmatprep.subr.mxu0 0.0
  %3880 = vmatpush1.msra.mxu0 %v2337
  %3881 = vmatprep.subr.mxu0 0.0
  %3882 = vmatpush1.msra.mxu0 %v2336
  %3883 = vmatprep.subr.mxu0 0.0
  %3884 = vmatpush2.msra.mxu0 0.0
  %3885 = vmatprep.subr.mxu0 0.0
  %3886 = vmatpush2.msra.mxu0 0.0
  %3887 = vmatprep.subr.mxu0 0.0
  %3888 = vmatpush2.msra.mxu0 0.0
  %3889 = vmatprep.subr.mxu0 0.0
  %3890 = vmatpush2.msra.mxu0 0.0
  %3891 = vmatprep.subr.mxu0 0.0
  %3892 = vmatpush2.msra.mxu0 0.0
  %3893 = vmatprep.subr.mxu0 0.0
  %3894 = vmatpush2.msra.mxu0 0.0
  %3895 = vmatprep.subr.mxu0 0.0
  %3896 = vmatpush2.msra.mxu0 0.0
  %3897 = vmatprep.subr.mxu0 0.0
  %3898 = vmatpush2.msra.mxu0 0.0
  %3899 = vmatprep.subr.mxu0 0.0
  %3900 = vmatpush2.msra.mxu0 0.0
  %3901 = vmatprep.subr.mxu0 0.0
  %3902 = vmatpush2.msra.mxu0 0.0
  %3903 = vmatprep.subr.mxu0 0.0
  %3904 = vmatpush2.msra.mxu0 0.0
  %3905 = vmatprep.subr.mxu0 0.0
  %3906 = vmatpush2.msra.mxu0 0.0
  %3907 = vmatprep.subr.mxu0 0.0
  %3908 = vmatpush2.msra.mxu0 0.0
  %3909 = vmatprep.subr.mxu0 0.0
  %3910 = vmatpush2.msra.mxu0 0.0
  %3911 = vmatprep.subr.mxu0 0.0
  %3912 = vmatpush2.msra.mxu0 0.0
  %3913 = vmatprep.subr.mxu0 0.0
  %3914 = vmatpush2.msra.mxu0 0.0
  %3915 = vmatprep.mubr.f32.mxu0 0.0
  %3916 = vmatmul.mubr.f32.gmra.mxu0 %v3849
  %v3917 = vpop.f32.mrf.mxu0
  %v3918 = vadd.f32 0.0, %v3917
  %v3919 = vpop.f32.mrf.mxu0
  %3920 = vdwg.mxu0
  %v3921 = vadd.f32 %v2288, %v3918
  %v3922 = vxor.u32 %v3845, 2147483648
  %v3923 = vmul.f32 %v3922, 1.442695
  %v3924 = vpow.pop %v3923
  %v3925 = vadd.f32 %v3924, 1.0
  %v3926 = vrcp.pop %v3925
  %v3927 = vmul.f32 1.0, %v3926
  %v3928 = vtanh.pop %v3845
  %v3929 = vxor.u32 %v3921, 2147483648
  %v3930 = vmul.f32 %v3929, 1.442695
  %v3931 = vpow.pop %v3930
  %v3932 = vadd.f32 %v3931, 1.0
  %v3933 = vrcp.pop %v3932
  %v3934 = vmul.f32 1.0, %v3933
  %v3935 = vtanh.pop %v3921
  %v3936 = vmul.f32 %v3927, %v3765
  %3938 = vrot.lane.b32.xlu0 %v3928, 32
  %v3939 = vpop.permute.xlu0 %3938
  %v3941 = vmul.f32 %v3927, %v3939
  %3943 = vrot.lane.b32.xlu0 %v3941, 32
  %v3944 = vpop.permute.xlu0 %3943
  %v3946 = vadd.f32 %v3936, %v3944
  %v3947 = vmul.f32 %v3934, %v3767
  %3949 = vrot.lane.b32.xlu0 %v3935, 32
  %v3950 = vpop.permute.xlu0 %3949
  %v3952 = vmul.f32 %v3934, %v3950
  %3954 = vrot.lane.b32.xlu0 %v3952, 32
  %v3955 = vpop.permute.xlu0 %3954
  %v3957 = vadd.f32 %v3947, %v3955
  %v3958 = vtanh.pop %v3946
  %3960 = vrot.lane.b32.xlu0 %v3958, 32
  %v3961 = vpop.permute.xlu0 %3960
  %v3963 = vmul.f32 %v3927, %v3961
  %v3964 = vtanh.pop %v3957
  %3966 = vrot.lane.b32.xlu0 %v3964, 32
  %v3967 = vpop.permute.xlu0 %3966
  %v3969 = vmul.f32 %v3934, %v3967
  %v3970 = vsel %vm628, %v3963, 0.0
  %v3971 = vsel %vm621, %v3969, 0.0
  %3974 = vrot.lane.b32.xlu0 %v3971, 96
  %v3975 = vpop.permute.xlu0 %3974
  %v3977 = vsel %vm278, %v2536, %v3975
  %3979 = vrot.lane.b32.xlu0 %v2738, 64
  %v3980 = vpop.permute.xlu0 %3979
  %3983 = vrot.lane.b32.xlu0 %v3769, 96
  %v3984 = vpop.permute.xlu0 %3983
  %v3986 = vsel %vm278, %v3980, %v3984
  %3988 = vrot.lane.b32.xlu0 %v2944, 64
  %v3989 = vpop.permute.xlu0 %3988
  %3992 = vrot.lane.b32.xlu0 %v3563, 96
  %v3993 = vpop.permute.xlu0 %3992
  %v3995 = vsel %vm278, %v3989, %v3993
  %3997 = vrot.lane.b32.xlu0 %v3150, 64
  %v3998 = vpop.permute.xlu0 %3997
  %4001 = vrot.lane.b32.xlu0 %v3357, 96
  %v4002 = vpop.permute.xlu0 %4001
  %v4004 = vsel %vm278, %v3998, %v4002
  %4006 = vrot.lane.b32.xlu0 %v3356, 64
  %v4007 = vpop.permute.xlu0 %4006
  %4010 = vrot.lane.b32.xlu0 %v3151, 96
  %v4011 = vpop.permute.xlu0 %4010
  %v4013 = vsel %vm278, %v4007, %v4011
  %4015 = vrot.lane.b32.xlu0 %v3562, 64
  %v4016 = vpop.permute.xlu0 %4015
  %4019 = vrot.lane.b32.xlu0 %v2945, 96
  %v4020 = vpop.permute.xlu0 %4019
  %v4022 = vsel %vm278, %v4016, %v4020
  %4024 = vrot.lane.b32.xlu0 %v3768, 64
  %v4025 = vpop.permute.xlu0 %4024
  %4028 = vrot.lane.b32.xlu0 %v2739, 96
  %v4029 = vpop.permute.xlu0 %4028
  %v4031 = vsel %vm278, %v4025, %v4029
  %4033 = vrot.lane.b32.xlu0 %v3970, 64
  %v4034 = vpop.permute.xlu0 %4033
  %4036 = vrot.lane.b32.xlu0 %v2532, 96
  %v4037 = vpop.permute.xlu0 %4036
  %v4039 = vsel %vm278, %v4034, %v4037
  %v4040 = vld [vmem:[%s11] sm:$0x1]
  %v4041 = vtanh.pop %v3977
  %v4042 = vtanh.pop %v3986
  %v4043 = vtanh.pop %v3995
  %v4044 = vtanh.pop %v4004
  %v4045 = vtanh.pop %v4013
  %v4046 = vtanh.pop %v4022
  %v4047 = vtanh.pop %v4031
  %v4048 = vtanh.pop %v4039
  %v4050 = vlaneseq
  %v4051 = vshrl.u32 %v4050, 7
  %v4052 = vsub.s32 0, %v4051
  %v4053 = vrot.slane %v4040, %v4052
  %v4055 = vmul.f32 %v4041, %v4053
  %v4056 = vmul.f32 %v4042, %v4053
  %v4057 = vmul.f32 %v4043, %v4053
  %v4058 = vmul.f32 %v4044, %v4053
  %v4059 = vmul.f32 %v4045, %v4053
  %v4060 = vmul.f32 %v4046, %v4053
  %v4061 = vmul.f32 %v4047, %v4053
  %v4062 = vmul.f32 %v4048, %v4053
  %v4063 = vsel %vm119, %v4055, 0.0
  %4064 = vadd.xlane.f32.xlu0 %v4063
  %v4065 = vpop.xlane.xlu0 %4064
  %v4066 = vsel %vm119, %v4056, 0.0
  %4067 = vadd.xlane.f32.xlu0 %v4066
  %v4068 = vpop.xlane.xlu0 %4067
  %v4069 = vsel %vm119, %v4057, 0.0
  %4070 = vadd.xlane.f32.xlu0 %v4069
  %v4071 = vpop.xlane.xlu0 %4070
  %v4072 = vsel %vm119, %v4058, 0.0
  %4073 = vadd.xlane.f32.xlu0 %v4072
  %v4074 = vpop.xlane.xlu0 %4073
  %v4075 = vsel %vm119, %v4059, 0.0
  %4076 = vadd.xlane.f32.xlu0 %v4075
  %v4077 = vpop.xlane.xlu0 %4076
  %v4078 = vsel %vm119, %v4060, 0.0
  %4079 = vadd.xlane.f32.xlu0 %v4078
  %v4080 = vpop.xlane.xlu0 %4079
  %v4081 = vsel %vm119, %v4061, 0.0
  %4082 = vadd.xlane.f32.xlu0 %v4081
  %v4083 = vpop.xlane.xlu0 %4082
  %v4084 = vsel %vm119, %v4062, 0.0
  %4085 = vadd.xlane.f32.xlu0 %v4084
  %v4086 = vpop.xlane.xlu0 %4085
  %v4087 = vlaneseq
  %v4088 = vshrl.u32 %v4087, 7
  %vm4089 = vcmp.lt.s32.totalorder %v4088, 4
  %v4090 = vsel %vm4089, 1, 0
  %vm4091 = vcmp.eq.s32.totalorder %v4090, 1
  %v4092 = vsel %vm4091, %v4065, -1e+30
  %v4093 = vsel %vm4091, %v4068, -1e+30
  %v4094 = vsel %vm4091, %v4071, -1e+30
  %v4095 = vsel %vm4091, %v4074, -1e+30
  %v4096 = vsel %vm4091, %v4077, -1e+30
  %v4097 = vsel %vm4091, %v4080, -1e+30
  %v4098 = vsel %vm4091, %v4083, -1e+30
  %v4099 = vsel %vm4091, %v4086, -1e+30
  %v4100 = vrot.slane %v4092, 4
  %v4101 = vmax.f32 %v4092, %v4100
  %v4102 = vrot.slane %v4101, 2
  %v4103 = vmax.f32 %v4101, %v4102
  %v4104 = vrot.slane %v4103, 1
  %v4105 = vmax.f32 %v4103, %v4104
  %v4106 = vrot.slane %v4093, 4
  %v4107 = vmax.f32 %v4093, %v4106
  %v4108 = vrot.slane %v4107, 2
  %v4109 = vmax.f32 %v4107, %v4108
  %v4110 = vrot.slane %v4109, 1
  %v4111 = vmax.f32 %v4109, %v4110
  %v4112 = vrot.slane %v4094, 4
  %v4113 = vmax.f32 %v4094, %v4112
  %v4114 = vrot.slane %v4113, 2
  %v4115 = vmax.f32 %v4113, %v4114
  %v4116 = vrot.slane %v4115, 1
  %v4117 = vmax.f32 %v4115, %v4116
  %v4118 = vrot.slane %v4095, 4
  %v4119 = vmax.f32 %v4095, %v4118
  %v4120 = vrot.slane %v4119, 2
  %v4121 = vmax.f32 %v4119, %v4120
  %v4122 = vrot.slane %v4121, 1
  %v4123 = vmax.f32 %v4121, %v4122
  %v4124 = vrot.slane %v4096, 4
  %v4125 = vmax.f32 %v4096, %v4124
  %v4126 = vrot.slane %v4125, 2
  %v4127 = vmax.f32 %v4125, %v4126
  %v4128 = vrot.slane %v4127, 1
  %v4129 = vmax.f32 %v4127, %v4128
  %v4130 = vrot.slane %v4097, 4
  %v4131 = vmax.f32 %v4097, %v4130
  %v4132 = vrot.slane %v4131, 2
  %v4133 = vmax.f32 %v4131, %v4132
  %v4134 = vrot.slane %v4133, 1
  %v4135 = vmax.f32 %v4133, %v4134
  %v4136 = vrot.slane %v4098, 4
  %v4137 = vmax.f32 %v4098, %v4136
  %v4138 = vrot.slane %v4137, 2
  %v4139 = vmax.f32 %v4137, %v4138
  %v4140 = vrot.slane %v4139, 1
  %v4141 = vmax.f32 %v4139, %v4140
  %v4142 = vrot.slane %v4099, 4
  %v4143 = vmax.f32 %v4099, %v4142
  %v4144 = vrot.slane %v4143, 2
  %v4145 = vmax.f32 %v4143, %v4144
  %v4146 = vrot.slane %v4145, 1
  %v4147 = vmax.f32 %v4145, %v4146
  %v4148 = vsub.f32 %v4092, %v4105
  %v4149 = vsub.f32 %v4093, %v4111
  %v4150 = vsub.f32 %v4094, %v4117
  %v4151 = vsub.f32 %v4095, %v4123
  %v4152 = vsub.f32 %v4096, %v4129
  %v4153 = vsub.f32 %v4097, %v4135
  %v4154 = vsub.f32 %v4098, %v4141
  %v4155 = vsub.f32 %v4099, %v4147
  %v4156 = vmul.f32 %v4148, 1.442695
  %v4157 = vpow.pop %v4156
  %v4158 = vmul.f32 %v4149, 1.442695
  %v4159 = vpow.pop %v4158
  %v4160 = vmul.f32 %v4150, 1.442695
  %v4161 = vpow.pop %v4160
  %v4162 = vmul.f32 %v4151, 1.442695
  %v4163 = vpow.pop %v4162
  %v4164 = vmul.f32 %v4152, 1.442695
  %v4165 = vpow.pop %v4164
  %v4166 = vmul.f32 %v4153, 1.442695
  %v4167 = vpow.pop %v4166
  %v4168 = vmul.f32 %v4154, 1.442695
  %v4169 = vpow.pop %v4168
  %v4170 = vmul.f32 %v4155, 1.442695
  %v4171 = vpow.pop %v4170
  %v4172 = vsel %vm4091, %v4157, 0.0
  %v4173 = vsel %vm4091, %v4159, 0.0
  %v4174 = vsel %vm4091, %v4161, 0.0
  %v4175 = vsel %vm4091, %v4163, 0.0
  %v4176 = vsel %vm4091, %v4165, 0.0
  %v4177 = vsel %vm4091, %v4167, 0.0
  %v4178 = vsel %vm4091, %v4169, 0.0
  %v4179 = vsel %vm4091, %v4171, 0.0
  %v4180 = vrot.slane %v4172, 4
  %v4181 = vadd.f32 %v4172, %v4180
  %v4182 = vrot.slane %v4181, 2
  %v4183 = vadd.f32 %v4181, %v4182
  %v4184 = vrot.slane %v4183, 1
  %v4185 = vadd.f32 %v4183, %v4184
  %v4186 = vrot.slane %v4173, 4
  %v4187 = vadd.f32 %v4173, %v4186
  %v4188 = vrot.slane %v4187, 2
  %v4189 = vadd.f32 %v4187, %v4188
  %v4190 = vrot.slane %v4189, 1
  %v4191 = vadd.f32 %v4189, %v4190
  %v4192 = vrot.slane %v4174, 4
  %v4193 = vadd.f32 %v4174, %v4192
  %v4194 = vrot.slane %v4193, 2
  %v4195 = vadd.f32 %v4193, %v4194
  %v4196 = vrot.slane %v4195, 1
  %v4197 = vadd.f32 %v4195, %v4196
  %v4198 = vrot.slane %v4175, 4
  %v4199 = vadd.f32 %v4175, %v4198
  %v4200 = vrot.slane %v4199, 2
  %v4201 = vadd.f32 %v4199, %v4200
  %v4202 = vrot.slane %v4201, 1
  %v4203 = vadd.f32 %v4201, %v4202
  %v4204 = vrot.slane %v4176, 4
  %v4205 = vadd.f32 %v4176, %v4204
  %v4206 = vrot.slane %v4205, 2
  %v4207 = vadd.f32 %v4205, %v4206
  %v4208 = vrot.slane %v4207, 1
  %v4209 = vadd.f32 %v4207, %v4208
  %v4210 = vrot.slane %v4177, 4
  %v4211 = vadd.f32 %v4177, %v4210
  %v4212 = vrot.slane %v4211, 2
  %v4213 = vadd.f32 %v4211, %v4212
  %v4214 = vrot.slane %v4213, 1
  %v4215 = vadd.f32 %v4213, %v4214
  %v4216 = vrot.slane %v4178, 4
  %v4217 = vadd.f32 %v4178, %v4216
  %v4218 = vrot.slane %v4217, 2
  %v4219 = vadd.f32 %v4217, %v4218
  %v4220 = vrot.slane %v4219, 1
  %v4221 = vadd.f32 %v4219, %v4220
  %v4222 = vrot.slane %v4179, 4
  %v4223 = vadd.f32 %v4179, %v4222
  %v4224 = vrot.slane %v4223, 2
  %v4225 = vadd.f32 %v4223, %v4224
  %v4226 = vrot.slane %v4225, 1
  %v4227 = vadd.f32 %v4225, %v4226
  %v4228 = vrcp.pop %v4185
  %v4229 = vmul.f32 %v4172, %v4228
  %v4230 = vrcp.pop %v4191
  %v4231 = vmul.f32 %v4173, %v4230
  %v4232 = vrcp.pop %v4197
  %v4233 = vmul.f32 %v4174, %v4232
  %v4234 = vrcp.pop %v4203
  %v4235 = vmul.f32 %v4175, %v4234
  %v4236 = vrcp.pop %v4209
  %v4237 = vmul.f32 %v4176, %v4236
  %v4238 = vrcp.pop %v4215
  %v4239 = vmul.f32 %v4177, %v4238
  %v4240 = vrcp.pop %v4221
  %v4241 = vmul.f32 %v4178, %v4240
  %v4242 = vrcp.pop %v4227
  %v4243 = vmul.f32 %v4179, %v4242
  %v4244 = vmul.f32 %v3977, %v4229
  %v4245 = vmul.f32 %v3986, %v4231
  %v4246 = vmul.f32 %v3995, %v4233
  %v4247 = vmul.f32 %v4004, %v4235
  %v4248 = vmul.f32 %v4013, %v4237
  %v4249 = vmul.f32 %v4022, %v4239
  %v4250 = vmul.f32 %v4031, %v4241
  %v4251 = vmul.f32 %v4039, %v4243
  %v4252 = vsel %vm119, %v4244, 0.0
  %v4253 = vsel %vm119, %v4245, 0.0
  %v4254 = vadd.f32 %v4252, %v4253
  %v4255 = vsel %vm119, %v4246, 0.0
  %v4256 = vadd.f32 %v4254, %v4255
  %v4257 = vsel %vm119, %v4247, 0.0
  %v4258 = vadd.f32 %v4256, %v4257
  %v4259 = vsel %vm119, %v4248, 0.0
  %v4260 = vadd.f32 %v4258, %v4259
  %v4261 = vsel %vm119, %v4249, 0.0
  %v4262 = vadd.f32 %v4260, %v4261
  %v4263 = vsel %vm119, %v4250, 0.0
  %v4264 = vadd.f32 %v4262, %v4263
  %v4265 = vsel %vm119, %v4251, 0.0
  %v4266 = vadd.f32 %v4264, %v4265
  %v4267 = vtanh.pop %v4266
  %v4268 = vld [vmem:[%s12] sm:$0xff]
  %v4269 = vld [vmem:[%s12 + $0x8] sm:$0xff]
  %v4270 = vld [vmem:[%s12 + $0x10] sm:$0xff]
  %v4271 = vld [vmem:[%s12 + $0x18] sm:$0xff]
  %v4272 = vld [vmem:[%s12 + $0x20] sm:$0xff]
  %v4273 = vld [vmem:[%s12 + $0x28] sm:$0xff]
  %v4274 = vld [vmem:[%s12 + $0x30] sm:$0xff]
  %v4275 = vld [vmem:[%s12 + $0x38] sm:$0xff]
  %v4276 = vld [vmem:[%s13] sm:$0x1]
  %v4278 = vlaneseq
  %v4279 = vshrl.u32 %v4278, 7
  %v4280 = vsub.s32 0, %v4279
  %v4281 = vrot.slane %v4276, %v4280
  %v4284 = vsel %vm119, %v4267, 0
  %4286 = vmatprep.subr.mxu0 0.0
  %4287 = vmatpush1.msra.mxu0 0.0
  %4288 = vmatprep.subr.mxu0 0.0
  %4289 = vmatpush1.msra.mxu0 0.0
  %4290 = vmatprep.subr.mxu0 0.0
  %4291 = vmatpush1.msra.mxu0 0.0
  %4292 = vmatprep.subr.mxu0 0.0
  %4293 = vmatpush1.msra.mxu0 0.0
  %4294 = vmatprep.subr.mxu0 0.0
  %4295 = vmatpush1.msra.mxu0 0.0
  %4296 = vmatprep.subr.mxu0 0.0
  %4297 = vmatpush1.msra.mxu0 0.0
  %4298 = vmatprep.subr.mxu0 0.0
  %4299 = vmatpush1.msra.mxu0 0.0
  %4300 = vmatprep.subr.mxu0 0.0
  %4301 = vmatpush1.msra.mxu0 0.0
  %4302 = vmatprep.subr.mxu0 0.0
  %4303 = vmatpush1.msra.mxu0 %v4275
  %4304 = vmatprep.subr.mxu0 0.0
  %4305 = vmatpush1.msra.mxu0 %v4274
  %4306 = vmatprep.subr.mxu0 0.0
  %4307 = vmatpush1.msra.mxu0 %v4273
  %4308 = vmatprep.subr.mxu0 0.0
  %4309 = vmatpush1.msra.mxu0 %v4272
  %4310 = vmatprep.subr.mxu0 0.0
  %4311 = vmatpush1.msra.mxu0 %v4271
  %4312 = vmatprep.subr.mxu0 0.0
  %4313 = vmatpush1.msra.mxu0 %v4270
  %4314 = vmatprep.subr.mxu0 0.0
  %4315 = vmatpush1.msra.mxu0 %v4269
  %4316 = vmatprep.subr.mxu0 0.0
  %4317 = vmatpush1.msra.mxu0 %v4268
  %4318 = vmatprep.subr.mxu0 0.0
  %4319 = vmatpush2.msra.mxu0 0.0
  %4320 = vmatprep.subr.mxu0 0.0
  %4321 = vmatpush2.msra.mxu0 0.0
  %4322 = vmatprep.subr.mxu0 0.0
  %4323 = vmatpush2.msra.mxu0 0.0
  %4324 = vmatprep.subr.mxu0 0.0
  %4325 = vmatpush2.msra.mxu0 0.0
  %4326 = vmatprep.subr.mxu0 0.0
  %4327 = vmatpush2.msra.mxu0 0.0
  %4328 = vmatprep.subr.mxu0 0.0
  %4329 = vmatpush2.msra.mxu0 0.0
  %4330 = vmatprep.subr.mxu0 0.0
  %4331 = vmatpush2.msra.mxu0 0.0
  %4332 = vmatprep.subr.mxu0 0.0
  %4333 = vmatpush2.msra.mxu0 0.0
  %4334 = vmatprep.subr.mxu0 0.0
  %4335 = vmatpush2.msra.mxu0 0.0
  %4336 = vmatprep.subr.mxu0 0.0
  %4337 = vmatpush2.msra.mxu0 0.0
  %4338 = vmatprep.subr.mxu0 0.0
  %4339 = vmatpush2.msra.mxu0 0.0
  %4340 = vmatprep.subr.mxu0 0.0
  %4341 = vmatpush2.msra.mxu0 0.0
  %4342 = vmatprep.subr.mxu0 0.0
  %4343 = vmatpush2.msra.mxu0 0.0
  %4344 = vmatprep.subr.mxu0 0.0
  %4345 = vmatpush2.msra.mxu0 0.0
  %4346 = vmatprep.subr.mxu0 0.0
  %4347 = vmatpush2.msra.mxu0 0.0
  %4348 = vmatprep.subr.mxu0 0.0
  %4349 = vmatpush2.msra.mxu0 0.0
  %4350 = vmatprep.mubr.f32.mxu0 0.0
  %4351 = vmatmul.mubr.f32.gmra.mxu0 %v4284
  %v4352 = vpop.f32.mrf.mxu0
  %v4353 = vadd.f32 %v4281, %v4352
  %v4354 = vpop.f32.mrf.mxu0
  %4355 = vdwg.mxu0
  %v4356 = vld [vmem:[%s14] sm:$0xff]
  %v4357 = vld [vmem:[%s14 + $0x8] sm:$0xff]
  %v4358 = vld [vmem:[%s14 + $0x10] sm:$0xff]
  %v4359 = vld [vmem:[%s14 + $0x18] sm:$0xff]
  %v4360 = vld [vmem:[%s15] sm:$0x1]
  %v4362 = vlaneseq
  %v4363 = vshrl.u32 %v4362, 7
  %v4364 = vsub.s32 0, %v4363
  %v4365 = vrot.slane %v4360, %v4364
  %v4368 = vsel %vm278, %v4353, 0
  %4370 = vmatprep.subr.mxu0 0.0
  %4371 = vmatpush1.msra.mxu0 0.0
  %4372 = vmatprep.subr.mxu0 0.0
  %4373 = vmatpush1.msra.mxu0 0.0
  %4374 = vmatprep.subr.mxu0 0.0
  %4375 = vmatpush1.msra.mxu0 0.0
  %4376 = vmatprep.subr.mxu0 0.0
  %4377 = vmatpush1.msra.mxu0 0.0
  %4378 = vmatprep.subr.mxu0 0.0
  %4379 = vmatpush1.msra.mxu0 0.0
  %4380 = vmatprep.subr.mxu0 0.0
  %4381 = vmatpush1.msra.mxu0 0.0
  %4382 = vmatprep.subr.mxu0 0.0
  %4383 = vmatpush1.msra.mxu0 0.0
  %4384 = vmatprep.subr.mxu0 0.0
  %4385 = vmatpush1.msra.mxu0 0.0
  %4386 = vmatprep.subr.mxu0 0.0
  %4387 = vmatpush1.msra.mxu0 0.0
  %4388 = vmatprep.subr.mxu0 0.0
  %4389 = vmatpush1.msra.mxu0 0.0
  %4390 = vmatprep.subr.mxu0 0.0
  %4391 = vmatpush1.msra.mxu0 0.0
  %4392 = vmatprep.subr.mxu0 0.0
  %4393 = vmatpush1.msra.mxu0 0.0
  %4394 = vmatprep.subr.mxu0 0.0
  %4395 = vmatpush1.msra.mxu0 %v4359
  %4396 = vmatprep.subr.mxu0 0.0
  %4397 = vmatpush1.msra.mxu0 %v4358
  %4398 = vmatprep.subr.mxu0 0.0
  %4399 = vmatpush1.msra.mxu0 %v4357
  %4400 = vmatprep.subr.mxu0 0.0
  %4401 = vmatpush1.msra.mxu0 %v4356
  %4402 = vmatprep.subr.mxu0 0.0
  %4403 = vmatpush2.msra.mxu0 0.0
  %4404 = vmatprep.subr.mxu0 0.0
  %4405 = vmatpush2.msra.mxu0 0.0
  %4406 = vmatprep.subr.mxu0 0.0
  %4407 = vmatpush2.msra.mxu0 0.0
  %4408 = vmatprep.subr.mxu0 0.0
  %4409 = vmatpush2.msra.mxu0 0.0
  %4410 = vmatprep.subr.mxu0 0.0
  %4411 = vmatpush2.msra.mxu0 0.0
  %4412 = vmatprep.subr.mxu0 0.0
  %4413 = vmatpush2.msra.mxu0 0.0
  %4414 = vmatprep.subr.mxu0 0.0
  %4415 = vmatpush2.msra.mxu0 0.0
  %4416 = vmatprep.subr.mxu0 0.0
  %4417 = vmatpush2.msra.mxu0 0.0
  %4418 = vmatprep.subr.mxu0 0.0
  %4419 = vmatpush2.msra.mxu0 0.0
  %4420 = vmatprep.subr.mxu0 0.0
  %4421 = vmatpush2.msra.mxu0 0.0
  %4422 = vmatprep.subr.mxu0 0.0
  %4423 = vmatpush2.msra.mxu0 0.0
  %4424 = vmatprep.subr.mxu0 0.0
  %4425 = vmatpush2.msra.mxu0 0.0
  %4426 = vmatprep.subr.mxu0 0.0
  %4427 = vmatpush2.msra.mxu0 0.0
  %4428 = vmatprep.subr.mxu0 0.0
  %4429 = vmatpush2.msra.mxu0 0.0
  %4430 = vmatprep.subr.mxu0 0.0
  %4431 = vmatpush2.msra.mxu0 0.0
  %4432 = vmatprep.subr.mxu0 0.0
  %4433 = vmatpush2.msra.mxu0 0.0
  %4434 = vmatprep.mubr.f32.mxu0 0.0
  %4435 = vmatmul.mubr.f32.gmra.mxu0 %v4368
  %v4436 = vpop.f32.mrf.mxu0
  %v4437 = vadd.f32 %v4365, %v4436
  %v4438 = vpop.f32.mrf.mxu0
  %4439 = vdwg.mxu0
  %vm4440 = vcmask 48128
  %4441 = vst.msk [vmem:[%s16] sm:$0xff] %vm4440, %v4437
  // Predicated region
  $region66: #{lstm_attention_forward.1} parent=0 // pred_check
    _
  $region67: #{lstm_attention_forward.1} parent=0 // pred_check_branch
    %4443 = sbr.rel (0) target = $region69
  $region68: #{lstm_attention_forward.1} parent=0 // pred_region
    _
  $region69: #{lstm_attention_forward.1} parent=0 // pred_fallthru
    _
  // Predicated region
  $region70: #{lstm_attention_forward.1} parent=0 // pred_check
    _
  $region71: #{lstm_attention_forward.1} parent=0 // pred_check_branch
    %4445 = sbr.rel (0) target = $region73
  $region72: #{lstm_attention_forward.1} parent=0 // pred_region
    _
  $region73: #{lstm_attention_forward.1} parent=0 // pred_fallthru
    _

</llo_original>
